<compile_context>
chip_gen: v5e
topology: v5e:2x2
jax: 0.10.0
libtpu: 0.0.40
codegen_flags: <defaults>
</compile_context>

<pallas_src>
from functools import partial

import numpy as np
import jax
import jax.numpy as jnp
from jax import lax
from jax.experimental import pallas as pl
from jax.experimental.pallas import tpu as pltpu


# ------------------------------ Pallas kernel -------------------------------

def _cell_classifier_kernel(p_ref, b1m_ref, w1_ref, w2_ref, b2_ref,
                            wfc1_ref, bfc1_ref, wfc2_ref, bfc2_ref,
                            o_ref, f_scr):
    """One grid step == Bt samples.  All weights stay resident in VMEM."""
    bt = o_ref.shape[0]

    # conv1 (and the conv2 im2col) as ONE block-diagonal GEMM:
    #   rows  = (conv2 output position o, sample t)
    #   lanes = (conv2 kernel position k, conv1 channel c)
    g1 = jnp.dot(p_ref[0], w1_ref[...],
                 preferred_element_type=jnp.float32)                # (16*bt, 256)
    # Masked bias: zero for (o, k) slots that fall inside conv2's zero padding,
    # so those lanes stay exactly 0 after the ReLU (their patch rows are zero).
    h1 = jnp.maximum(g1 + b1m_ref[...], 0.0).astype(jnp.bfloat16)   # (16*bt, 256)

    # conv2: single K=256 GEMM (full MXU contraction depth).
    h2 = jnp.maximum(
        jnp.dot(h1, w2_ref[...], preferred_element_type=jnp.float32)
        + b2_ref[...], 0.0)                                          # (16*bt, 32)

    # Flatten (NCHW order folded into wfc1's host-side row ordering): assemble
    # the (bt, 512) fc1 input with 16 cheap lane-slab stores into VMEM scratch.
    for pos in range(16):
        f_scr[:, 32 * pos:32 * (pos + 1)] = h2[pos * bt:(pos + 1) * bt, :]

    # fc1: single (bt, 512) @ (512, 256) GEMM.
    h3 = jnp.maximum(
        jnp.dot(f_scr[...].astype(jnp.bfloat16), wfc1_ref[...],
                preferred_element_type=jnp.float32) + bfc1_ref[...], 0.0)  # (bt, 256)

    # fc2 (kept in f32) + exact softmax.
    logits = jnp.dot(h3, wfc2_ref[...],
                     preferred_element_type=jnp.float32) + bfc2_ref[...]    # (bt, 4)
    m = jnp.max(logits, axis=-1, keepdims=True)
    e = jnp.exp(logits - m)
    o_ref[...] = (e / jnp.sum(e, axis=-1, keepdims=True)).astype(o_ref.dtype)


# ------------------------------- host-side glue -----------------------------

def _fat_patches(x, bt):
    """NCHW (B,3,64,64) -> (B//bt, 16*bt, 3072) bf16 conv1 im2col patches.

    Rows are ordered (conv2 output position o, sample t); lanes are ordered
    (conv2 kernel position k, conv1 patch feature (kh, kw, c)).  Patch rows that
    fall in conv2's zero padding are all-zero."""
    B = x.shape[0]
    xh = jnp.transpose(x, (0, 2, 3, 1)).astype(jnp.bfloat16)        # NHWC bf16
    xp = jnp.pad(xh, ((0, 0), (2, 2), (2, 2), (0, 0)))              # (B, 68, 68, 3)
    slabs = [xp[:, i:i + 61:4, j:j + 61:4, :]                       # (B, 16, 16, 3)
             for i in range(8) for j in range(8)]
    p0 = jnp.stack(slabs, axis=3).reshape(B, 16, 16, 192)           # [b, y, x, (kh,kw,c)]
    # Shift by conv2's padding of 1 and regroup conv1 pixels into
    # (conv2 output position (py,px), conv2 kernel position (i,j)).
    p0 = jnp.pad(p0, ((0, 0), (1, 0), (1, 0), (0, 0)))[:, :16, :16, :]
    p0 = p0.reshape(B // bt, bt, 4, 4, 4, 4, 192)                   # [g, t, py, i, px, j, f]
    p0 = jnp.transpose(p0, (0, 2, 4, 1, 3, 5, 6))                   # [g, py, px, t, i, j, f]
    return p0.reshape(B // bt, 16 * bt, 3072)


def prepare_params(raw):
    """One-time reorder / flatten / cast of PyTorch-layout params into kernel layout."""
    f32, bf16 = jnp.float32, jnp.bfloat16
    # conv1 weight with rows ordered (kh, kw, c) -- matches the patch feature order.
    w1 = jnp.transpose(raw["c2d_1_w"], (2, 3, 1, 0)).reshape(192, 16)
    # Block-diagonal "fat" conv1 weight: row (k, kh, kw, c) -> col (k, oc), so the
    # conv1 GEMM emits its output directly in conv2's im2col layout.
    w1big = jnp.einsum("kK,fo->kfKo", jnp.eye(16, dtype=f32), w1).reshape(3072, 256)
    # conv1 bias replicated per (o, k) slot and zeroed where the slot is conv2's
    # zero padding (so ReLU keeps those lanes exactly 0).
    mask = np.ones((16, 16), np.float32)            # [o = 4*py+px, k = 4*i+j]
    for py in range(4):
        for px in range(4):
            for i in range(4):
                for j in range(4):
                    if 4 * py + i - 1 < 0 or 4 * px + j - 1 < 0:
                        mask[py * 4 + px, i * 4 + j] = 0.0
    b1m = (jnp.asarray(mask)[:, :, None] * raw["c2d_1_b"][None, None, :]).reshape(16, 256)
    # conv2 weight rows ordered (kh, kw, c); fc1 rows ordered (py, px, oc) to absorb
    # the NCHW flatten; fc2 plain transpose (kept f32).
    w2 = jnp.transpose(raw["c2d_2_w"], (2, 3, 1, 0)).reshape(256, 32)
    wfc1 = jnp.transpose(raw["fc_1_w"].reshape(256, 32, 4, 4),
                         (2, 3, 1, 0)).reshape(512, 256)
    return {
        "w1big": w1big.astype(bf16),
        "b1m": b1m.astype(f32),                         # (16, 256); tiled per-Bt in wrapper
        "w2": w2.astype(bf16), "b2": raw["c2d_2_b"].reshape(1, 32).astype(f32),
        "wfc1": wfc1.astype(bf16), "bfc1": raw["fc_1_b"].reshape(1, 256).astype(f32),
        "wfc2": raw["fc_2_w"].T.astype(f32), "bfc2": raw["fc_2_b"].reshape(1, 4).astype(f32),
    }


@partial(jax.jit, static_argnames=("bt",))
def cell_classifier_forward(params, x, *, bt=8):
    """x: (B, 3, 64, 64) float32 NCHW -> (B, 4) class probabilities."""
    assert bt % 8 == 0, "bt must be a multiple of 8 (TPU sublane tile)"
    B = x.shape[0]
    bp = ((B + bt - 1) // bt) * bt                       # pad batch to a multiple of bt
    if bp != B:
        x = jnp.pad(x, ((0, bp - B), (0, 0), (0, 0), (0, 0)))
    g = bp // bt

    p = _fat_patches(x, bt)                              # (g, 16*bt, 3072) bf16
    b1m = jnp.repeat(params["b1m"], bt, axis=0)          # (16*bt, 256): rows (o, t)

    def full(shape):                                     # weights: fetched once (constant index)
        return pl.BlockSpec(shape, lambda i: (0,) * len(shape))

    out = pl.pallas_call(
        _cell_classifier_kernel,
        out_shape=jax.ShapeDtypeStruct((bp, 4), jnp.float32),
        grid=(g,),
        in_specs=[
            pl.BlockSpec((1, 16 * bt, 3072), lambda i: (i, 0, 0)),  # per-step patches
            full((16 * bt, 256)),                                   # masked conv1 bias
            full((3072, 256)),                                      # block-diag conv1 weight
            full((256, 32)), full((1, 32)),                         # conv2 w, b
            full((512, 256)), full((1, 256)),                       # fc1 w, b
            full((256, 4)), full((1, 4)),                           # fc2 w, b
        ],
        out_specs=pl.BlockSpec((bt, 4), lambda i: (i, 0)),
        scratch_shapes=[pltpu.VMEM((bt, 512), jnp.float32)],        # fc1 input assembly
        compiler_params=pltpu.CompilerParams(
            dimension_semantics=("parallel",)),                     # v7x: 2 TCs share batch
    )(p, b1m, params["w1big"], params["w2"], params["b2"],
      params["wfc1"], params["bfc1"], params["wfc2"], params["bfc2"])
    return out[:B]


# ----------------------------- params & reference ---------------------------

def init_params(key):
    """Deterministic init with the shapes from CellClassifier.__init__ (PyTorch layout)."""
    ks = jax.random.split(key, 8)

    def u(k, shape, fan_in):
        bound = 1.0 / np.sqrt(fan_in)
        return jax.random.uniform(k, shape, jnp.float32, -bound, bound)

    return {
        "c2d_1_w": u(ks[0], (16, 3, 8, 8), 3 * 8 * 8),
        "c2d_1_b": u(ks[1], (16,), 3 * 8 * 8),
        "c2d_2_w": u(ks[2], (32, 16, 4, 4), 16 * 4 * 4),
        "c2d_2_b": u(ks[3], (32,), 16 * 4 * 4),
        "fc_1_w": u(ks[4], (256, 512), 512),   # PyTorch Linear: (out, in)
        "fc_1_b": u(ks[5], (256,), 512),
        "fc_2_w": u(ks[6], (4, 256), 256),
        "fc_2_b": u(ks[7], (4,), 256),
    }


def reference_forward(raw, x):
    """Pure-XLA f32 mirror of the PyTorch forward (eval mode)."""
    h = lax.conv_general_dilated(x, raw["c2d_1_w"], (4, 4), [(2, 2), (2, 2)],
                                 dimension_numbers=("NCHW", "OIHW", "NCHW"))
    h = jax.nn.relu(h + raw["c2d_1_b"].reshape(1, -1, 1, 1))
    h = lax.conv_general_dilated(h, raw["c2d_2_w"], (4, 4), [(1, 1), (1, 1)],
                                 dimension_numbers=("NCHW", "OIHW", "NCHW"))
    h = jax.nn.relu(h + raw["c2d_2_b"].reshape(1, -1, 1, 1))
    h = h.reshape(x.shape[0], -1)
    h = jax.nn.relu(h @ raw["fc_1_w"].T + raw["fc_1_b"])
    return jax.nn.softmax(h @ raw["fc_2_w"].T + raw["fc_2_b"], axis=1)


if __name__ == "__main__":
    key = jax.random.PRNGKey(0)
    k_param, k_x = jax.random.split(key)
    raw = init_params(k_param)
    params = prepare_params(raw)
    # Input spatial size must be 64x64 so flatten yields fc_1's 512 in_features.
    # B=16 with bt=8 -> a 2-step batch-tiled grid (keeps both v7x cores busy).
    x = jax.random.normal(k_x, (16, 3, 64, 64), dtype=jnp.float32)

    probs = jax.block_until_ready(cell_classifier_forward(params, x, bt=8))
    assert probs.shape == (16, 4)
    # rows are exact-softmax probability distributions
    assert bool(jnp.all(jnp.abs(jnp.sum(probs, axis=1) - 1.0) < 1e-3))
    # cross-check against the pure-XLA f32 reference of the PyTorch forward
    ref = reference_forward(raw, x)
    assert float(jnp.max(jnp.abs(probs - ref))) < 5e-2
    print("KERNEL_OK")
</pallas_src>

<mosaic_0001>
module attributes {stable_mosaic.version = 11 : i64} {
  func.func @_cell_classifier_kernel(%arg0: i32, %arg1: memref<1x128x3072xbf16, #tpu.memory_space<vmem>>, %arg2: memref<128x256xf32, #tpu.memory_space<vmem>>, %arg3: memref<3072x256xbf16, #tpu.memory_space<vmem>>, %arg4: memref<256x32xbf16, #tpu.memory_space<vmem>>, %arg5: memref<1x32xf32, #tpu.memory_space<vmem>>, %arg6: memref<512x256xbf16, #tpu.memory_space<vmem>>, %arg7: memref<1x256xf32, #tpu.memory_space<vmem>>, %arg8: memref<256x4xf32, #tpu.memory_space<vmem>>, %arg9: memref<1x4xf32, #tpu.memory_space<vmem>>, %arg10: memref<8x4xf32, #tpu.memory_space<vmem>>, %arg11: memref<8x512xf32, #tpu.memory_space<vmem>>) attributes {dimension_semantics = [#tpu.dimension_semantics<parallel>], iteration_bounds = array<i64: 2>, scalar_prefetch = 0 : i64, scratch_operands = 1 : i64, tpu.core_type = #tpu.core_type<tc>, window_params = [{transform_indices = @transform_0, window_bounds = array<i64: 1, 128, 3072>}, {pipeline_mode = #tpu.pipeline_mode<synchronous>, transform_indices = @transform_1, window_bounds = array<i64: 128, 256>}, {pipeline_mode = #tpu.pipeline_mode<synchronous>, transform_indices = @transform_2, window_bounds = array<i64: 3072, 256>}, {pipeline_mode = #tpu.pipeline_mode<synchronous>, transform_indices = @transform_3, window_bounds = array<i64: 256, 32>}, {pipeline_mode = #tpu.pipeline_mode<synchronous>, transform_indices = @transform_4, window_bounds = array<i64: 1, 32>}, {pipeline_mode = #tpu.pipeline_mode<synchronous>, transform_indices = @transform_5, window_bounds = array<i64: 512, 256>}, {pipeline_mode = #tpu.pipeline_mode<synchronous>, transform_indices = @transform_6, window_bounds = array<i64: 1, 256>}, {pipeline_mode = #tpu.pipeline_mode<synchronous>, transform_indices = @transform_7, window_bounds = array<i64: 256, 4>}, {pipeline_mode = #tpu.pipeline_mode<synchronous>, transform_indices = @transform_8, window_bounds = array<i64: 1, 4>}, {transform_indices = @transform_9, window_bounds = array<i64: 8, 4>}]} {
    %c0 = arith.constant 0 : index
    %c0_0 = arith.constant 0 : index
    %c0_1 = arith.constant 0 : index
    %0 = vector.load %arg1[%c0, %c0_0, %c0_1] : memref<1x128x3072xbf16, #tpu.memory_space<vmem>>, vector<1x128x3072xbf16>
    %1 = vector.shape_cast %0 : vector<1x128x3072xbf16> to vector<128x3072xbf16>
    %c0_2 = arith.constant 0 : index
    %c0_3 = arith.constant 0 : index
    %2 = vector.load %arg3[%c0_2, %c0_3] : memref<3072x256xbf16, #tpu.memory_space<vmem>>, vector<3072x256xbf16>
    %cst = arith.constant dense<0.000000e+00> : vector<128x256xf32>
    %3 = tpu.matmul %1, %2, %cst {dimension_numbers = #tpu.dot_dimension_numbers<[1], [0], [0], [1], [0, 0, 1, 1], [], []>} : vector<128x3072xbf16>, vector<3072x256xbf16>, vector<128x256xf32> -> vector<128x256xf32>
    %c0_4 = arith.constant 0 : index
    %c0_5 = arith.constant 0 : index
    %4 = vector.load %arg2[%c0_4, %c0_5] : memref<128x256xf32, #tpu.memory_space<vmem>>, vector<128x256xf32>
    %5 = arith.addf %3, %4 : vector<128x256xf32>
    %cst_6 = arith.constant 0.000000e+00 : f32
    %6 = vector.broadcast %cst_6 : f32 to vector<128x256xf32>
    %7 = arith.maximumf %5, %6 : vector<128x256xf32>
    %8 = arith.truncf %7 : vector<128x256xf32> to vector<128x256xbf16>
    %c0_7 = arith.constant 0 : index
    %c0_8 = arith.constant 0 : index
    %9 = vector.load %arg4[%c0_7, %c0_8] : memref<256x32xbf16, #tpu.memory_space<vmem>>, vector<256x32xbf16>
    %cst_9 = arith.constant dense<0.000000e+00> : vector<128x32xf32>
    %10 = tpu.matmul %8, %9, %cst_9 {dimension_numbers = #tpu.dot_dimension_numbers<[1], [0], [0], [1], [0, 0, 1, 1], [], []>} : vector<128x256xbf16>, vector<256x32xbf16>, vector<128x32xf32> -> vector<128x32xf32>
    %c0_10 = arith.constant 0 : index
    %c0_11 = arith.constant 0 : index
    %11 = vector.load %arg5[%c0_10, %c0_11] : memref<1x32xf32, #tpu.memory_space<vmem>>, vector<1x32xf32>
    %12 = vector.broadcast %11 : vector<1x32xf32> to vector<128x32xf32>
    %13 = arith.addf %10, %12 : vector<128x32xf32>
    %cst_12 = arith.constant 0.000000e+00 : f32
    %14 = vector.broadcast %cst_12 : f32 to vector<128x32xf32>
    %15 = arith.maximumf %13, %14 : vector<128x32xf32>
    %16 = vector.extract_strided_slice %15 {offsets = [0, 0], sizes = [8, 32], strides = [1, 1]} : vector<128x32xf32> to vector<8x32xf32>
    %c0_13 = arith.constant 0 : index
    %c0_14 = arith.constant 0 : index
    %17 = vector.load %arg11[%c0_13, %c0_14] : memref<8x512xf32, #tpu.memory_space<vmem>>, vector<8x32xf32>
    tpu.vector_store %arg11[%c0_13, %c0_14], %16 {strides = array<i32>} : memref<8x512xf32, #tpu.memory_space<vmem>>, vector<8x32xf32>,
    %18 = vector.extract_strided_slice %15 {offsets = [8, 0], sizes = [8, 32], strides = [1, 1]} : vector<128x32xf32> to vector<8x32xf32>
    %c0_15 = arith.constant 0 : index
    %c32 = arith.constant 32 : index
    %19 = vector.load %arg11[%c0_15, %c32] : memref<8x512xf32, #tpu.memory_space<vmem>>, vector<8x32xf32>
    tpu.vector_store %arg11[%c0_15, %c32], %18 {strides = array<i32>} : memref<8x512xf32, #tpu.memory_space<vmem>>, vector<8x32xf32>,
    %20 = vector.extract_strided_slice %15 {offsets = [16, 0], sizes = [8, 32], strides = [1, 1]} : vector<128x32xf32> to vector<8x32xf32>
    %c0_16 = arith.constant 0 : index
    %c64 = arith.constant 64 : index
    %21 = vector.load %arg11[%c0_16, %c64] : memref<8x512xf32, #tpu.memory_space<vmem>>, vector<8x32xf32>
    tpu.vector_store %arg11[%c0_16, %c64], %20 {strides = array<i32>} : memref<8x512xf32, #tpu.memory_space<vmem>>, vector<8x32xf32>,
    %22 = vector.extract_strided_slice %15 {offsets = [24, 0], sizes = [8, 32], strides = [1, 1]} : vector<128x32xf32> to vector<8x32xf32>
    %c0_17 = arith.constant 0 : index
    %c96 = arith.constant 96 : index
    %23 = vector.load %arg11[%c0_17, %c96] : memref<8x512xf32, #tpu.memory_space<vmem>>, vector<8x32xf32>
    tpu.vector_store %arg11[%c0_17, %c96], %22 {strides = array<i32>} : memref<8x512xf32, #tpu.memory_space<vmem>>, vector<8x32xf32>,
    %24 = vector.extract_strided_slice %15 {offsets = [32, 0], sizes = [8, 32], strides = [1, 1]} : vector<128x32xf32> to vector<8x32xf32>
    %c0_18 = arith.constant 0 : index
    %c128 = arith.constant 128 : index
    %25 = vector.load %arg11[%c0_18, %c128] : memref<8x512xf32, #tpu.memory_space<vmem>>, vector<8x32xf32>
    tpu.vector_store %arg11[%c0_18, %c128], %24 {strides = array<i32>} : memref<8x512xf32, #tpu.memory_space<vmem>>, vector<8x32xf32>,
    %26 = vector.extract_strided_slice %15 {offsets = [40, 0], sizes = [8, 32], strides = [1, 1]} : vector<128x32xf32> to vector<8x32xf32>
    %c0_19 = arith.constant 0 : index
    %c160 = arith.constant 160 : index
    %27 = vector.load %arg11[%c0_19, %c160] : memref<8x512xf32, #tpu.memory_space<vmem>>, vector<8x32xf32>
    tpu.vector_store %arg11[%c0_19, %c160], %26 {strides = array<i32>} : memref<8x512xf32, #tpu.memory_space<vmem>>, vector<8x32xf32>,
    %28 = vector.extract_strided_slice %15 {offsets = [48, 0], sizes = [8, 32], strides = [1, 1]} : vector<128x32xf32> to vector<8x32xf32>
    %c0_20 = arith.constant 0 : index
    %c192 = arith.constant 192 : index
    %29 = vector.load %arg11[%c0_20, %c192] : memref<8x512xf32, #tpu.memory_space<vmem>>, vector<8x32xf32>
    tpu.vector_store %arg11[%c0_20, %c192], %28 {strides = array<i32>} : memref<8x512xf32, #tpu.memory_space<vmem>>, vector<8x32xf32>,
    %30 = vector.extract_strided_slice %15 {offsets = [56, 0], sizes = [8, 32], strides = [1, 1]} : vector<128x32xf32> to vector<8x32xf32>
    %c0_21 = arith.constant 0 : index
    %c224 = arith.constant 224 : index
    %31 = vector.load %arg11[%c0_21, %c224] : memref<8x512xf32, #tpu.memory_space<vmem>>, vector<8x32xf32>
    tpu.vector_store %arg11[%c0_21, %c224], %30 {strides = array<i32>} : memref<8x512xf32, #tpu.memory_space<vmem>>, vector<8x32xf32>,
    %32 = vector.extract_strided_slice %15 {offsets = [64, 0], sizes = [8, 32], strides = [1, 1]} : vector<128x32xf32> to vector<8x32xf32>
    %c0_22 = arith.constant 0 : index
    %c256 = arith.constant 256 : index
    %33 = vector.load %arg11[%c0_22, %c256] : memref<8x512xf32, #tpu.memory_space<vmem>>, vector<8x32xf32>
    tpu.vector_store %arg11[%c0_22, %c256], %32 {strides = array<i32>} : memref<8x512xf32, #tpu.memory_space<vmem>>, vector<8x32xf32>,
    %34 = vector.extract_strided_slice %15 {offsets = [72, 0], sizes = [8, 32], strides = [1, 1]} : vector<128x32xf32> to vector<8x32xf32>
    %c0_23 = arith.constant 0 : index
    %c288 = arith.constant 288 : index
    %35 = vector.load %arg11[%c0_23, %c288] : memref<8x512xf32, #tpu.memory_space<vmem>>, vector<8x32xf32>
    tpu.vector_store %arg11[%c0_23, %c288], %34 {strides = array<i32>} : memref<8x512xf32, #tpu.memory_space<vmem>>, vector<8x32xf32>,
    %36 = vector.extract_strided_slice %15 {offsets = [80, 0], sizes = [8, 32], strides = [1, 1]} : vector<128x32xf32> to vector<8x32xf32>
    %c0_24 = arith.constant 0 : index
    %c320 = arith.constant 320 : index
    %37 = vector.load %arg11[%c0_24, %c320] : memref<8x512xf32, #tpu.memory_space<vmem>>, vector<8x32xf32>
    tpu.vector_store %arg11[%c0_24, %c320], %36 {strides = array<i32>} : memref<8x512xf32, #tpu.memory_space<vmem>>, vector<8x32xf32>,
    %38 = vector.extract_strided_slice %15 {offsets = [88, 0], sizes = [8, 32], strides = [1, 1]} : vector<128x32xf32> to vector<8x32xf32>
    %c0_25 = arith.constant 0 : index
    %c352 = arith.constant 352 : index
    %39 = vector.load %arg11[%c0_25, %c352] : memref<8x512xf32, #tpu.memory_space<vmem>>, vector<8x32xf32>
    tpu.vector_store %arg11[%c0_25, %c352], %38 {strides = array<i32>} : memref<8x512xf32, #tpu.memory_space<vmem>>, vector<8x32xf32>,
    %40 = vector.extract_strided_slice %15 {offsets = [96, 0], sizes = [8, 32], strides = [1, 1]} : vector<128x32xf32> to vector<8x32xf32>
    %c0_26 = arith.constant 0 : index
    %c384 = arith.constant 384 : index
    %41 = vector.load %arg11[%c0_26, %c384] : memref<8x512xf32, #tpu.memory_space<vmem>>, vector<8x32xf32>
    tpu.vector_store %arg11[%c0_26, %c384], %40 {strides = array<i32>} : memref<8x512xf32, #tpu.memory_space<vmem>>, vector<8x32xf32>,
    %42 = vector.extract_strided_slice %15 {offsets = [104, 0], sizes = [8, 32], strides = [1, 1]} : vector<128x32xf32> to vector<8x32xf32>
    %c0_27 = arith.constant 0 : index
    %c416 = arith.constant 416 : index
    %43 = vector.load %arg11[%c0_27, %c416] : memref<8x512xf32, #tpu.memory_space<vmem>>, vector<8x32xf32>
    tpu.vector_store %arg11[%c0_27, %c416], %42 {strides = array<i32>} : memref<8x512xf32, #tpu.memory_space<vmem>>, vector<8x32xf32>,
    %44 = vector.extract_strided_slice %15 {offsets = [112, 0], sizes = [8, 32], strides = [1, 1]} : vector<128x32xf32> to vector<8x32xf32>
    %c0_28 = arith.constant 0 : index
    %c448 = arith.constant 448 : index
    %45 = vector.load %arg11[%c0_28, %c448] : memref<8x512xf32, #tpu.memory_space<vmem>>, vector<8x32xf32>
    tpu.vector_store %arg11[%c0_28, %c448], %44 {strides = array<i32>} : memref<8x512xf32, #tpu.memory_space<vmem>>, vector<8x32xf32>,
    %46 = vector.extract_strided_slice %15 {offsets = [120, 0], sizes = [8, 32], strides = [1, 1]} : vector<128x32xf32> to vector<8x32xf32>
    %c0_29 = arith.constant 0 : index
    %c480 = arith.constant 480 : index
    %47 = vector.load %arg11[%c0_29, %c480] : memref<8x512xf32, #tpu.memory_space<vmem>>, vector<8x32xf32>
    tpu.vector_store %arg11[%c0_29, %c480], %46 {strides = array<i32>} : memref<8x512xf32, #tpu.memory_space<vmem>>, vector<8x32xf32>,
    %c0_30 = arith.constant 0 : index
    %c0_31 = arith.constant 0 : index
    %48 = vector.load %arg11[%c0_30, %c0_31] : memref<8x512xf32, #tpu.memory_space<vmem>>, vector<8x512xf32>
    %49 = arith.truncf %48 : vector<8x512xf32> to vector<8x512xbf16>
    %c0_32 = arith.constant 0 : index
    %c0_33 = arith.constant 0 : index
    %50 = vector.load %arg6[%c0_32, %c0_33] : memref<512x256xbf16, #tpu.memory_space<vmem>>, vector<512x256xbf16>
    %cst_34 = arith.constant dense<0.000000e+00> : vector<8x256xf32>
    %51 = tpu.matmul %49, %50, %cst_34 {dimension_numbers = #tpu.dot_dimension_numbers<[1], [0], [0], [1], [0, 0, 1, 1], [], []>} : vector<8x512xbf16>, vector<512x256xbf16>, vector<8x256xf32> -> vector<8x256xf32>
    %c0_35 = arith.constant 0 : index
    %c0_36 = arith.constant 0 : index
    %52 = vector.load %arg7[%c0_35, %c0_36] : memref<1x256xf32, #tpu.memory_space<vmem>>, vector<1x256xf32>
    %53 = vector.broadcast %52 : vector<1x256xf32> to vector<8x256xf32>
    %54 = arith.addf %51, %53 : vector<8x256xf32>
    %cst_37 = arith.constant 0.000000e+00 : f32
    %55 = vector.broadcast %cst_37 : f32 to vector<8x256xf32>
    %56 = arith.maximumf %54, %55 : vector<8x256xf32>
    %c0_38 = arith.constant 0 : index
    %c0_39 = arith.constant 0 : index
    %57 = vector.load %arg8[%c0_38, %c0_39] : memref<256x4xf32, #tpu.memory_space<vmem>>, vector<256x4xf32>
    %cst_40 = arith.constant dense<0.000000e+00> : vector<8x4xf32>
    %58 = tpu.matmul %56, %57, %cst_40 {dimension_numbers = #tpu.dot_dimension_numbers<[1], [0], [0], [1], [0, 0, 1, 1], [], []>} : vector<8x256xf32>, vector<256x4xf32>, vector<8x4xf32> -> vector<8x4xf32>
    %c0_41 = arith.constant 0 : index
    %c0_42 = arith.constant 0 : index
    %59 = vector.load %arg9[%c0_41, %c0_42] : memref<1x4xf32, #tpu.memory_space<vmem>>, vector<1x4xf32>
    %60 = vector.broadcast %59 : vector<1x4xf32> to vector<8x4xf32>
    %61 = arith.addf %58, %60 : vector<8x4xf32>
    %cst_43 = arith.constant dense<0xFF800000> : vector<8xf32>
    %62 = vector.multi_reduction <maximumf>, %61, %cst_43 [1] : vector<8x4xf32> to vector<8xf32>
    %63 = vector.shape_cast %62 : vector<8xf32> to vector<8x1xf32>
    %64 = vector.broadcast %63 : vector<8x1xf32> to vector<8x4xf32>
    %65 = arith.subf %61, %64 : vector<8x4xf32>
    %66 = math.exp %65 : vector<8x4xf32>
    %cst_44 = arith.constant dense<0.000000e+00> : vector<8xf32>
    %67 = vector.multi_reduction <add>, %66, %cst_44 [1] : vector<8x4xf32> to vector<8xf32>
    %68 = vector.shape_cast %67 : vector<8xf32> to vector<8x1xf32>
    %69 = vector.broadcast %68 : vector<8x1xf32> to vector<8x4xf32>
    %70 = arith.divf %66, %69 : vector<8x4xf32>
    %c0_45 = arith.constant 0 : index
    %c0_46 = arith.constant 0 : index
    %71 = vector.load %arg10[%c0_45, %c0_46] : memref<8x4xf32, #tpu.memory_space<vmem>>, vector<8x4xf32>
    tpu.vector_store %arg10[%c0_45, %c0_46], %70 {strides = array<i32>} : memref<8x4xf32, #tpu.memory_space<vmem>>, vector<8x4xf32>,
    return
  }
  func.func @transform_0(%arg0: i32) -> (i32, i32, i32) {
    %c0_i32 = arith.constant 0 : i32
    %c0_i32_0 = arith.constant 0 : i32
    %c0_i32_1 = arith.constant 0 : i32
    return %arg0, %c0_i32, %c0_i32_0 : i32, i32, i32
  }
  func.func @transform_1(%arg0: i32) -> (i32, i32) {
    %c0_i32 = arith.constant 0 : i32
    %c0_i32_0 = arith.constant 0 : i32
    %c0_i32_1 = arith.constant 0 : i32
    return %c0_i32, %c0_i32_0 : i32, i32
  }
  func.func @transform_2(%arg0: i32) -> (i32, i32) {
    %c0_i32 = arith.constant 0 : i32
    %c0_i32_0 = arith.constant 0 : i32
    %c0_i32_1 = arith.constant 0 : i32
    return %c0_i32, %c0_i32_0 : i32, i32
  }
  func.func @transform_3(%arg0: i32) -> (i32, i32) {
    %c0_i32 = arith.constant 0 : i32
    %c0_i32_0 = arith.constant 0 : i32
    %c0_i32_1 = arith.constant 0 : i32
    return %c0_i32, %c0_i32_0 : i32, i32
  }
  func.func @transform_4(%arg0: i32) -> (i32, i32) {
    %c0_i32 = arith.constant 0 : i32
    %c0_i32_0 = arith.constant 0 : i32
    %c0_i32_1 = arith.constant 0 : i32
    return %c0_i32, %c0_i32_0 : i32, i32
  }
  func.func @transform_5(%arg0: i32) -> (i32, i32) {
    %c0_i32 = arith.constant 0 : i32
    %c0_i32_0 = arith.constant 0 : i32
    %c0_i32_1 = arith.constant 0 : i32
    return %c0_i32, %c0_i32_0 : i32, i32
  }
  func.func @transform_6(%arg0: i32) -> (i32, i32) {
    %c0_i32 = arith.constant 0 : i32
    %c0_i32_0 = arith.constant 0 : i32
    %c0_i32_1 = arith.constant 0 : i32
    return %c0_i32, %c0_i32_0 : i32, i32
  }
  func.func @transform_7(%arg0: i32) -> (i32, i32) {
    %c0_i32 = arith.constant 0 : i32
    %c0_i32_0 = arith.constant 0 : i32
    %c0_i32_1 = arith.constant 0 : i32
    return %c0_i32, %c0_i32_0 : i32, i32
  }
  func.func @transform_8(%arg0: i32) -> (i32, i32) {
    %c0_i32 = arith.constant 0 : i32
    %c0_i32_0 = arith.constant 0 : i32
    %c0_i32_1 = arith.constant 0 : i32
    return %c0_i32, %c0_i32_0 : i32, i32
  }
  func.func @transform_9(%arg0: i32) -> (i32, i32) {
    %c0_i32 = arith.constant 0 : i32
    %c0_i32_0 = arith.constant 0 : i32
    return %arg0, %c0_i32 : i32, i32
  }
}

</mosaic_0001>

<llo_original>
// kernel: cell_classifier_forward.1
$region0: #{cell_classifier_forward.1}
  #allocation0 [shape = 'u32[]', space=smem, size = 0x4, offset = 0x4, fixed_abs, tag = 'smem constant byte address 0x4 - core index']
  #allocation1 [shape = 'u32[72,128]{1,0:T(1,128)}', space=vmem, size = 0x9000, scoped, tag = 'internal scratch']
  #allocation2 [shape = 'f32[8,512]{1,0:T(8,128)}', space=vmem, size = 0x4000, scoped, tag = 'scratch operand']
  %s0 = inlined_call_operand.vmem [shape: bf16[2,128,3072], index: 0, kind: input, shape index: {}]
  %s1 = inlined_call_operand.vmem [shape: f32[128,256], index: 1, kind: input, shape index: {}]
  %s2 = inlined_call_operand.vmem [shape: bf16[3072,256], index: 2, kind: input, shape index: {}]
  %s3 = inlined_call_operand.vmem [shape: bf16[256,32], index: 3, kind: input, shape index: {}]
  %s4 = inlined_call_operand.vmem [shape: f32[1,32], index: 4, kind: input, shape index: {}]
  %s5 = inlined_call_operand.vmem [shape: bf16[512,256], index: 5, kind: input, shape index: {}]
  %s6 = inlined_call_operand.vmem [shape: f32[1,256], index: 6, kind: input, shape index: {}]
  %s7 = inlined_call_operand.vmem [shape: f32[256,4], index: 7, kind: input, shape index: {}]
  %s8 = inlined_call_operand.vmem [shape: f32[1,4], index: 8, kind: input, shape index: {}]
  %s9 = inlined_call_operand.vmem [shape: f32[16,4], index: 9, kind: output, shape index: {}]
  %s10 = sld [smem:[#allocation0]]
  $region69: #{cell_classifier_forward.1} parent=0
    _
  %s12 = ssub.s32 1, %s10
  %s13 = scalar_select 0, %s12, %s10
  loop: start=0, step=1, limit=4
  $region2: #{cell_classifier_forward.1} parent=0 // loop_pre_header
    _
  $region3: #{cell_classifier_forward.1} parent=0 // loop_header
    %s15 = sphi 0, %s19
    %p16 = scmp.ge.s32.totalorder %s15, 4
    %s25 = sphi 0, %s27
    %s28 = sphi 0, %s25
    %s29 = sphi 0, %s28
    %s45 = sphi 0, %s29
    %s49 = sphi 0, %s49
    %s51 = sphi 0, %s49
    %s52 = sphi 0, %s51
    %s66 = sphi 0, %s52
    %s70 = sphi 0, %s70
    %s72 = sphi 0, %s70
    %s73 = sphi 0, %s72
    %s87 = sphi 0, %s73
    %s91 = sphi 0, %s91
    %s93 = sphi 0, %s91
    %s94 = sphi 0, %s93
    %s108 = sphi 0, %s94
    %s112 = sphi 0, %s112
    %s114 = sphi 0, %s112
    %s115 = sphi 0, %s114
    %s129 = sphi 0, %s115
    %s133 = sphi 0, %s133
    %s135 = sphi 0, %s133
    %s136 = sphi 0, %s135
    %s150 = sphi 0, %s136
    %s154 = sphi 0, %s154
    %s156 = sphi 0, %s154
    %s157 = sphi 0, %s156
    %s171 = sphi 0, %s157
    %s175 = sphi 0, %s175
    %s177 = sphi 0, %s175
    %s178 = sphi 0, %s177
    %s192 = sphi 0, %s178
    %s196 = sphi 0, %s196
    %s198 = sphi 0, %s196
    %s199 = sphi 0, %s198
    %s213 = sphi 0, %s199
    %s219 = sphi 0, %s221
    %s222 = sphi 0, %s219
    %s223 = sphi 0, %s222
    %s239 = sphi 0, %s223
  $region4: #{cell_classifier_forward.1} parent=0 // loop_header_branch
    %18 = sbr.rel (%p16) target = $region8
  $region5: #{cell_classifier_forward.1} parent=0 // loop_body
    %s20 = ssub.s32 %s15, 1
    %s21 = ssub.s32 %s15, 2
    %s22 = sadd.s32 %s15, 1
    %s23 = ssub.s32 %s15, %s22
    %p24 = scmp.eq.s32.totalorder %s23, 0
    %s26 = sadd.s32 %s25, 1
    %s27 = scalar_select %p24, %s25, %s26
    %p30 = pneg %p24
    %p31 = scmp.eq.s32.totalorder %s15, 1
    %p32 = por %p30, %p31
    %p33 = scmp.ne.s32.totalorder %s25, %s28
    %p34 = scmp.eq.s32.totalorder %s15, 0
    %p35 = por %p33, %p34
    %p36 = scmp.ne.s32.totalorder %s25, %s28
    %p37 = scmp.eq.s32.totalorder %s20, 1
    %p38 = por %p36, %p37
    %p39 = scmp.ne.s32.totalorder %s28, %s29
    %p40 = scmp.eq.s32.totalorder %s20, 0
    %p41 = por %p39, %p40
    %p42 = scmp.ne.s32.totalorder %s28, %s29
    %p43 = scmp.eq.s32.totalorder %s21, 1
    %p44 = por %p42, %p43
    %p46 = scmp.ne.s32.totalorder %s29, %s45
    %p47 = scmp.eq.s32.totalorder %s21, 0
    %p48 = por %p46, %p47
    %s50 = sadd.s32 %s49, 1
    %p53 = scmp.eq.s32.totalorder %s15, 1
    %p54 = scmp.ne.s32.totalorder %s49, %s51
    %p55 = scmp.eq.s32.totalorder %s15, 0
    %p56 = por %p54, %p55
    %p57 = scmp.ne.s32.totalorder %s49, %s51
    %p58 = scmp.eq.s32.totalorder %s20, 1
    %p59 = por %p57, %p58
    %p60 = scmp.ne.s32.totalorder %s51, %s52
    %p61 = scmp.eq.s32.totalorder %s20, 0
    %p62 = por %p60, %p61
    %p63 = scmp.ne.s32.totalorder %s51, %s52
    %p64 = scmp.eq.s32.totalorder %s21, 1
    %p65 = por %p63, %p64
    %p67 = scmp.ne.s32.totalorder %s52, %s66
    %p68 = scmp.eq.s32.totalorder %s21, 0
    %p69 = por %p67, %p68
    %s71 = sadd.s32 %s70, 1
    %p74 = scmp.eq.s32.totalorder %s15, 1
    %p75 = scmp.ne.s32.totalorder %s70, %s72
    %p76 = scmp.eq.s32.totalorder %s15, 0
    %p77 = por %p75, %p76
    %p78 = scmp.ne.s32.totalorder %s70, %s72
    %p79 = scmp.eq.s32.totalorder %s20, 1
    %p80 = por %p78, %p79
    %p81 = scmp.ne.s32.totalorder %s72, %s73
    %p82 = scmp.eq.s32.totalorder %s20, 0
    %p83 = por %p81, %p82
    %p84 = scmp.ne.s32.totalorder %s72, %s73
    %p85 = scmp.eq.s32.totalorder %s21, 1
    %p86 = por %p84, %p85
    %p88 = scmp.ne.s32.totalorder %s73, %s87
    %p89 = scmp.eq.s32.totalorder %s21, 0
    %p90 = por %p88, %p89
    %s92 = sadd.s32 %s91, 1
    %p95 = scmp.eq.s32.totalorder %s15, 1
    %p96 = scmp.ne.s32.totalorder %s91, %s93
    %p97 = scmp.eq.s32.totalorder %s15, 0
    %p98 = por %p96, %p97
    %p99 = scmp.ne.s32.totalorder %s91, %s93
    %p100 = scmp.eq.s32.totalorder %s20, 1
    %p101 = por %p99, %p100
    %p102 = scmp.ne.s32.totalorder %s93, %s94
    %p103 = scmp.eq.s32.totalorder %s20, 0
    %p104 = por %p102, %p103
    %p105 = scmp.ne.s32.totalorder %s93, %s94
    %p106 = scmp.eq.s32.totalorder %s21, 1
    %p107 = por %p105, %p106
    %p109 = scmp.ne.s32.totalorder %s94, %s108
    %p110 = scmp.eq.s32.totalorder %s21, 0
    %p111 = por %p109, %p110
    %s113 = sadd.s32 %s112, 1
    %p116 = scmp.eq.s32.totalorder %s15, 1
    %p117 = scmp.ne.s32.totalorder %s112, %s114
    %p118 = scmp.eq.s32.totalorder %s15, 0
    %p119 = por %p117, %p118
    %p120 = scmp.ne.s32.totalorder %s112, %s114
    %p121 = scmp.eq.s32.totalorder %s20, 1
    %p122 = por %p120, %p121
    %p123 = scmp.ne.s32.totalorder %s114, %s115
    %p124 = scmp.eq.s32.totalorder %s20, 0
    %p125 = por %p123, %p124
    %p126 = scmp.ne.s32.totalorder %s114, %s115
    %p127 = scmp.eq.s32.totalorder %s21, 1
    %p128 = por %p126, %p127
    %p130 = scmp.ne.s32.totalorder %s115, %s129
    %p131 = scmp.eq.s32.totalorder %s21, 0
    %p132 = por %p130, %p131
    %s134 = sadd.s32 %s133, 1
    %p137 = scmp.eq.s32.totalorder %s15, 1
    %p138 = scmp.ne.s32.totalorder %s133, %s135
    %p139 = scmp.eq.s32.totalorder %s15, 0
    %p140 = por %p138, %p139
    %p141 = scmp.ne.s32.totalorder %s133, %s135
    %p142 = scmp.eq.s32.totalorder %s20, 1
    %p143 = por %p141, %p142
    %p144 = scmp.ne.s32.totalorder %s135, %s136
    %p145 = scmp.eq.s32.totalorder %s20, 0
    %p146 = por %p144, %p145
    %p147 = scmp.ne.s32.totalorder %s135, %s136
    %p148 = scmp.eq.s32.totalorder %s21, 1
    %p149 = por %p147, %p148
    %p151 = scmp.ne.s32.totalorder %s136, %s150
    %p152 = scmp.eq.s32.totalorder %s21, 0
    %p153 = por %p151, %p152
    %s155 = sadd.s32 %s154, 1
    %p158 = scmp.eq.s32.totalorder %s15, 1
    %p159 = scmp.ne.s32.totalorder %s154, %s156
    %p160 = scmp.eq.s32.totalorder %s15, 0
    %p161 = por %p159, %p160
    %p162 = scmp.ne.s32.totalorder %s154, %s156
    %p163 = scmp.eq.s32.totalorder %s20, 1
    %p164 = por %p162, %p163
    %p165 = scmp.ne.s32.totalorder %s156, %s157
    %p166 = scmp.eq.s32.totalorder %s20, 0
    %p167 = por %p165, %p166
    %p168 = scmp.ne.s32.totalorder %s156, %s157
    %p169 = scmp.eq.s32.totalorder %s21, 1
    %p170 = por %p168, %p169
    %p172 = scmp.ne.s32.totalorder %s157, %s171
    %p173 = scmp.eq.s32.totalorder %s21, 0
    %p174 = por %p172, %p173
    %s176 = sadd.s32 %s175, 1
    %p179 = scmp.eq.s32.totalorder %s15, 1
    %p180 = scmp.ne.s32.totalorder %s175, %s177
    %p181 = scmp.eq.s32.totalorder %s15, 0
    %p182 = por %p180, %p181
    %p183 = scmp.ne.s32.totalorder %s175, %s177
    %p184 = scmp.eq.s32.totalorder %s20, 1
    %p185 = por %p183, %p184
    %p186 = scmp.ne.s32.totalorder %s177, %s178
    %p187 = scmp.eq.s32.totalorder %s20, 0
    %p188 = por %p186, %p187
    %p189 = scmp.ne.s32.totalorder %s177, %s178
    %p190 = scmp.eq.s32.totalorder %s21, 1
    %p191 = por %p189, %p190
    %p193 = scmp.ne.s32.totalorder %s178, %s192
    %p194 = scmp.eq.s32.totalorder %s21, 0
    %p195 = por %p193, %p194
    %s197 = sadd.s32 %s196, 1
    %p200 = scmp.eq.s32.totalorder %s15, 1
    %p201 = scmp.ne.s32.totalorder %s196, %s198
    %p202 = scmp.eq.s32.totalorder %s15, 0
    %p203 = por %p201, %p202
    %p204 = scmp.ne.s32.totalorder %s196, %s198
    %p205 = scmp.eq.s32.totalorder %s20, 1
    %p206 = por %p204, %p205
    %p207 = scmp.ne.s32.totalorder %s198, %s199
    %p208 = scmp.eq.s32.totalorder %s20, 0
    %p209 = por %p207, %p208
    %p210 = scmp.ne.s32.totalorder %s198, %s199
    %p211 = scmp.eq.s32.totalorder %s21, 1
    %p212 = por %p210, %p211
    %p214 = scmp.ne.s32.totalorder %s199, %s213
    %p215 = scmp.eq.s32.totalorder %s21, 0
    %p216 = por %p214, %p215
    %s217 = ssub.s32 %s15, %s22
    %p218 = scmp.eq.s32.totalorder %s217, 0
    %s220 = sadd.s32 %s219, 1
    %s221 = scalar_select %p218, %s219, %s220
    %p224 = pneg %p218
    %p225 = scmp.eq.s32.totalorder %s15, 1
    %p226 = por %p224, %p225
    %p227 = scmp.ne.s32.totalorder %s219, %s222
    %p228 = scmp.eq.s32.totalorder %s15, 0
    %p229 = por %p227, %p228
    %p230 = scmp.ne.s32.totalorder %s219, %s222
    %p231 = scmp.eq.s32.totalorder %s20, 1
    %p232 = por %p230, %p231
    %p233 = scmp.ne.s32.totalorder %s222, %s223
    %p234 = scmp.eq.s32.totalorder %s20, 0
    %p235 = por %p233, %p234
    %p236 = scmp.ne.s32.totalorder %s222, %s223
    %p237 = scmp.eq.s32.totalorder %s21, 1
    %p238 = por %p236, %p237
    %p240 = scmp.ne.s32.totalorder %s223, %s239
    %p241 = scmp.eq.s32.totalorder %s21, 0
    %p242 = por %p240, %p241
    %p243 = scmp.le.s32.totalorder 1, %s15
    %p244 = scmp.lt.s32.totalorder %s15, 3
    %p245 = pnand %p243, %p244
    %p246 = pneg %p245
    // Predicated region
    $region9: #{cell_classifier_forward.1} parent=5 // pred_check
      _
    $region10: #{cell_classifier_forward.1} parent=5 // pred_check_branch
      %248 = sbr.rel (%p245) target = $region12
    $region11: #{cell_classifier_forward.1} parent=5 // pred_region
      %s249 = ssub.s32 %s15, 1
      // Predicated region
      $region13: #{cell_classifier_forward.1} parent=11 // pred_check
        %p250 = pneg %p62
      $region14: #{cell_classifier_forward.1} parent=11 // pred_check_branch
        %252 = sbr.rel (%p250) target = $region16
      $region15: #{cell_classifier_forward.1} parent=11 // pred_region
        _
      $region16: #{cell_classifier_forward.1} parent=11 // pred_fallthru
        _
      // Predicated region
      $region17: #{cell_classifier_forward.1} parent=11 // pred_check
        %p253 = pneg %p83
      $region18: #{cell_classifier_forward.1} parent=11 // pred_check_branch
        %255 = sbr.rel (%p253) target = $region20
      $region19: #{cell_classifier_forward.1} parent=11 // pred_region
        _
      $region20: #{cell_classifier_forward.1} parent=11 // pred_fallthru
        _
      // Predicated region
      $region21: #{cell_classifier_forward.1} parent=11 // pred_check
        %p256 = pneg %p104
      $region22: #{cell_classifier_forward.1} parent=11 // pred_check_branch
        %258 = sbr.rel (%p256) target = $region24
      $region23: #{cell_classifier_forward.1} parent=11 // pred_region
        _
      $region24: #{cell_classifier_forward.1} parent=11 // pred_fallthru
        _
      // Predicated region
      $region25: #{cell_classifier_forward.1} parent=11 // pred_check
        %p259 = pneg %p125
      $region26: #{cell_classifier_forward.1} parent=11 // pred_check_branch
        %261 = sbr.rel (%p259) target = $region28
      $region27: #{cell_classifier_forward.1} parent=11 // pred_region
        _
      $region28: #{cell_classifier_forward.1} parent=11 // pred_fallthru
        _
      // Predicated region
      $region29: #{cell_classifier_forward.1} parent=11 // pred_check
        %p262 = pneg %p146
      $region30: #{cell_classifier_forward.1} parent=11 // pred_check_branch
        %264 = sbr.rel (%p262) target = $region32
      $region31: #{cell_classifier_forward.1} parent=11 // pred_region
        _
      $region32: #{cell_classifier_forward.1} parent=11 // pred_fallthru
        _
      // Predicated region
      $region33: #{cell_classifier_forward.1} parent=11 // pred_check
        %p265 = pneg %p167
      $region34: #{cell_classifier_forward.1} parent=11 // pred_check_branch
        %267 = sbr.rel (%p265) target = $region36
      $region35: #{cell_classifier_forward.1} parent=11 // pred_region
        _
      $region36: #{cell_classifier_forward.1} parent=11 // pred_fallthru
        _
      // Predicated region
      $region37: #{cell_classifier_forward.1} parent=11 // pred_check
        %p268 = pneg %p188
      $region38: #{cell_classifier_forward.1} parent=11 // pred_check_branch
        %270 = sbr.rel (%p268) target = $region40
      $region39: #{cell_classifier_forward.1} parent=11 // pred_region
        _
      $region40: #{cell_classifier_forward.1} parent=11 // pred_fallthru
        _
      // Predicated region
      $region41: #{cell_classifier_forward.1} parent=11 // pred_check
        %p271 = pneg %p209
      $region42: #{cell_classifier_forward.1} parent=11 // pred_check_branch
        %273 = sbr.rel (%p271) target = $region44
      $region43: #{cell_classifier_forward.1} parent=11 // pred_region
        _
      $region44: #{cell_classifier_forward.1} parent=11 // pred_fallthru
        _
    $region12: #{cell_classifier_forward.1} parent=5 // pred_fallthru
      _
    %p274 = scmp.lt.s32.totalorder %s15, 2
    // Predicated region
    $region45: #{cell_classifier_forward.1} parent=5 // pred_check
      %p275 = pneg %p274
    $region46: #{cell_classifier_forward.1} parent=5 // pred_check_branch
      %277 = sbr.rel (%p275) target = $region48
    $region47: #{cell_classifier_forward.1} parent=5 // pred_region
      // Predicated region
      $region49: #{cell_classifier_forward.1} parent=47 // pred_check
        %p278 = pneg %p35
      $region50: #{cell_classifier_forward.1} parent=47 // pred_check_branch
        %280 = sbr.rel (%p278) target = $region52
      $region51: #{cell_classifier_forward.1} parent=47 // pred_region
        %p281 = scmp.lt.s32.totalorder %s15, 1
        %s282 = scalar_select %p281, %s15, 1
        %s283 = smul.addr %s282, 384
        %s284 = smul.addr %s283, 4
        %s285 = scalar_lea.vmem %s0, %s284
      $region52: #{cell_classifier_forward.1} parent=47 // pred_fallthru
        _
    $region48: #{cell_classifier_forward.1} parent=5 // pred_fallthru
      _
    %p286 = scmp.le.s32.totalorder 1, %s15
    %p287 = scmp.lt.s32.totalorder %s15, 3
    %p288 = pnand %p286, %p287
    %p289 = pneg %p288
    // Predicated region
    $region53: #{cell_classifier_forward.1} parent=5 // pred_check
      _
    $region54: #{cell_classifier_forward.1} parent=5 // pred_check_branch
      %291 = sbr.rel (%p288) target = $region56
    $region55: #{cell_classifier_forward.1} parent=5 // pred_region
      %s292 = ssub.s32 %s15, 1
      %p293 = scmp.lt.s32.totalorder %s20, 1
      %s294 = scalar_select %p293, %s20, 1
      %s295 = smul.addr %s294, 384
      %s296 = smul.addr %s295, 4
      %s297 = scalar_lea.vmem %s0, %s296
      %p298 = pneg %p41
      %p299 = pneg %p38
      %p300 = pneg %p62
      %p301 = pneg %p59
      %p302 = pneg %p83
      %p303 = pneg %p80
      %p304 = pneg %p104
      %p305 = pneg %p101
      %p306 = pneg %p125
      %p307 = pneg %p122
      %p308 = pneg %p146
      %p309 = pneg %p143
      %p310 = pneg %p167
      %p311 = pneg %p164
      %p312 = pneg %p188
      %p313 = pneg %p185
      %p314 = pneg %p209
      %p315 = pneg %p206
      %p316 = pneg %p235
      %p317 = pneg %p232
      %p318 = scmp.lt.s32.totalorder %s20, 1
      %s319 = scalar_select %p318, %s20, 1
      %s320 = smul.addr %s319, 8
      %s321 = scalar_lea.vmem %s9, %s320
      %p322 = scmp.lt.s32.totalorder %s20, 1
      %s323 = scalar_select %p322, %s20, 1
      %s324 = smul.addr %s323, 384
      %s325 = smul.addr %s324, 4
      %s326 = scalar_lea.vmem %s0, %s325
      %p327 = scmp.lt.s32.totalorder %s20, 1
      %s328 = scalar_select %p327, %s20, 1
      %s329 = smul.addr %s328, 8
      %s330 = scalar_lea.vmem %s9, %s329
      %v331 = vld [vmem:[%s326] sm:$0xff]
      %v332 = vld [vmem:[%s326 + $0x8] sm:$0xff]
      %v333 = vld [vmem:[%s326 + $0x10] sm:$0xff]
      %v334 = vld [vmem:[%s326 + $0x18] sm:$0xff]
      %v335 = vld [vmem:[%s326 + $0x20] sm:$0xff]
      %v336 = vld [vmem:[%s326 + $0x28] sm:$0xff]
      %v337 = vld [vmem:[%s326 + $0x30] sm:$0xff]
      %v338 = vld [vmem:[%s326 + $0x38] sm:$0xff]
      %v339 = vld [vmem:[%s326 + $0x40] sm:$0xff]
      %v340 = vld [vmem:[%s326 + $0x48] sm:$0xff]
      %v341 = vld [vmem:[%s326 + $0x50] sm:$0xff]
      %v342 = vld [vmem:[%s326 + $0x58] sm:$0xff]
      %v343 = vld [vmem:[%s326 + $0x60] sm:$0xff]
      %v344 = vld [vmem:[%s326 + $0x68] sm:$0xff]
      %v345 = vld [vmem:[%s326 + $0x70] sm:$0xff]
      %v346 = vld [vmem:[%s326 + $0x78] sm:$0xff]
      %v347 = vld [vmem:[%s326 + $0x80] sm:$0xff]
      %v348 = vld [vmem:[%s326 + $0x88] sm:$0xff]
      %v349 = vld [vmem:[%s326 + $0x90] sm:$0xff]
      %v350 = vld [vmem:[%s326 + $0x98] sm:$0xff]
      %v351 = vld [vmem:[%s326 + $0xa0] sm:$0xff]
      %v352 = vld [vmem:[%s326 + $0xa8] sm:$0xff]
      %v353 = vld [vmem:[%s326 + $0xb0] sm:$0xff]
      %v354 = vld [vmem:[%s326 + $0xb8] sm:$0xff]
      %v355 = vld [vmem:[%s326 + $0xc0] sm:$0xff]
      %v356 = vld [vmem:[%s326 + $0xc8] sm:$0xff]
      %v357 = vld [vmem:[%s326 + $0xd0] sm:$0xff]
      %v358 = vld [vmem:[%s326 + $0xd8] sm:$0xff]
      %v359 = vld [vmem:[%s326 + $0xe0] sm:$0xff]
      %v360 = vld [vmem:[%s326 + $0xe8] sm:$0xff]
      %v361 = vld [vmem:[%s326 + $0xf0] sm:$0xff]
      %v362 = vld [vmem:[%s326 + $0xf8] sm:$0xff]
      %v363 = vld [vmem:[%s326 + $0x100] sm:$0xff]
      %v364 = vld [vmem:[%s326 + $0x108] sm:$0xff]
      %v365 = vld [vmem:[%s326 + $0x110] sm:$0xff]
      %v366 = vld [vmem:[%s326 + $0x118] sm:$0xff]
      %v367 = vld [vmem:[%s326 + $0x120] sm:$0xff]
      %v368 = vld [vmem:[%s326 + $0x128] sm:$0xff]
      %v369 = vld [vmem:[%s326 + $0x130] sm:$0xff]
      %v370 = vld [vmem:[%s326 + $0x138] sm:$0xff]
      %v371 = vld [vmem:[%s326 + $0x140] sm:$0xff]
      %v372 = vld [vmem:[%s326 + $0x148] sm:$0xff]
      %v373 = vld [vmem:[%s326 + $0x150] sm:$0xff]
      %v374 = vld [vmem:[%s326 + $0x158] sm:$0xff]
      %v375 = vld [vmem:[%s326 + $0x160] sm:$0xff]
      %v376 = vld [vmem:[%s326 + $0x168] sm:$0xff]
      %v377 = vld [vmem:[%s326 + $0x170] sm:$0xff]
      %v378 = vld [vmem:[%s326 + $0x178] sm:$0xff]
      %v379 = vld [vmem:[%s326 + $0x180] sm:$0xff]
      %v380 = vld [vmem:[%s326 + $0x188] sm:$0xff]
      %v381 = vld [vmem:[%s326 + $0x190] sm:$0xff]
      %v382 = vld [vmem:[%s326 + $0x198] sm:$0xff]
      %v383 = vld [vmem:[%s326 + $0x1a0] sm:$0xff]
      %v384 = vld [vmem:[%s326 + $0x1a8] sm:$0xff]
      %v385 = vld [vmem:[%s326 + $0x1b0] sm:$0xff]
      %v386 = vld [vmem:[%s326 + $0x1b8] sm:$0xff]
      %v387 = vld [vmem:[%s326 + $0x1c0] sm:$0xff]
      %v388 = vld [vmem:[%s326 + $0x1c8] sm:$0xff]
      %v389 = vld [vmem:[%s326 + $0x1d0] sm:$0xff]
      %v390 = vld [vmem:[%s326 + $0x1d8] sm:$0xff]
      %v391 = vld [vmem:[%s326 + $0x1e0] sm:$0xff]
      %v392 = vld [vmem:[%s326 + $0x1e8] sm:$0xff]
      %v393 = vld [vmem:[%s326 + $0x1f0] sm:$0xff]
      %v394 = vld [vmem:[%s326 + $0x1f8] sm:$0xff]
      %v395 = vld [vmem:[%s326 + $0x200] sm:$0xff]
      %v396 = vld [vmem:[%s326 + $0x208] sm:$0xff]
      %v397 = vld [vmem:[%s326 + $0x210] sm:$0xff]
      %v398 = vld [vmem:[%s326 + $0x218] sm:$0xff]
      %v399 = vld [vmem:[%s326 + $0x220] sm:$0xff]
      %v400 = vld [vmem:[%s326 + $0x228] sm:$0xff]
      %v401 = vld [vmem:[%s326 + $0x230] sm:$0xff]
      %v402 = vld [vmem:[%s326 + $0x238] sm:$0xff]
      %v403 = vld [vmem:[%s326 + $0x240] sm:$0xff]
      %v404 = vld [vmem:[%s326 + $0x248] sm:$0xff]
      %v405 = vld [vmem:[%s326 + $0x250] sm:$0xff]
      %v406 = vld [vmem:[%s326 + $0x258] sm:$0xff]
      %v407 = vld [vmem:[%s326 + $0x260] sm:$0xff]
      %v408 = vld [vmem:[%s326 + $0x268] sm:$0xff]
      %v409 = vld [vmem:[%s326 + $0x270] sm:$0xff]
      %v410 = vld [vmem:[%s326 + $0x278] sm:$0xff]
      %v411 = vld [vmem:[%s326 + $0x280] sm:$0xff]
      %v412 = vld [vmem:[%s326 + $0x288] sm:$0xff]
      %v413 = vld [vmem:[%s326 + $0x290] sm:$0xff]
      %v414 = vld [vmem:[%s326 + $0x298] sm:$0xff]
      %v415 = vld [vmem:[%s326 + $0x2a0] sm:$0xff]
      %v416 = vld [vmem:[%s326 + $0x2a8] sm:$0xff]
      %v417 = vld [vmem:[%s326 + $0x2b0] sm:$0xff]
      %v418 = vld [vmem:[%s326 + $0x2b8] sm:$0xff]
      %v419 = vld [vmem:[%s326 + $0x2c0] sm:$0xff]
      %v420 = vld [vmem:[%s326 + $0x2c8] sm:$0xff]
      %v421 = vld [vmem:[%s326 + $0x2d0] sm:$0xff]
      %v422 = vld [vmem:[%s326 + $0x2d8] sm:$0xff]
      %v423 = vld [vmem:[%s326 + $0x2e0] sm:$0xff]
      %v424 = vld [vmem:[%s326 + $0x2e8] sm:$0xff]
      %v425 = vld [vmem:[%s326 + $0x2f0] sm:$0xff]
      %v426 = vld [vmem:[%s326 + $0x2f8] sm:$0xff]
      %v427 = vld [vmem:[%s326 + $0x300] sm:$0xff]
      %v428 = vld [vmem:[%s326 + $0x308] sm:$0xff]
      %v429 = vld [vmem:[%s326 + $0x310] sm:$0xff]
      %v430 = vld [vmem:[%s326 + $0x318] sm:$0xff]
      %v431 = vld [vmem:[%s326 + $0x320] sm:$0xff]
      %v432 = vld [vmem:[%s326 + $0x328] sm:$0xff]
      %v433 = vld [vmem:[%s326 + $0x330] sm:$0xff]
      %v434 = vld [vmem:[%s326 + $0x338] sm:$0xff]
      %v435 = vld [vmem:[%s326 + $0x340] sm:$0xff]
      %v436 = vld [vmem:[%s326 + $0x348] sm:$0xff]
      %v437 = vld [vmem:[%s326 + $0x350] sm:$0xff]
      %v438 = vld [vmem:[%s326 + $0x358] sm:$0xff]
      %v439 = vld [vmem:[%s326 + $0x360] sm:$0xff]
      %v440 = vld [vmem:[%s326 + $0x368] sm:$0xff]
      %v441 = vld [vmem:[%s326 + $0x370] sm:$0xff]
      %v442 = vld [vmem:[%s326 + $0x378] sm:$0xff]
      %v443 = vld [vmem:[%s326 + $0x380] sm:$0xff]
      %v444 = vld [vmem:[%s326 + $0x388] sm:$0xff]
      %v445 = vld [vmem:[%s326 + $0x390] sm:$0xff]
      %v446 = vld [vmem:[%s326 + $0x398] sm:$0xff]
      %v447 = vld [vmem:[%s326 + $0x3a0] sm:$0xff]
      %v448 = vld [vmem:[%s326 + $0x3a8] sm:$0xff]
      %v449 = vld [vmem:[%s326 + $0x3b0] sm:$0xff]
      %v450 = vld [vmem:[%s326 + $0x3b8] sm:$0xff]
      %v451 = vld [vmem:[%s326 + $0x3c0] sm:$0xff]
      %v452 = vld [vmem:[%s326 + $0x3c8] sm:$0xff]
      %v453 = vld [vmem:[%s326 + $0x3d0] sm:$0xff]
      %v454 = vld [vmem:[%s326 + $0x3d8] sm:$0xff]
      %v455 = vld [vmem:[%s326 + $0x3e0] sm:$0xff]
      %v456 = vld [vmem:[%s326 + $0x3e8] sm:$0xff]
      %v457 = vld [vmem:[%s326 + $0x3f0] sm:$0xff]
      %v458 = vld [vmem:[%s326 + $0x3f8] sm:$0xff]
      %v459 = vld [vmem:[%s326 + $0x400] sm:$0xff]
      %v460 = vld [vmem:[%s326 + $0x408] sm:$0xff]
      %v461 = vld [vmem:[%s326 + $0x410] sm:$0xff]
      %v462 = vld [vmem:[%s326 + $0x418] sm:$0xff]
      %v463 = vld [vmem:[%s326 + $0x420] sm:$0xff]
      %v464 = vld [vmem:[%s326 + $0x428] sm:$0xff]
      %v465 = vld [vmem:[%s326 + $0x430] sm:$0xff]
      %v466 = vld [vmem:[%s326 + $0x438] sm:$0xff]
      %v467 = vld [vmem:[%s326 + $0x440] sm:$0xff]
      %v468 = vld [vmem:[%s326 + $0x448] sm:$0xff]
      %v469 = vld [vmem:[%s326 + $0x450] sm:$0xff]
      %v470 = vld [vmem:[%s326 + $0x458] sm:$0xff]
      %v471 = vld [vmem:[%s326 + $0x460] sm:$0xff]
      %v472 = vld [vmem:[%s326 + $0x468] sm:$0xff]
      %v473 = vld [vmem:[%s326 + $0x470] sm:$0xff]
      %v474 = vld [vmem:[%s326 + $0x478] sm:$0xff]
      %v475 = vld [vmem:[%s326 + $0x480] sm:$0xff]
      %v476 = vld [vmem:[%s326 + $0x488] sm:$0xff]
      %v477 = vld [vmem:[%s326 + $0x490] sm:$0xff]
      %v478 = vld [vmem:[%s326 + $0x498] sm:$0xff]
      %v479 = vld [vmem:[%s326 + $0x4a0] sm:$0xff]
      %v480 = vld [vmem:[%s326 + $0x4a8] sm:$0xff]
      %v481 = vld [vmem:[%s326 + $0x4b0] sm:$0xff]
      %v482 = vld [vmem:[%s326 + $0x4b8] sm:$0xff]
      %v483 = vld [vmem:[%s326 + $0x4c0] sm:$0xff]
      %v484 = vld [vmem:[%s326 + $0x4c8] sm:$0xff]
      %v485 = vld [vmem:[%s326 + $0x4d0] sm:$0xff]
      %v486 = vld [vmem:[%s326 + $0x4d8] sm:$0xff]
      %v487 = vld [vmem:[%s326 + $0x4e0] sm:$0xff]
      %v488 = vld [vmem:[%s326 + $0x4e8] sm:$0xff]
      %v489 = vld [vmem:[%s326 + $0x4f0] sm:$0xff]
      %v490 = vld [vmem:[%s326 + $0x4f8] sm:$0xff]
      %v491 = vld [vmem:[%s326 + $0x500] sm:$0xff]
      %v492 = vld [vmem:[%s326 + $0x508] sm:$0xff]
      %v493 = vld [vmem:[%s326 + $0x510] sm:$0xff]
      %v494 = vld [vmem:[%s326 + $0x518] sm:$0xff]
      %v495 = vld [vmem:[%s326 + $0x520] sm:$0xff]
      %v496 = vld [vmem:[%s326 + $0x528] sm:$0xff]
      %v497 = vld [vmem:[%s326 + $0x530] sm:$0xff]
      %v498 = vld [vmem:[%s326 + $0x538] sm:$0xff]
      %v499 = vld [vmem:[%s326 + $0x540] sm:$0xff]
      %v500 = vld [vmem:[%s326 + $0x548] sm:$0xff]
      %v501 = vld [vmem:[%s326 + $0x550] sm:$0xff]
      %v502 = vld [vmem:[%s326 + $0x558] sm:$0xff]
      %v503 = vld [vmem:[%s326 + $0x560] sm:$0xff]
      %v504 = vld [vmem:[%s326 + $0x568] sm:$0xff]
      %v505 = vld [vmem:[%s326 + $0x570] sm:$0xff]
      %v506 = vld [vmem:[%s326 + $0x578] sm:$0xff]
      %v507 = vld [vmem:[%s326 + $0x580] sm:$0xff]
      %v508 = vld [vmem:[%s326 + $0x588] sm:$0xff]
      %v509 = vld [vmem:[%s326 + $0x590] sm:$0xff]
      %v510 = vld [vmem:[%s326 + $0x598] sm:$0xff]
      %v511 = vld [vmem:[%s326 + $0x5a0] sm:$0xff]
      %v512 = vld [vmem:[%s326 + $0x5a8] sm:$0xff]
      %v513 = vld [vmem:[%s326 + $0x5b0] sm:$0xff]
      %v514 = vld [vmem:[%s326 + $0x5b8] sm:$0xff]
      %v515 = vld [vmem:[%s326 + $0x5c0] sm:$0xff]
      %v516 = vld [vmem:[%s326 + $0x5c8] sm:$0xff]
      %v517 = vld [vmem:[%s326 + $0x5d0] sm:$0xff]
      %v518 = vld [vmem:[%s326 + $0x5d8] sm:$0xff]
      %v519 = vld [vmem:[%s326 + $0x5e0] sm:$0xff]
      %v520 = vld [vmem:[%s326 + $0x5e8] sm:$0xff]
      %v521 = vld [vmem:[%s326 + $0x5f0] sm:$0xff]
      %v522 = vld [vmem:[%s326 + $0x5f8] sm:$0xff]
      %v523 = vld [vmem:[%s2] sm:$0xff]
      %v524 = vld [vmem:[%s2 + $0x8] sm:$0xff]
      %v525 = vld [vmem:[%s2 + $0x10] sm:$0xff]
      %v526 = vld [vmem:[%s2 + $0x18] sm:$0xff]
      %v527 = vld [vmem:[%s2 + $0x20] sm:$0xff]
      %v528 = vld [vmem:[%s2 + $0x28] sm:$0xff]
      %v529 = vld [vmem:[%s2 + $0x30] sm:$0xff]
      %v530 = vld [vmem:[%s2 + $0x38] sm:$0xff]
      %v531 = vld [vmem:[%s2 + $0x40] sm:$0xff]
      %v532 = vld [vmem:[%s2 + $0x48] sm:$0xff]
      %v533 = vld [vmem:[%s2 + $0x50] sm:$0xff]
      %v534 = vld [vmem:[%s2 + $0x58] sm:$0xff]
      %v535 = vld [vmem:[%s2 + $0x60] sm:$0xff]
      %v536 = vld [vmem:[%s2 + $0x68] sm:$0xff]
      %v537 = vld [vmem:[%s2 + $0x70] sm:$0xff]
      %v538 = vld [vmem:[%s2 + $0x78] sm:$0xff]
      %v539 = vld [vmem:[%s2 + $0x80] sm:$0xff]
      %v540 = vld [vmem:[%s2 + $0x88] sm:$0xff]
      %v541 = vld [vmem:[%s2 + $0x90] sm:$0xff]
      %v542 = vld [vmem:[%s2 + $0x98] sm:$0xff]
      %v543 = vld [vmem:[%s2 + $0xa0] sm:$0xff]
      %v544 = vld [vmem:[%s2 + $0xa8] sm:$0xff]
      %v545 = vld [vmem:[%s2 + $0xb0] sm:$0xff]
      %v546 = vld [vmem:[%s2 + $0xb8] sm:$0xff]
      %v547 = vld [vmem:[%s2 + $0xc0] sm:$0xff]
      %v548 = vld [vmem:[%s2 + $0xc8] sm:$0xff]
      %v549 = vld [vmem:[%s2 + $0xd0] sm:$0xff]
      %v550 = vld [vmem:[%s2 + $0xd8] sm:$0xff]
      %v551 = vld [vmem:[%s2 + $0xe0] sm:$0xff]
      %v552 = vld [vmem:[%s2 + $0xe8] sm:$0xff]
      %v553 = vld [vmem:[%s2 + $0xf0] sm:$0xff]
      %v554 = vld [vmem:[%s2 + $0xf8] sm:$0xff]
      %v555 = vld [vmem:[%s2 + $0x100] sm:$0xff]
      %v556 = vld [vmem:[%s2 + $0x108] sm:$0xff]
      %v557 = vld [vmem:[%s2 + $0x110] sm:$0xff]
      %v558 = vld [vmem:[%s2 + $0x118] sm:$0xff]
      %v559 = vld [vmem:[%s2 + $0x120] sm:$0xff]
      %v560 = vld [vmem:[%s2 + $0x128] sm:$0xff]
      %v561 = vld [vmem:[%s2 + $0x130] sm:$0xff]
      %v562 = vld [vmem:[%s2 + $0x138] sm:$0xff]
      %v563 = vld [vmem:[%s2 + $0x140] sm:$0xff]
      %v564 = vld [vmem:[%s2 + $0x148] sm:$0xff]
      %v565 = vld [vmem:[%s2 + $0x150] sm:$0xff]
      %v566 = vld [vmem:[%s2 + $0x158] sm:$0xff]
      %v567 = vld [vmem:[%s2 + $0x160] sm:$0xff]
      %v568 = vld [vmem:[%s2 + $0x168] sm:$0xff]
      %v569 = vld [vmem:[%s2 + $0x170] sm:$0xff]
      %v570 = vld [vmem:[%s2 + $0x178] sm:$0xff]
      %v571 = vld [vmem:[%s2 + $0x180] sm:$0xff]
      %v572 = vld [vmem:[%s2 + $0x188] sm:$0xff]
      %v573 = vld [vmem:[%s2 + $0x190] sm:$0xff]
      %v574 = vld [vmem:[%s2 + $0x198] sm:$0xff]
      %v575 = vld [vmem:[%s2 + $0x1a0] sm:$0xff]
      %v576 = vld [vmem:[%s2 + $0x1a8] sm:$0xff]
      %v577 = vld [vmem:[%s2 + $0x1b0] sm:$0xff]
      %v578 = vld [vmem:[%s2 + $0x1b8] sm:$0xff]
      %v579 = vld [vmem:[%s2 + $0x1c0] sm:$0xff]
      %v580 = vld [vmem:[%s2 + $0x1c8] sm:$0xff]
      %v581 = vld [vmem:[%s2 + $0x1d0] sm:$0xff]
      %v582 = vld [vmem:[%s2 + $0x1d8] sm:$0xff]
      %v583 = vld [vmem:[%s2 + $0x1e0] sm:$0xff]
      %v584 = vld [vmem:[%s2 + $0x1e8] sm:$0xff]
      %v585 = vld [vmem:[%s2 + $0x1f0] sm:$0xff]
      %v586 = vld [vmem:[%s2 + $0x1f8] sm:$0xff]
      %v587 = vld [vmem:[%s2 + $0x200] sm:$0xff]
      %v588 = vld [vmem:[%s2 + $0x208] sm:$0xff]
      %v589 = vld [vmem:[%s2 + $0x210] sm:$0xff]
      %v590 = vld [vmem:[%s2 + $0x218] sm:$0xff]
      %v591 = vld [vmem:[%s2 + $0x220] sm:$0xff]
      %v592 = vld [vmem:[%s2 + $0x228] sm:$0xff]
      %v593 = vld [vmem:[%s2 + $0x230] sm:$0xff]
      %v594 = vld [vmem:[%s2 + $0x238] sm:$0xff]
      %v595 = vld [vmem:[%s2 + $0x240] sm:$0xff]
      %v596 = vld [vmem:[%s2 + $0x248] sm:$0xff]
      %v597 = vld [vmem:[%s2 + $0x250] sm:$0xff]
      %v598 = vld [vmem:[%s2 + $0x258] sm:$0xff]
      %v599 = vld [vmem:[%s2 + $0x260] sm:$0xff]
      %v600 = vld [vmem:[%s2 + $0x268] sm:$0xff]
      %v601 = vld [vmem:[%s2 + $0x270] sm:$0xff]
      %v602 = vld [vmem:[%s2 + $0x278] sm:$0xff]
      %v603 = vld [vmem:[%s2 + $0x280] sm:$0xff]
      %v604 = vld [vmem:[%s2 + $0x288] sm:$0xff]
      %v605 = vld [vmem:[%s2 + $0x290] sm:$0xff]
      %v606 = vld [vmem:[%s2 + $0x298] sm:$0xff]
      %v607 = vld [vmem:[%s2 + $0x2a0] sm:$0xff]
      %v608 = vld [vmem:[%s2 + $0x2a8] sm:$0xff]
      %v609 = vld [vmem:[%s2 + $0x2b0] sm:$0xff]
      %v610 = vld [vmem:[%s2 + $0x2b8] sm:$0xff]
      %v611 = vld [vmem:[%s2 + $0x2c0] sm:$0xff]
      %v612 = vld [vmem:[%s2 + $0x2c8] sm:$0xff]
      %v613 = vld [vmem:[%s2 + $0x2d0] sm:$0xff]
      %v614 = vld [vmem:[%s2 + $0x2d8] sm:$0xff]
      %v615 = vld [vmem:[%s2 + $0x2e0] sm:$0xff]
      %v616 = vld [vmem:[%s2 + $0x2e8] sm:$0xff]
      %v617 = vld [vmem:[%s2 + $0x2f0] sm:$0xff]
      %v618 = vld [vmem:[%s2 + $0x2f8] sm:$0xff]
      %v619 = vld [vmem:[%s2 + $0x300] sm:$0xff]
      %v620 = vld [vmem:[%s2 + $0x308] sm:$0xff]
      %v621 = vld [vmem:[%s2 + $0x310] sm:$0xff]
      %v622 = vld [vmem:[%s2 + $0x318] sm:$0xff]
      %v623 = vld [vmem:[%s2 + $0x320] sm:$0xff]
      %v624 = vld [vmem:[%s2 + $0x328] sm:$0xff]
      %v625 = vld [vmem:[%s2 + $0x330] sm:$0xff]
      %v626 = vld [vmem:[%s2 + $0x338] sm:$0xff]
      %v627 = vld [vmem:[%s2 + $0x340] sm:$0xff]
      %v628 = vld [vmem:[%s2 + $0x348] sm:$0xff]
      %v629 = vld [vmem:[%s2 + $0x350] sm:$0xff]
      %v630 = vld [vmem:[%s2 + $0x358] sm:$0xff]
      %v631 = vld [vmem:[%s2 + $0x360] sm:$0xff]
      %v632 = vld [vmem:[%s2 + $0x368] sm:$0xff]
      %v633 = vld [vmem:[%s2 + $0x370] sm:$0xff]
      %v634 = vld [vmem:[%s2 + $0x378] sm:$0xff]
      %v635 = vld [vmem:[%s2 + $0x380] sm:$0xff]
      %v636 = vld [vmem:[%s2 + $0x388] sm:$0xff]
      %v637 = vld [vmem:[%s2 + $0x390] sm:$0xff]
      %v638 = vld [vmem:[%s2 + $0x398] sm:$0xff]
      %v639 = vld [vmem:[%s2 + $0x3a0] sm:$0xff]
      %v640 = vld [vmem:[%s2 + $0x3a8] sm:$0xff]
      %v641 = vld [vmem:[%s2 + $0x3b0] sm:$0xff]
      %v642 = vld [vmem:[%s2 + $0x3b8] sm:$0xff]
      %v643 = vld [vmem:[%s2 + $0x3c0] sm:$0xff]
      %v644 = vld [vmem:[%s2 + $0x3c8] sm:$0xff]
      %v645 = vld [vmem:[%s2 + $0x3d0] sm:$0xff]
      %v646 = vld [vmem:[%s2 + $0x3d8] sm:$0xff]
      %v647 = vld [vmem:[%s2 + $0x3e0] sm:$0xff]
      %v648 = vld [vmem:[%s2 + $0x3e8] sm:$0xff]
      %v649 = vld [vmem:[%s2 + $0x3f0] sm:$0xff]
      %v650 = vld [vmem:[%s2 + $0x3f8] sm:$0xff]
      %v651 = vld [vmem:[%s2 + $0x400] sm:$0xff]
      %v652 = vld [vmem:[%s2 + $0x408] sm:$0xff]
      %v653 = vld [vmem:[%s2 + $0x410] sm:$0xff]
      %v654 = vld [vmem:[%s2 + $0x418] sm:$0xff]
      %v655 = vld [vmem:[%s2 + $0x420] sm:$0xff]
      %v656 = vld [vmem:[%s2 + $0x428] sm:$0xff]
      %v657 = vld [vmem:[%s2 + $0x430] sm:$0xff]
      %v658 = vld [vmem:[%s2 + $0x438] sm:$0xff]
      %v659 = vld [vmem:[%s2 + $0x440] sm:$0xff]
      %v660 = vld [vmem:[%s2 + $0x448] sm:$0xff]
      %v661 = vld [vmem:[%s2 + $0x450] sm:$0xff]
      %v662 = vld [vmem:[%s2 + $0x458] sm:$0xff]
      %v663 = vld [vmem:[%s2 + $0x460] sm:$0xff]
      %v664 = vld [vmem:[%s2 + $0x468] sm:$0xff]
      %v665 = vld [vmem:[%s2 + $0x470] sm:$0xff]
      %v666 = vld [vmem:[%s2 + $0x478] sm:$0xff]
      %v667 = vld [vmem:[%s2 + $0x480] sm:$0xff]
      %v668 = vld [vmem:[%s2 + $0x488] sm:$0xff]
      %v669 = vld [vmem:[%s2 + $0x490] sm:$0xff]
      %v670 = vld [vmem:[%s2 + $0x498] sm:$0xff]
      %v671 = vld [vmem:[%s2 + $0x4a0] sm:$0xff]
      %v672 = vld [vmem:[%s2 + $0x4a8] sm:$0xff]
      %v673 = vld [vmem:[%s2 + $0x4b0] sm:$0xff]
      %v674 = vld [vmem:[%s2 + $0x4b8] sm:$0xff]
      %v675 = vld [vmem:[%s2 + $0x4c0] sm:$0xff]
      %v676 = vld [vmem:[%s2 + $0x4c8] sm:$0xff]
      %v677 = vld [vmem:[%s2 + $0x4d0] sm:$0xff]
      %v678 = vld [vmem:[%s2 + $0x4d8] sm:$0xff]
      %v679 = vld [vmem:[%s2 + $0x4e0] sm:$0xff]
      %v680 = vld [vmem:[%s2 + $0x4e8] sm:$0xff]
      %v681 = vld [vmem:[%s2 + $0x4f0] sm:$0xff]
      %v682 = vld [vmem:[%s2 + $0x4f8] sm:$0xff]
      %v683 = vld [vmem:[%s2 + $0x500] sm:$0xff]
      %v684 = vld [vmem:[%s2 + $0x508] sm:$0xff]
      %v685 = vld [vmem:[%s2 + $0x510] sm:$0xff]
      %v686 = vld [vmem:[%s2 + $0x518] sm:$0xff]
      %v687 = vld [vmem:[%s2 + $0x520] sm:$0xff]
      %v688 = vld [vmem:[%s2 + $0x528] sm:$0xff]
      %v689 = vld [vmem:[%s2 + $0x530] sm:$0xff]
      %v690 = vld [vmem:[%s2 + $0x538] sm:$0xff]
      %v691 = vld [vmem:[%s2 + $0x540] sm:$0xff]
      %v692 = vld [vmem:[%s2 + $0x548] sm:$0xff]
      %v693 = vld [vmem:[%s2 + $0x550] sm:$0xff]
      %v694 = vld [vmem:[%s2 + $0x558] sm:$0xff]
      %v695 = vld [vmem:[%s2 + $0x560] sm:$0xff]
      %v696 = vld [vmem:[%s2 + $0x568] sm:$0xff]
      %v697 = vld [vmem:[%s2 + $0x570] sm:$0xff]
      %v698 = vld [vmem:[%s2 + $0x578] sm:$0xff]
      %v699 = vld [vmem:[%s2 + $0x580] sm:$0xff]
      %v700 = vld [vmem:[%s2 + $0x588] sm:$0xff]
      %v701 = vld [vmem:[%s2 + $0x590] sm:$0xff]
      %v702 = vld [vmem:[%s2 + $0x598] sm:$0xff]
      %v703 = vld [vmem:[%s2 + $0x5a0] sm:$0xff]
      %v704 = vld [vmem:[%s2 + $0x5a8] sm:$0xff]
      %v705 = vld [vmem:[%s2 + $0x5b0] sm:$0xff]
      %v706 = vld [vmem:[%s2 + $0x5b8] sm:$0xff]
      %v707 = vld [vmem:[%s2 + $0x5c0] sm:$0xff]
      %v708 = vld [vmem:[%s2 + $0x5c8] sm:$0xff]
      %v709 = vld [vmem:[%s2 + $0x5d0] sm:$0xff]
      %v710 = vld [vmem:[%s2 + $0x5d8] sm:$0xff]
      %v711 = vld [vmem:[%s2 + $0x5e0] sm:$0xff]
      %v712 = vld [vmem:[%s2 + $0x5e8] sm:$0xff]
      %v713 = vld [vmem:[%s2 + $0x5f0] sm:$0xff]
      %v714 = vld [vmem:[%s2 + $0x5f8] sm:$0xff]
      %v715 = vld [vmem:[%s2 + $0x600] sm:$0xff]
      %v716 = vld [vmem:[%s2 + $0x608] sm:$0xff]
      %v717 = vld [vmem:[%s2 + $0x610] sm:$0xff]
      %v718 = vld [vmem:[%s2 + $0x618] sm:$0xff]
      %v719 = vld [vmem:[%s2 + $0x620] sm:$0xff]
      %v720 = vld [vmem:[%s2 + $0x628] sm:$0xff]
      %v721 = vld [vmem:[%s2 + $0x630] sm:$0xff]
      %v722 = vld [vmem:[%s2 + $0x638] sm:$0xff]
      %v723 = vld [vmem:[%s2 + $0x640] sm:$0xff]
      %v724 = vld [vmem:[%s2 + $0x648] sm:$0xff]
      %v725 = vld [vmem:[%s2 + $0x650] sm:$0xff]
      %v726 = vld [vmem:[%s2 + $0x658] sm:$0xff]
      %v727 = vld [vmem:[%s2 + $0x660] sm:$0xff]
      %v728 = vld [vmem:[%s2 + $0x668] sm:$0xff]
      %v729 = vld [vmem:[%s2 + $0x670] sm:$0xff]
      %v730 = vld [vmem:[%s2 + $0x678] sm:$0xff]
      %v731 = vld [vmem:[%s2 + $0x680] sm:$0xff]
      %v732 = vld [vmem:[%s2 + $0x688] sm:$0xff]
      %v733 = vld [vmem:[%s2 + $0x690] sm:$0xff]
      %v734 = vld [vmem:[%s2 + $0x698] sm:$0xff]
      %v735 = vld [vmem:[%s2 + $0x6a0] sm:$0xff]
      %v736 = vld [vmem:[%s2 + $0x6a8] sm:$0xff]
      %v737 = vld [vmem:[%s2 + $0x6b0] sm:$0xff]
      %v738 = vld [vmem:[%s2 + $0x6b8] sm:$0xff]
      %v739 = vld [vmem:[%s2 + $0x6c0] sm:$0xff]
      %v740 = vld [vmem:[%s2 + $0x6c8] sm:$0xff]
      %v741 = vld [vmem:[%s2 + $0x6d0] sm:$0xff]
      %v742 = vld [vmem:[%s2 + $0x6d8] sm:$0xff]
      %v743 = vld [vmem:[%s2 + $0x6e0] sm:$0xff]
      %v744 = vld [vmem:[%s2 + $0x6e8] sm:$0xff]
      %v745 = vld [vmem:[%s2 + $0x6f0] sm:$0xff]
      %v746 = vld [vmem:[%s2 + $0x6f8] sm:$0xff]
      %v747 = vld [vmem:[%s2 + $0x700] sm:$0xff]
      %v748 = vld [vmem:[%s2 + $0x708] sm:$0xff]
      %v749 = vld [vmem:[%s2 + $0x710] sm:$0xff]
      %v750 = vld [vmem:[%s2 + $0x718] sm:$0xff]
      %v751 = vld [vmem:[%s2 + $0x720] sm:$0xff]
      %v752 = vld [vmem:[%s2 + $0x728] sm:$0xff]
      %v753 = vld [vmem:[%s2 + $0x730] sm:$0xff]
      %v754 = vld [vmem:[%s2 + $0x738] sm:$0xff]
      %v755 = vld [vmem:[%s2 + $0x740] sm:$0xff]
      %v756 = vld [vmem:[%s2 + $0x748] sm:$0xff]
      %v757 = vld [vmem:[%s2 + $0x750] sm:$0xff]
      %v758 = vld [vmem:[%s2 + $0x758] sm:$0xff]
      %v759 = vld [vmem:[%s2 + $0x760] sm:$0xff]
      %v760 = vld [vmem:[%s2 + $0x768] sm:$0xff]
      %v761 = vld [vmem:[%s2 + $0x770] sm:$0xff]
      %v762 = vld [vmem:[%s2 + $0x778] sm:$0xff]
      %v763 = vld [vmem:[%s2 + $0x780] sm:$0xff]
      %v764 = vld [vmem:[%s2 + $0x788] sm:$0xff]
      %v765 = vld [vmem:[%s2 + $0x790] sm:$0xff]
      %v766 = vld [vmem:[%s2 + $0x798] sm:$0xff]
      %v767 = vld [vmem:[%s2 + $0x7a0] sm:$0xff]
      %v768 = vld [vmem:[%s2 + $0x7a8] sm:$0xff]
      %v769 = vld [vmem:[%s2 + $0x7b0] sm:$0xff]
      %v770 = vld [vmem:[%s2 + $0x7b8] sm:$0xff]
      %v771 = vld [vmem:[%s2 + $0x7c0] sm:$0xff]
      %v772 = vld [vmem:[%s2 + $0x7c8] sm:$0xff]
      %v773 = vld [vmem:[%s2 + $0x7d0] sm:$0xff]
      %v774 = vld [vmem:[%s2 + $0x7d8] sm:$0xff]
      %v775 = vld [vmem:[%s2 + $0x7e0] sm:$0xff]
      %v776 = vld [vmem:[%s2 + $0x7e8] sm:$0xff]
      %v777 = vld [vmem:[%s2 + $0x7f0] sm:$0xff]
      %v778 = vld [vmem:[%s2 + $0x7f8] sm:$0xff]
      %v779 = vld [vmem:[%s2 + $0x800] sm:$0xff]
      %v780 = vld [vmem:[%s2 + $0x808] sm:$0xff]
      %v781 = vld [vmem:[%s2 + $0x810] sm:$0xff]
      %v782 = vld [vmem:[%s2 + $0x818] sm:$0xff]
      %v783 = vld [vmem:[%s2 + $0x820] sm:$0xff]
      %v784 = vld [vmem:[%s2 + $0x828] sm:$0xff]
      %v785 = vld [vmem:[%s2 + $0x830] sm:$0xff]
      %v786 = vld [vmem:[%s2 + $0x838] sm:$0xff]
      %v787 = vld [vmem:[%s2 + $0x840] sm:$0xff]
      %v788 = vld [vmem:[%s2 + $0x848] sm:$0xff]
      %v789 = vld [vmem:[%s2 + $0x850] sm:$0xff]
      %v790 = vld [vmem:[%s2 + $0x858] sm:$0xff]
      %v791 = vld [vmem:[%s2 + $0x860] sm:$0xff]
      %v792 = vld [vmem:[%s2 + $0x868] sm:$0xff]
      %v793 = vld [vmem:[%s2 + $0x870] sm:$0xff]
      %v794 = vld [vmem:[%s2 + $0x878] sm:$0xff]
      %v795 = vld [vmem:[%s2 + $0x880] sm:$0xff]
      %v796 = vld [vmem:[%s2 + $0x888] sm:$0xff]
      %v797 = vld [vmem:[%s2 + $0x890] sm:$0xff]
      %v798 = vld [vmem:[%s2 + $0x898] sm:$0xff]
      %v799 = vld [vmem:[%s2 + $0x8a0] sm:$0xff]
      %v800 = vld [vmem:[%s2 + $0x8a8] sm:$0xff]
      %v801 = vld [vmem:[%s2 + $0x8b0] sm:$0xff]
      %v802 = vld [vmem:[%s2 + $0x8b8] sm:$0xff]
      %v803 = vld [vmem:[%s2 + $0x8c0] sm:$0xff]
      %v804 = vld [vmem:[%s2 + $0x8c8] sm:$0xff]
      %v805 = vld [vmem:[%s2 + $0x8d0] sm:$0xff]
      %v806 = vld [vmem:[%s2 + $0x8d8] sm:$0xff]
      %v807 = vld [vmem:[%s2 + $0x8e0] sm:$0xff]
      %v808 = vld [vmem:[%s2 + $0x8e8] sm:$0xff]
      %v809 = vld [vmem:[%s2 + $0x8f0] sm:$0xff]
      %v810 = vld [vmem:[%s2 + $0x8f8] sm:$0xff]
      %v811 = vld [vmem:[%s2 + $0x900] sm:$0xff]
      %v812 = vld [vmem:[%s2 + $0x908] sm:$0xff]
      %v813 = vld [vmem:[%s2 + $0x910] sm:$0xff]
      %v814 = vld [vmem:[%s2 + $0x918] sm:$0xff]
      %v815 = vld [vmem:[%s2 + $0x920] sm:$0xff]
      %v816 = vld [vmem:[%s2 + $0x928] sm:$0xff]
      %v817 = vld [vmem:[%s2 + $0x930] sm:$0xff]
      %v818 = vld [vmem:[%s2 + $0x938] sm:$0xff]
      %v819 = vld [vmem:[%s2 + $0x940] sm:$0xff]
      %v820 = vld [vmem:[%s2 + $0x948] sm:$0xff]
      %v821 = vld [vmem:[%s2 + $0x950] sm:$0xff]
      %v822 = vld [vmem:[%s2 + $0x958] sm:$0xff]
      %v823 = vld [vmem:[%s2 + $0x960] sm:$0xff]
      %v824 = vld [vmem:[%s2 + $0x968] sm:$0xff]
      %v825 = vld [vmem:[%s2 + $0x970] sm:$0xff]
      %v826 = vld [vmem:[%s2 + $0x978] sm:$0xff]
      %v827 = vld [vmem:[%s2 + $0x980] sm:$0xff]
      %v828 = vld [vmem:[%s2 + $0x988] sm:$0xff]
      %v829 = vld [vmem:[%s2 + $0x990] sm:$0xff]
      %v830 = vld [vmem:[%s2 + $0x998] sm:$0xff]
      %v831 = vld [vmem:[%s2 + $0x9a0] sm:$0xff]
      %v832 = vld [vmem:[%s2 + $0x9a8] sm:$0xff]
      %v833 = vld [vmem:[%s2 + $0x9b0] sm:$0xff]
      %v834 = vld [vmem:[%s2 + $0x9b8] sm:$0xff]
      %v835 = vld [vmem:[%s2 + $0x9c0] sm:$0xff]
      %v836 = vld [vmem:[%s2 + $0x9c8] sm:$0xff]
      %v837 = vld [vmem:[%s2 + $0x9d0] sm:$0xff]
      %v838 = vld [vmem:[%s2 + $0x9d8] sm:$0xff]
      %v839 = vld [vmem:[%s2 + $0x9e0] sm:$0xff]
      %v840 = vld [vmem:[%s2 + $0x9e8] sm:$0xff]
      %v841 = vld [vmem:[%s2 + $0x9f0] sm:$0xff]
      %v842 = vld [vmem:[%s2 + $0x9f8] sm:$0xff]
      %v843 = vld [vmem:[%s2 + $0xa00] sm:$0xff]
      %v844 = vld [vmem:[%s2 + $0xa08] sm:$0xff]
      %v845 = vld [vmem:[%s2 + $0xa10] sm:$0xff]
      %v846 = vld [vmem:[%s2 + $0xa18] sm:$0xff]
      %v847 = vld [vmem:[%s2 + $0xa20] sm:$0xff]
      %v848 = vld [vmem:[%s2 + $0xa28] sm:$0xff]
      %v849 = vld [vmem:[%s2 + $0xa30] sm:$0xff]
      %v850 = vld [vmem:[%s2 + $0xa38] sm:$0xff]
      %v851 = vld [vmem:[%s2 + $0xa40] sm:$0xff]
      %v852 = vld [vmem:[%s2 + $0xa48] sm:$0xff]
      %v853 = vld [vmem:[%s2 + $0xa50] sm:$0xff]
      %v854 = vld [vmem:[%s2 + $0xa58] sm:$0xff]
      %v855 = vld [vmem:[%s2 + $0xa60] sm:$0xff]
      %v856 = vld [vmem:[%s2 + $0xa68] sm:$0xff]
      %v857 = vld [vmem:[%s2 + $0xa70] sm:$0xff]
      %v858 = vld [vmem:[%s2 + $0xa78] sm:$0xff]
      %v859 = vld [vmem:[%s2 + $0xa80] sm:$0xff]
      %v860 = vld [vmem:[%s2 + $0xa88] sm:$0xff]
      %v861 = vld [vmem:[%s2 + $0xa90] sm:$0xff]
      %v862 = vld [vmem:[%s2 + $0xa98] sm:$0xff]
      %v863 = vld [vmem:[%s2 + $0xaa0] sm:$0xff]
      %v864 = vld [vmem:[%s2 + $0xaa8] sm:$0xff]
      %v865 = vld [vmem:[%s2 + $0xab0] sm:$0xff]
      %v866 = vld [vmem:[%s2 + $0xab8] sm:$0xff]
      %v867 = vld [vmem:[%s2 + $0xac0] sm:$0xff]
      %v868 = vld [vmem:[%s2 + $0xac8] sm:$0xff]
      %v869 = vld [vmem:[%s2 + $0xad0] sm:$0xff]
      %v870 = vld [vmem:[%s2 + $0xad8] sm:$0xff]
      %v871 = vld [vmem:[%s2 + $0xae0] sm:$0xff]
      %v872 = vld [vmem:[%s2 + $0xae8] sm:$0xff]
      %v873 = vld [vmem:[%s2 + $0xaf0] sm:$0xff]
      %v874 = vld [vmem:[%s2 + $0xaf8] sm:$0xff]
      %v875 = vld [vmem:[%s2 + $0xb00] sm:$0xff]
      %v876 = vld [vmem:[%s2 + $0xb08] sm:$0xff]
      %v877 = vld [vmem:[%s2 + $0xb10] sm:$0xff]
      %v878 = vld [vmem:[%s2 + $0xb18] sm:$0xff]
      %v879 = vld [vmem:[%s2 + $0xb20] sm:$0xff]
      %v880 = vld [vmem:[%s2 + $0xb28] sm:$0xff]
      %v881 = vld [vmem:[%s2 + $0xb30] sm:$0xff]
      %v882 = vld [vmem:[%s2 + $0xb38] sm:$0xff]
      %v883 = vld [vmem:[%s2 + $0xb40] sm:$0xff]
      %v884 = vld [vmem:[%s2 + $0xb48] sm:$0xff]
      %v885 = vld [vmem:[%s2 + $0xb50] sm:$0xff]
      %v886 = vld [vmem:[%s2 + $0xb58] sm:$0xff]
      %v887 = vld [vmem:[%s2 + $0xb60] sm:$0xff]
      %v888 = vld [vmem:[%s2 + $0xb68] sm:$0xff]
      %v889 = vld [vmem:[%s2 + $0xb70] sm:$0xff]
      %v890 = vld [vmem:[%s2 + $0xb78] sm:$0xff]
      %v891 = vld [vmem:[%s2 + $0xb80] sm:$0xff]
      %v892 = vld [vmem:[%s2 + $0xb88] sm:$0xff]
      %v893 = vld [vmem:[%s2 + $0xb90] sm:$0xff]
      %v894 = vld [vmem:[%s2 + $0xb98] sm:$0xff]
      %v895 = vld [vmem:[%s2 + $0xba0] sm:$0xff]
      %v896 = vld [vmem:[%s2 + $0xba8] sm:$0xff]
      %v897 = vld [vmem:[%s2 + $0xbb0] sm:$0xff]
      %v898 = vld [vmem:[%s2 + $0xbb8] sm:$0xff]
      %v899 = vld [vmem:[%s2 + $0xbc0] sm:$0xff]
      %v900 = vld [vmem:[%s2 + $0xbc8] sm:$0xff]
      %v901 = vld [vmem:[%s2 + $0xbd0] sm:$0xff]
      %v902 = vld [vmem:[%s2 + $0xbd8] sm:$0xff]
      %v903 = vld [vmem:[%s2 + $0xbe0] sm:$0xff]
      %v904 = vld [vmem:[%s2 + $0xbe8] sm:$0xff]
      %v905 = vld [vmem:[%s2 + $0xbf0] sm:$0xff]
      %v906 = vld [vmem:[%s2 + $0xbf8] sm:$0xff]
      %v907 = vld [vmem:[%s1] sm:$0xff]
      %v908 = vld [vmem:[%s1 + $0x8] sm:$0xff]
      %v909 = vld [vmem:[%s1 + $0x10] sm:$0xff]
      %v910 = vld [vmem:[%s1 + $0x18] sm:$0xff]
      %v911 = vld [vmem:[%s1 + $0x20] sm:$0xff]
      %v912 = vld [vmem:[%s1 + $0x28] sm:$0xff]
      %v913 = vld [vmem:[%s1 + $0x30] sm:$0xff]
      %v914 = vld [vmem:[%s1 + $0x38] sm:$0xff]
      %v915 = vld [vmem:[%s1 + $0x40] sm:$0xff]
      %v916 = vld [vmem:[%s1 + $0x48] sm:$0xff]
      %v917 = vld [vmem:[%s1 + $0x50] sm:$0xff]
      %v918 = vld [vmem:[%s1 + $0x58] sm:$0xff]
      %v919 = vld [vmem:[%s1 + $0x60] sm:$0xff]
      %v920 = vld [vmem:[%s1 + $0x68] sm:$0xff]
      %v921 = vld [vmem:[%s1 + $0x70] sm:$0xff]
      %v922 = vld [vmem:[%s1 + $0x78] sm:$0xff]
      %v923 = vld [vmem:[%s1 + $0x80] sm:$0xff]
      %v924 = vld [vmem:[%s1 + $0x88] sm:$0xff]
      %v925 = vld [vmem:[%s1 + $0x90] sm:$0xff]
      %v926 = vld [vmem:[%s1 + $0x98] sm:$0xff]
      %v927 = vld [vmem:[%s1 + $0xa0] sm:$0xff]
      %v928 = vld [vmem:[%s1 + $0xa8] sm:$0xff]
      %v929 = vld [vmem:[%s1 + $0xb0] sm:$0xff]
      %v930 = vld [vmem:[%s1 + $0xb8] sm:$0xff]
      %v931 = vld [vmem:[%s1 + $0xc0] sm:$0xff]
      %v932 = vld [vmem:[%s1 + $0xc8] sm:$0xff]
      %v933 = vld [vmem:[%s1 + $0xd0] sm:$0xff]
      %v934 = vld [vmem:[%s1 + $0xd8] sm:$0xff]
      %v935 = vld [vmem:[%s1 + $0xe0] sm:$0xff]
      %v936 = vld [vmem:[%s1 + $0xe8] sm:$0xff]
      %v937 = vld [vmem:[%s1 + $0xf0] sm:$0xff]
      %v938 = vld [vmem:[%s1 + $0xf8] sm:$0xff]
      %v1131 = vunpack.c.l.b16 %v331
      %v1132 = vunpack.c.h.b16 %v331
      %v1133 = vunpack.c.l.b16 %v332
      %v1134 = vunpack.c.h.b16 %v332
      %v1135 = vunpack.c.l.b16 %v333
      %v1136 = vunpack.c.h.b16 %v333
      %v1137 = vunpack.c.l.b16 %v334
      %v1138 = vunpack.c.h.b16 %v334
      %v1139 = vunpack.c.l.b16 %v335
      %v1140 = vunpack.c.h.b16 %v335
      %v1141 = vunpack.c.l.b16 %v336
      %v1142 = vunpack.c.h.b16 %v336
      %v1143 = vunpack.c.l.b16 %v337
      %v1144 = vunpack.c.h.b16 %v337
      %v1145 = vunpack.c.l.b16 %v338
      %v1146 = vunpack.c.h.b16 %v338
      %v1147 = vunpack.c.l.b16 %v339
      %v1148 = vunpack.c.h.b16 %v339
      %v1149 = vunpack.c.l.b16 %v340
      %v1150 = vunpack.c.h.b16 %v340
      %v1151 = vunpack.c.l.b16 %v341
      %v1152 = vunpack.c.h.b16 %v341
      %v1153 = vunpack.c.l.b16 %v342
      %v1154 = vunpack.c.h.b16 %v342
      %v1155 = vunpack.c.l.b16 %v343
      %v1156 = vunpack.c.h.b16 %v343
      %v1157 = vunpack.c.l.b16 %v344
      %v1158 = vunpack.c.h.b16 %v344
      %v1159 = vunpack.c.l.b16 %v345
      %v1160 = vunpack.c.h.b16 %v345
      %v1161 = vunpack.c.l.b16 %v346
      %v1162 = vunpack.c.h.b16 %v346
      %v1163 = vunpack.c.l.b16 %v347
      %v1164 = vunpack.c.h.b16 %v347
      %v1165 = vunpack.c.l.b16 %v348
      %v1166 = vunpack.c.h.b16 %v348
      %v1167 = vunpack.c.l.b16 %v349
      %v1168 = vunpack.c.h.b16 %v349
      %v1169 = vunpack.c.l.b16 %v350
      %v1170 = vunpack.c.h.b16 %v350
      %v1171 = vunpack.c.l.b16 %v351
      %v1172 = vunpack.c.h.b16 %v351
      %v1173 = vunpack.c.l.b16 %v352
      %v1174 = vunpack.c.h.b16 %v352
      %v1175 = vunpack.c.l.b16 %v353
      %v1176 = vunpack.c.h.b16 %v353
      %v1177 = vunpack.c.l.b16 %v354
      %v1178 = vunpack.c.h.b16 %v354
      %v1179 = vunpack.c.l.b16 %v355
      %v1180 = vunpack.c.h.b16 %v355
      %v1181 = vunpack.c.l.b16 %v356
      %v1182 = vunpack.c.h.b16 %v356
      %v1183 = vunpack.c.l.b16 %v357
      %v1184 = vunpack.c.h.b16 %v357
      %v1185 = vunpack.c.l.b16 %v358
      %v1186 = vunpack.c.h.b16 %v358
      %v1187 = vunpack.c.l.b16 %v359
      %v1188 = vunpack.c.h.b16 %v359
      %v1189 = vunpack.c.l.b16 %v360
      %v1190 = vunpack.c.h.b16 %v360
      %v1191 = vunpack.c.l.b16 %v361
      %v1192 = vunpack.c.h.b16 %v361
      %v1193 = vunpack.c.l.b16 %v362
      %v1194 = vunpack.c.h.b16 %v362
      %v1195 = vunpack.c.l.b16 %v363
      %v1196 = vunpack.c.h.b16 %v363
      %v1197 = vunpack.c.l.b16 %v364
      %v1198 = vunpack.c.h.b16 %v364
      %v1199 = vunpack.c.l.b16 %v365
      %v1200 = vunpack.c.h.b16 %v365
      %v1201 = vunpack.c.l.b16 %v366
      %v1202 = vunpack.c.h.b16 %v366
      %v1203 = vunpack.c.l.b16 %v367
      %v1204 = vunpack.c.h.b16 %v367
      %v1205 = vunpack.c.l.b16 %v368
      %v1206 = vunpack.c.h.b16 %v368
      %v1207 = vunpack.c.l.b16 %v369
      %v1208 = vunpack.c.h.b16 %v369
      %v1209 = vunpack.c.l.b16 %v370
      %v1210 = vunpack.c.h.b16 %v370
      %v1211 = vunpack.c.l.b16 %v371
      %v1212 = vunpack.c.h.b16 %v371
      %v1213 = vunpack.c.l.b16 %v372
      %v1214 = vunpack.c.h.b16 %v372
      %v1215 = vunpack.c.l.b16 %v373
      %v1216 = vunpack.c.h.b16 %v373
      %v1217 = vunpack.c.l.b16 %v374
      %v1218 = vunpack.c.h.b16 %v374
      %v1219 = vunpack.c.l.b16 %v375
      %v1220 = vunpack.c.h.b16 %v375
      %v1221 = vunpack.c.l.b16 %v376
      %v1222 = vunpack.c.h.b16 %v376
      %v1223 = vunpack.c.l.b16 %v377
      %v1224 = vunpack.c.h.b16 %v377
      %v1225 = vunpack.c.l.b16 %v378
      %v1226 = vunpack.c.h.b16 %v378
      %v1227 = vunpack.c.l.b16 %v379
      %v1228 = vunpack.c.h.b16 %v379
      %v1229 = vunpack.c.l.b16 %v380
      %v1230 = vunpack.c.h.b16 %v380
      %v1231 = vunpack.c.l.b16 %v381
      %v1232 = vunpack.c.h.b16 %v381
      %v1233 = vunpack.c.l.b16 %v382
      %v1234 = vunpack.c.h.b16 %v382
      %v1235 = vunpack.c.l.b16 %v383
      %v1236 = vunpack.c.h.b16 %v383
      %v1237 = vunpack.c.l.b16 %v384
      %v1238 = vunpack.c.h.b16 %v384
      %v1239 = vunpack.c.l.b16 %v385
      %v1240 = vunpack.c.h.b16 %v385
      %v1241 = vunpack.c.l.b16 %v386
      %v1242 = vunpack.c.h.b16 %v386
      %v1243 = vunpack.c.l.b16 %v387
      %v1244 = vunpack.c.h.b16 %v387
      %v1245 = vunpack.c.l.b16 %v388
      %v1246 = vunpack.c.h.b16 %v388
      %v1247 = vunpack.c.l.b16 %v389
      %v1248 = vunpack.c.h.b16 %v389
      %v1249 = vunpack.c.l.b16 %v390
      %v1250 = vunpack.c.h.b16 %v390
      %v1251 = vunpack.c.l.b16 %v391
      %v1252 = vunpack.c.h.b16 %v391
      %v1253 = vunpack.c.l.b16 %v392
      %v1254 = vunpack.c.h.b16 %v392
      %v1255 = vunpack.c.l.b16 %v393
      %v1256 = vunpack.c.h.b16 %v393
      %v1257 = vunpack.c.l.b16 %v394
      %v1258 = vunpack.c.h.b16 %v394
      %v1259 = vunpack.c.l.b16 %v395
      %v1260 = vunpack.c.h.b16 %v395
      %v1261 = vunpack.c.l.b16 %v396
      %v1262 = vunpack.c.h.b16 %v396
      %v1263 = vunpack.c.l.b16 %v397
      %v1264 = vunpack.c.h.b16 %v397
      %v1265 = vunpack.c.l.b16 %v398
      %v1266 = vunpack.c.h.b16 %v398
      %v1267 = vunpack.c.l.b16 %v399
      %v1268 = vunpack.c.h.b16 %v399
      %v1269 = vunpack.c.l.b16 %v400
      %v1270 = vunpack.c.h.b16 %v400
      %v1271 = vunpack.c.l.b16 %v401
      %v1272 = vunpack.c.h.b16 %v401
      %v1273 = vunpack.c.l.b16 %v402
      %v1274 = vunpack.c.h.b16 %v402
      %v1275 = vunpack.c.l.b16 %v403
      %v1276 = vunpack.c.h.b16 %v403
      %v1277 = vunpack.c.l.b16 %v404
      %v1278 = vunpack.c.h.b16 %v404
      %v1279 = vunpack.c.l.b16 %v405
      %v1280 = vunpack.c.h.b16 %v405
      %v1281 = vunpack.c.l.b16 %v406
      %v1282 = vunpack.c.h.b16 %v406
      %v1283 = vunpack.c.l.b16 %v407
      %v1284 = vunpack.c.h.b16 %v407
      %v1285 = vunpack.c.l.b16 %v408
      %v1286 = vunpack.c.h.b16 %v408
      %v1287 = vunpack.c.l.b16 %v409
      %v1288 = vunpack.c.h.b16 %v409
      %v1289 = vunpack.c.l.b16 %v410
      %v1290 = vunpack.c.h.b16 %v410
      %v1291 = vunpack.c.l.b16 %v411
      %v1292 = vunpack.c.h.b16 %v411
      %v1293 = vunpack.c.l.b16 %v412
      %v1294 = vunpack.c.h.b16 %v412
      %v1295 = vunpack.c.l.b16 %v413
      %v1296 = vunpack.c.h.b16 %v413
      %v1297 = vunpack.c.l.b16 %v414
      %v1298 = vunpack.c.h.b16 %v414
      %v1299 = vunpack.c.l.b16 %v415
      %v1300 = vunpack.c.h.b16 %v415
      %v1301 = vunpack.c.l.b16 %v416
      %v1302 = vunpack.c.h.b16 %v416
      %v1303 = vunpack.c.l.b16 %v417
      %v1304 = vunpack.c.h.b16 %v417
      %v1305 = vunpack.c.l.b16 %v418
      %v1306 = vunpack.c.h.b16 %v418
      %v1307 = vunpack.c.l.b16 %v419
      %v1308 = vunpack.c.h.b16 %v419
      %v1309 = vunpack.c.l.b16 %v420
      %v1310 = vunpack.c.h.b16 %v420
      %v1311 = vunpack.c.l.b16 %v421
      %v1312 = vunpack.c.h.b16 %v421
      %v1313 = vunpack.c.l.b16 %v422
      %v1314 = vunpack.c.h.b16 %v422
      %v1315 = vunpack.c.l.b16 %v423
      %v1316 = vunpack.c.h.b16 %v423
      %v1317 = vunpack.c.l.b16 %v424
      %v1318 = vunpack.c.h.b16 %v424
      %v1319 = vunpack.c.l.b16 %v425
      %v1320 = vunpack.c.h.b16 %v425
      %v1321 = vunpack.c.l.b16 %v426
      %v1322 = vunpack.c.h.b16 %v426
      %v1323 = vunpack.c.l.b16 %v427
      %v1324 = vunpack.c.h.b16 %v427
      %v1325 = vunpack.c.l.b16 %v428
      %v1326 = vunpack.c.h.b16 %v428
      %v1327 = vunpack.c.l.b16 %v429
      %v1328 = vunpack.c.h.b16 %v429
      %v1329 = vunpack.c.l.b16 %v430
      %v1330 = vunpack.c.h.b16 %v430
      %v1331 = vunpack.c.l.b16 %v431
      %v1332 = vunpack.c.h.b16 %v431
      %v1333 = vunpack.c.l.b16 %v432
      %v1334 = vunpack.c.h.b16 %v432
      %v1335 = vunpack.c.l.b16 %v433
      %v1336 = vunpack.c.h.b16 %v433
      %v1337 = vunpack.c.l.b16 %v434
      %v1338 = vunpack.c.h.b16 %v434
      %v1339 = vunpack.c.l.b16 %v435
      %v1340 = vunpack.c.h.b16 %v435
      %v1341 = vunpack.c.l.b16 %v436
      %v1342 = vunpack.c.h.b16 %v436
      %v1343 = vunpack.c.l.b16 %v437
      %v1344 = vunpack.c.h.b16 %v437
      %v1345 = vunpack.c.l.b16 %v438
      %v1346 = vunpack.c.h.b16 %v438
      %v1347 = vunpack.c.l.b16 %v439
      %v1348 = vunpack.c.h.b16 %v439
      %v1349 = vunpack.c.l.b16 %v440
      %v1350 = vunpack.c.h.b16 %v440
      %v1351 = vunpack.c.l.b16 %v441
      %v1352 = vunpack.c.h.b16 %v441
      %v1353 = vunpack.c.l.b16 %v442
      %v1354 = vunpack.c.h.b16 %v442
      %v1355 = vunpack.c.l.b16 %v443
      %v1356 = vunpack.c.h.b16 %v443
      %v1357 = vunpack.c.l.b16 %v444
      %v1358 = vunpack.c.h.b16 %v444
      %v1359 = vunpack.c.l.b16 %v445
      %v1360 = vunpack.c.h.b16 %v445
      %v1361 = vunpack.c.l.b16 %v446
      %v1362 = vunpack.c.h.b16 %v446
      %v1363 = vunpack.c.l.b16 %v447
      %v1364 = vunpack.c.h.b16 %v447
      %v1365 = vunpack.c.l.b16 %v448
      %v1366 = vunpack.c.h.b16 %v448
      %v1367 = vunpack.c.l.b16 %v449
      %v1368 = vunpack.c.h.b16 %v449
      %v1369 = vunpack.c.l.b16 %v450
      %v1370 = vunpack.c.h.b16 %v450
      %v1371 = vunpack.c.l.b16 %v451
      %v1372 = vunpack.c.h.b16 %v451
      %v1373 = vunpack.c.l.b16 %v452
      %v1374 = vunpack.c.h.b16 %v452
      %v1375 = vunpack.c.l.b16 %v453
      %v1376 = vunpack.c.h.b16 %v453
      %v1377 = vunpack.c.l.b16 %v454
      %v1378 = vunpack.c.h.b16 %v454
      %v1379 = vunpack.c.l.b16 %v455
      %v1380 = vunpack.c.h.b16 %v455
      %v1381 = vunpack.c.l.b16 %v456
      %v1382 = vunpack.c.h.b16 %v456
      %v1383 = vunpack.c.l.b16 %v457
      %v1384 = vunpack.c.h.b16 %v457
      %v1385 = vunpack.c.l.b16 %v458
      %v1386 = vunpack.c.h.b16 %v458
      %v1387 = vunpack.c.l.b16 %v459
      %v1388 = vunpack.c.h.b16 %v459
      %v1389 = vunpack.c.l.b16 %v460
      %v1390 = vunpack.c.h.b16 %v460
      %v1391 = vunpack.c.l.b16 %v461
      %v1392 = vunpack.c.h.b16 %v461
      %v1393 = vunpack.c.l.b16 %v462
      %v1394 = vunpack.c.h.b16 %v462
      %v1395 = vunpack.c.l.b16 %v463
      %v1396 = vunpack.c.h.b16 %v463
      %v1397 = vunpack.c.l.b16 %v464
      %v1398 = vunpack.c.h.b16 %v464
      %v1399 = vunpack.c.l.b16 %v465
      %v1400 = vunpack.c.h.b16 %v465
      %v1401 = vunpack.c.l.b16 %v466
      %v1402 = vunpack.c.h.b16 %v466
      %v1403 = vunpack.c.l.b16 %v467
      %v1404 = vunpack.c.h.b16 %v467
      %v1405 = vunpack.c.l.b16 %v468
      %v1406 = vunpack.c.h.b16 %v468
      %v1407 = vunpack.c.l.b16 %v469
      %v1408 = vunpack.c.h.b16 %v469
      %v1409 = vunpack.c.l.b16 %v470
      %v1410 = vunpack.c.h.b16 %v470
      %v1411 = vunpack.c.l.b16 %v471
      %v1412 = vunpack.c.h.b16 %v471
      %v1413 = vunpack.c.l.b16 %v472
      %v1414 = vunpack.c.h.b16 %v472
      %v1415 = vunpack.c.l.b16 %v473
      %v1416 = vunpack.c.h.b16 %v473
      %v1417 = vunpack.c.l.b16 %v474
      %v1418 = vunpack.c.h.b16 %v474
      %v1419 = vunpack.c.l.b16 %v475
      %v1420 = vunpack.c.h.b16 %v475
      %v1421 = vunpack.c.l.b16 %v476
      %v1422 = vunpack.c.h.b16 %v476
      %v1423 = vunpack.c.l.b16 %v477
      %v1424 = vunpack.c.h.b16 %v477
      %v1425 = vunpack.c.l.b16 %v478
      %v1426 = vunpack.c.h.b16 %v478
      %v1427 = vunpack.c.l.b16 %v479
      %v1428 = vunpack.c.h.b16 %v479
      %v1429 = vunpack.c.l.b16 %v480
      %v1430 = vunpack.c.h.b16 %v480
      %v1431 = vunpack.c.l.b16 %v481
      %v1432 = vunpack.c.h.b16 %v481
      %v1433 = vunpack.c.l.b16 %v482
      %v1434 = vunpack.c.h.b16 %v482
      %v1435 = vunpack.c.l.b16 %v483
      %v1436 = vunpack.c.h.b16 %v483
      %v1437 = vunpack.c.l.b16 %v484
      %v1438 = vunpack.c.h.b16 %v484
      %v1439 = vunpack.c.l.b16 %v485
      %v1440 = vunpack.c.h.b16 %v485
      %v1441 = vunpack.c.l.b16 %v486
      %v1442 = vunpack.c.h.b16 %v486
      %v1443 = vunpack.c.l.b16 %v487
      %v1444 = vunpack.c.h.b16 %v487
      %v1445 = vunpack.c.l.b16 %v488
      %v1446 = vunpack.c.h.b16 %v488
      %v1447 = vunpack.c.l.b16 %v489
      %v1448 = vunpack.c.h.b16 %v489
      %v1449 = vunpack.c.l.b16 %v490
      %v1450 = vunpack.c.h.b16 %v490
      %v1451 = vunpack.c.l.b16 %v491
      %v1452 = vunpack.c.h.b16 %v491
      %v1453 = vunpack.c.l.b16 %v492
      %v1454 = vunpack.c.h.b16 %v492
      %v1455 = vunpack.c.l.b16 %v493
      %v1456 = vunpack.c.h.b16 %v493
      %v1457 = vunpack.c.l.b16 %v494
      %v1458 = vunpack.c.h.b16 %v494
      %v1459 = vunpack.c.l.b16 %v495
      %v1460 = vunpack.c.h.b16 %v495
      %v1461 = vunpack.c.l.b16 %v496
      %v1462 = vunpack.c.h.b16 %v496
      %v1463 = vunpack.c.l.b16 %v497
      %v1464 = vunpack.c.h.b16 %v497
      %v1465 = vunpack.c.l.b16 %v498
      %v1466 = vunpack.c.h.b16 %v498
      %v1467 = vunpack.c.l.b16 %v499
      %v1468 = vunpack.c.h.b16 %v499
      %v1469 = vunpack.c.l.b16 %v500
      %v1470 = vunpack.c.h.b16 %v500
      %v1471 = vunpack.c.l.b16 %v501
      %v1472 = vunpack.c.h.b16 %v501
      %v1473 = vunpack.c.l.b16 %v502
      %v1474 = vunpack.c.h.b16 %v502
      %v1475 = vunpack.c.l.b16 %v503
      %v1476 = vunpack.c.h.b16 %v503
      %v1477 = vunpack.c.l.b16 %v504
      %v1478 = vunpack.c.h.b16 %v504
      %v1479 = vunpack.c.l.b16 %v505
      %v1480 = vunpack.c.h.b16 %v505
      %v1481 = vunpack.c.l.b16 %v506
      %v1482 = vunpack.c.h.b16 %v506
      %v1483 = vunpack.c.l.b16 %v507
      %v1484 = vunpack.c.h.b16 %v507
      %v1485 = vunpack.c.l.b16 %v508
      %v1486 = vunpack.c.h.b16 %v508
      %v1487 = vunpack.c.l.b16 %v509
      %v1488 = vunpack.c.h.b16 %v509
      %v1489 = vunpack.c.l.b16 %v510
      %v1490 = vunpack.c.h.b16 %v510
      %v1491 = vunpack.c.l.b16 %v511
      %v1492 = vunpack.c.h.b16 %v511
      %v1493 = vunpack.c.l.b16 %v512
      %v1494 = vunpack.c.h.b16 %v512
      %v1495 = vunpack.c.l.b16 %v513
      %v1496 = vunpack.c.h.b16 %v513
      %v1497 = vunpack.c.l.b16 %v514
      %v1498 = vunpack.c.h.b16 %v514
      %v1499 = vunpack.c.l.b16 %v515
      %v1500 = vunpack.c.h.b16 %v515
      %v1501 = vunpack.c.l.b16 %v516
      %v1502 = vunpack.c.h.b16 %v516
      %v1503 = vunpack.c.l.b16 %v517
      %v1504 = vunpack.c.h.b16 %v517
      %v1505 = vunpack.c.l.b16 %v518
      %v1506 = vunpack.c.h.b16 %v518
      %v1507 = vunpack.c.l.b16 %v519
      %v1508 = vunpack.c.h.b16 %v519
      %v1509 = vunpack.c.l.b16 %v520
      %v1510 = vunpack.c.h.b16 %v520
      %v1511 = vunpack.c.l.b16 %v521
      %v1512 = vunpack.c.h.b16 %v521
      %v1513 = vunpack.c.l.b16 %v522
      %v1514 = vunpack.c.h.b16 %v522
      %v1515 = vpack.c.b16 %v1155, %v1131
      %v1516 = vpack.c.b16 %v1156, %v1132
      %v1517 = vpack.c.b16 %v1157, %v1133
      %v1518 = vpack.c.b16 %v1158, %v1134
      %v1519 = vpack.c.b16 %v1159, %v1135
      %v1520 = vpack.c.b16 %v1160, %v1136
      %v1521 = vpack.c.b16 %v1161, %v1137
      %v1522 = vpack.c.b16 %v1162, %v1138
      %v1523 = vpack.c.b16 %v1163, %v1139
      %v1524 = vpack.c.b16 %v1164, %v1140
      %v1525 = vpack.c.b16 %v1165, %v1141
      %v1526 = vpack.c.b16 %v1166, %v1142
      %v1527 = vpack.c.b16 %v1167, %v1143
      %v1528 = vpack.c.b16 %v1168, %v1144
      %v1529 = vpack.c.b16 %v1169, %v1145
      %v1530 = vpack.c.b16 %v1170, %v1146
      %v1531 = vpack.c.b16 %v1171, %v1147
      %v1532 = vpack.c.b16 %v1172, %v1148
      %v1533 = vpack.c.b16 %v1173, %v1149
      %v1534 = vpack.c.b16 %v1174, %v1150
      %v1535 = vpack.c.b16 %v1175, %v1151
      %v1536 = vpack.c.b16 %v1176, %v1152
      %v1537 = vpack.c.b16 %v1177, %v1153
      %v1538 = vpack.c.b16 %v1178, %v1154
      %v1539 = vpack.c.b16 %v1203, %v1179
      %v1540 = vpack.c.b16 %v1204, %v1180
      %v1541 = vpack.c.b16 %v1205, %v1181
      %v1542 = vpack.c.b16 %v1206, %v1182
      %v1543 = vpack.c.b16 %v1207, %v1183
      %v1544 = vpack.c.b16 %v1208, %v1184
      %v1545 = vpack.c.b16 %v1209, %v1185
      %v1546 = vpack.c.b16 %v1210, %v1186
      %v1547 = vpack.c.b16 %v1211, %v1187
      %v1548 = vpack.c.b16 %v1212, %v1188
      %v1549 = vpack.c.b16 %v1213, %v1189
      %v1550 = vpack.c.b16 %v1214, %v1190
      %v1551 = vpack.c.b16 %v1215, %v1191
      %v1552 = vpack.c.b16 %v1216, %v1192
      %v1553 = vpack.c.b16 %v1217, %v1193
      %v1554 = vpack.c.b16 %v1218, %v1194
      %v1555 = vpack.c.b16 %v1219, %v1195
      %v1556 = vpack.c.b16 %v1220, %v1196
      %v1557 = vpack.c.b16 %v1221, %v1197
      %v1558 = vpack.c.b16 %v1222, %v1198
      %v1559 = vpack.c.b16 %v1223, %v1199
      %v1560 = vpack.c.b16 %v1224, %v1200
      %v1561 = vpack.c.b16 %v1225, %v1201
      %v1562 = vpack.c.b16 %v1226, %v1202
      %v1563 = vpack.c.b16 %v1251, %v1227
      %v1564 = vpack.c.b16 %v1252, %v1228
      %v1565 = vpack.c.b16 %v1253, %v1229
      %v1566 = vpack.c.b16 %v1254, %v1230
      %v1567 = vpack.c.b16 %v1255, %v1231
      %v1568 = vpack.c.b16 %v1256, %v1232
      %v1569 = vpack.c.b16 %v1257, %v1233
      %v1570 = vpack.c.b16 %v1258, %v1234
      %v1571 = vpack.c.b16 %v1259, %v1235
      %v1572 = vpack.c.b16 %v1260, %v1236
      %v1573 = vpack.c.b16 %v1261, %v1237
      %v1574 = vpack.c.b16 %v1262, %v1238
      %v1575 = vpack.c.b16 %v1263, %v1239
      %v1576 = vpack.c.b16 %v1264, %v1240
      %v1577 = vpack.c.b16 %v1265, %v1241
      %v1578 = vpack.c.b16 %v1266, %v1242
      %v1579 = vpack.c.b16 %v1267, %v1243
      %v1580 = vpack.c.b16 %v1268, %v1244
      %v1581 = vpack.c.b16 %v1269, %v1245
      %v1582 = vpack.c.b16 %v1270, %v1246
      %v1583 = vpack.c.b16 %v1271, %v1247
      %v1584 = vpack.c.b16 %v1272, %v1248
      %v1585 = vpack.c.b16 %v1273, %v1249
      %v1586 = vpack.c.b16 %v1274, %v1250
      %v1587 = vpack.c.b16 %v1299, %v1275
      %v1588 = vpack.c.b16 %v1300, %v1276
      %v1589 = vpack.c.b16 %v1301, %v1277
      %v1590 = vpack.c.b16 %v1302, %v1278
      %v1591 = vpack.c.b16 %v1303, %v1279
      %v1592 = vpack.c.b16 %v1304, %v1280
      %v1593 = vpack.c.b16 %v1305, %v1281
      %v1594 = vpack.c.b16 %v1306, %v1282
      %v1595 = vpack.c.b16 %v1307, %v1283
      %v1596 = vpack.c.b16 %v1308, %v1284
      %v1597 = vpack.c.b16 %v1309, %v1285
      %v1598 = vpack.c.b16 %v1310, %v1286
      %v1599 = vpack.c.b16 %v1311, %v1287
      %v1600 = vpack.c.b16 %v1312, %v1288
      %v1601 = vpack.c.b16 %v1313, %v1289
      %v1602 = vpack.c.b16 %v1314, %v1290
      %v1603 = vpack.c.b16 %v1315, %v1291
      %v1604 = vpack.c.b16 %v1316, %v1292
      %v1605 = vpack.c.b16 %v1317, %v1293
      %v1606 = vpack.c.b16 %v1318, %v1294
      %v1607 = vpack.c.b16 %v1319, %v1295
      %v1608 = vpack.c.b16 %v1320, %v1296
      %v1609 = vpack.c.b16 %v1321, %v1297
      %v1610 = vpack.c.b16 %v1322, %v1298
      %v1611 = vpack.c.b16 %v1347, %v1323
      %v1612 = vpack.c.b16 %v1348, %v1324
      %v1613 = vpack.c.b16 %v1349, %v1325
      %v1614 = vpack.c.b16 %v1350, %v1326
      %v1615 = vpack.c.b16 %v1351, %v1327
      %v1616 = vpack.c.b16 %v1352, %v1328
      %v1617 = vpack.c.b16 %v1353, %v1329
      %v1618 = vpack.c.b16 %v1354, %v1330
      %v1619 = vpack.c.b16 %v1355, %v1331
      %v1620 = vpack.c.b16 %v1356, %v1332
      %v1621 = vpack.c.b16 %v1357, %v1333
      %v1622 = vpack.c.b16 %v1358, %v1334
      %v1623 = vpack.c.b16 %v1359, %v1335
      %v1624 = vpack.c.b16 %v1360, %v1336
      %v1625 = vpack.c.b16 %v1361, %v1337
      %v1626 = vpack.c.b16 %v1362, %v1338
      %v1627 = vpack.c.b16 %v1363, %v1339
      %v1628 = vpack.c.b16 %v1364, %v1340
      %v1629 = vpack.c.b16 %v1365, %v1341
      %v1630 = vpack.c.b16 %v1366, %v1342
      %v1631 = vpack.c.b16 %v1367, %v1343
      %v1632 = vpack.c.b16 %v1368, %v1344
      %v1633 = vpack.c.b16 %v1369, %v1345
      %v1634 = vpack.c.b16 %v1370, %v1346
      %v1635 = vpack.c.b16 %v1395, %v1371
      %v1636 = vpack.c.b16 %v1396, %v1372
      %v1637 = vpack.c.b16 %v1397, %v1373
      %v1638 = vpack.c.b16 %v1398, %v1374
      %v1639 = vpack.c.b16 %v1399, %v1375
      %v1640 = vpack.c.b16 %v1400, %v1376
      %v1641 = vpack.c.b16 %v1401, %v1377
      %v1642 = vpack.c.b16 %v1402, %v1378
      %v1643 = vpack.c.b16 %v1403, %v1379
      %v1644 = vpack.c.b16 %v1404, %v1380
      %v1645 = vpack.c.b16 %v1405, %v1381
      %v1646 = vpack.c.b16 %v1406, %v1382
      %v1647 = vpack.c.b16 %v1407, %v1383
      %v1648 = vpack.c.b16 %v1408, %v1384
      %v1649 = vpack.c.b16 %v1409, %v1385
      %v1650 = vpack.c.b16 %v1410, %v1386
      %v1651 = vpack.c.b16 %v1411, %v1387
      %v1652 = vpack.c.b16 %v1412, %v1388
      %v1653 = vpack.c.b16 %v1413, %v1389
      %v1654 = vpack.c.b16 %v1414, %v1390
      %v1655 = vpack.c.b16 %v1415, %v1391
      %v1656 = vpack.c.b16 %v1416, %v1392
      %v1657 = vpack.c.b16 %v1417, %v1393
      %v1658 = vpack.c.b16 %v1418, %v1394
      %v1659 = vpack.c.b16 %v1443, %v1419
      %v1660 = vpack.c.b16 %v1444, %v1420
      %v1661 = vpack.c.b16 %v1445, %v1421
      %v1662 = vpack.c.b16 %v1446, %v1422
      %v1663 = vpack.c.b16 %v1447, %v1423
      %v1664 = vpack.c.b16 %v1448, %v1424
      %v1665 = vpack.c.b16 %v1449, %v1425
      %v1666 = vpack.c.b16 %v1450, %v1426
      %v1667 = vpack.c.b16 %v1451, %v1427
      %v1668 = vpack.c.b16 %v1452, %v1428
      %v1669 = vpack.c.b16 %v1453, %v1429
      %v1670 = vpack.c.b16 %v1454, %v1430
      %v1671 = vpack.c.b16 %v1455, %v1431
      %v1672 = vpack.c.b16 %v1456, %v1432
      %v1673 = vpack.c.b16 %v1457, %v1433
      %v1674 = vpack.c.b16 %v1458, %v1434
      %v1675 = vpack.c.b16 %v1459, %v1435
      %v1676 = vpack.c.b16 %v1460, %v1436
      %v1677 = vpack.c.b16 %v1461, %v1437
      %v1678 = vpack.c.b16 %v1462, %v1438
      %v1679 = vpack.c.b16 %v1463, %v1439
      %v1680 = vpack.c.b16 %v1464, %v1440
      %v1681 = vpack.c.b16 %v1465, %v1441
      %v1682 = vpack.c.b16 %v1466, %v1442
      %v1683 = vpack.c.b16 %v1491, %v1467
      %v1684 = vpack.c.b16 %v1492, %v1468
      %v1685 = vpack.c.b16 %v1493, %v1469
      %v1686 = vpack.c.b16 %v1494, %v1470
      %v1687 = vpack.c.b16 %v1495, %v1471
      %v1688 = vpack.c.b16 %v1496, %v1472
      %v1689 = vpack.c.b16 %v1497, %v1473
      %v1690 = vpack.c.b16 %v1498, %v1474
      %v1691 = vpack.c.b16 %v1499, %v1475
      %v1692 = vpack.c.b16 %v1500, %v1476
      %v1693 = vpack.c.b16 %v1501, %v1477
      %v1694 = vpack.c.b16 %v1502, %v1478
      %v1695 = vpack.c.b16 %v1503, %v1479
      %v1696 = vpack.c.b16 %v1504, %v1480
      %v1697 = vpack.c.b16 %v1505, %v1481
      %v1698 = vpack.c.b16 %v1506, %v1482
      %v1699 = vpack.c.b16 %v1507, %v1483
      %v1700 = vpack.c.b16 %v1508, %v1484
      %v1701 = vpack.c.b16 %v1509, %v1485
      %v1702 = vpack.c.b16 %v1510, %v1486
      %v1703 = vpack.c.b16 %v1511, %v1487
      %v1704 = vpack.c.b16 %v1512, %v1488
      %v1705 = vpack.c.b16 %v1513, %v1489
      %v1706 = vpack.c.b16 %v1514, %v1490
      %v2283 = vunpack.c.l.b16 %v523
      %v2284 = vunpack.c.h.b16 %v523
      %v2285 = vunpack.c.l.b16 %v524
      %v2286 = vunpack.c.h.b16 %v524
      %v2287 = vunpack.c.l.b16 %v525
      %v2288 = vunpack.c.h.b16 %v525
      %v2289 = vunpack.c.l.b16 %v526
      %v2290 = vunpack.c.h.b16 %v526
      %v2291 = vunpack.c.l.b16 %v527
      %v2292 = vunpack.c.h.b16 %v527
      %v2293 = vunpack.c.l.b16 %v528
      %v2294 = vunpack.c.h.b16 %v528
      %v2295 = vunpack.c.l.b16 %v529
      %v2296 = vunpack.c.h.b16 %v529
      %v2297 = vunpack.c.l.b16 %v530
      %v2298 = vunpack.c.h.b16 %v530
      %v2299 = vunpack.c.l.b16 %v531
      %v2300 = vunpack.c.h.b16 %v531
      %v2301 = vunpack.c.l.b16 %v532
      %v2302 = vunpack.c.h.b16 %v532
      %v2303 = vunpack.c.l.b16 %v533
      %v2304 = vunpack.c.h.b16 %v533
      %v2305 = vunpack.c.l.b16 %v534
      %v2306 = vunpack.c.h.b16 %v534
      %v2307 = vunpack.c.l.b16 %v535
      %v2308 = vunpack.c.h.b16 %v535
      %v2309 = vunpack.c.l.b16 %v536
      %v2310 = vunpack.c.h.b16 %v536
      %v2311 = vunpack.c.l.b16 %v537
      %v2312 = vunpack.c.h.b16 %v537
      %v2313 = vunpack.c.l.b16 %v538
      %v2314 = vunpack.c.h.b16 %v538
      %v2315 = vunpack.c.l.b16 %v539
      %v2316 = vunpack.c.h.b16 %v539
      %v2317 = vunpack.c.l.b16 %v540
      %v2318 = vunpack.c.h.b16 %v540
      %v2319 = vunpack.c.l.b16 %v541
      %v2320 = vunpack.c.h.b16 %v541
      %v2321 = vunpack.c.l.b16 %v542
      %v2322 = vunpack.c.h.b16 %v542
      %v2323 = vunpack.c.l.b16 %v543
      %v2324 = vunpack.c.h.b16 %v543
      %v2325 = vunpack.c.l.b16 %v544
      %v2326 = vunpack.c.h.b16 %v544
      %v2327 = vunpack.c.l.b16 %v545
      %v2328 = vunpack.c.h.b16 %v545
      %v2329 = vunpack.c.l.b16 %v546
      %v2330 = vunpack.c.h.b16 %v546
      %v2331 = vunpack.c.l.b16 %v547
      %v2332 = vunpack.c.h.b16 %v547
      %v2333 = vunpack.c.l.b16 %v548
      %v2334 = vunpack.c.h.b16 %v548
      %v2335 = vunpack.c.l.b16 %v549
      %v2336 = vunpack.c.h.b16 %v549
      %v2337 = vunpack.c.l.b16 %v550
      %v2338 = vunpack.c.h.b16 %v550
      %v2339 = vunpack.c.l.b16 %v551
      %v2340 = vunpack.c.h.b16 %v551
      %v2341 = vunpack.c.l.b16 %v552
      %v2342 = vunpack.c.h.b16 %v552
      %v2343 = vunpack.c.l.b16 %v553
      %v2344 = vunpack.c.h.b16 %v553
      %v2345 = vunpack.c.l.b16 %v554
      %v2346 = vunpack.c.h.b16 %v554
      %v2347 = vunpack.c.l.b16 %v555
      %v2348 = vunpack.c.h.b16 %v555
      %v2349 = vunpack.c.l.b16 %v556
      %v2350 = vunpack.c.h.b16 %v556
      %v2351 = vunpack.c.l.b16 %v557
      %v2352 = vunpack.c.h.b16 %v557
      %v2353 = vunpack.c.l.b16 %v558
      %v2354 = vunpack.c.h.b16 %v558
      %v2355 = vunpack.c.l.b16 %v559
      %v2356 = vunpack.c.h.b16 %v559
      %v2357 = vunpack.c.l.b16 %v560
      %v2358 = vunpack.c.h.b16 %v560
      %v2359 = vunpack.c.l.b16 %v561
      %v2360 = vunpack.c.h.b16 %v561
      %v2361 = vunpack.c.l.b16 %v562
      %v2362 = vunpack.c.h.b16 %v562
      %v2363 = vunpack.c.l.b16 %v563
      %v2364 = vunpack.c.h.b16 %v563
      %v2365 = vunpack.c.l.b16 %v564
      %v2366 = vunpack.c.h.b16 %v564
      %v2367 = vunpack.c.l.b16 %v565
      %v2368 = vunpack.c.h.b16 %v565
      %v2369 = vunpack.c.l.b16 %v566
      %v2370 = vunpack.c.h.b16 %v566
      %v2371 = vunpack.c.l.b16 %v567
      %v2372 = vunpack.c.h.b16 %v567
      %v2373 = vunpack.c.l.b16 %v568
      %v2374 = vunpack.c.h.b16 %v568
      %v2375 = vunpack.c.l.b16 %v569
      %v2376 = vunpack.c.h.b16 %v569
      %v2377 = vunpack.c.l.b16 %v570
      %v2378 = vunpack.c.h.b16 %v570
      %v2379 = vunpack.c.l.b16 %v571
      %v2380 = vunpack.c.h.b16 %v571
      %v2381 = vunpack.c.l.b16 %v572
      %v2382 = vunpack.c.h.b16 %v572
      %v2383 = vunpack.c.l.b16 %v573
      %v2384 = vunpack.c.h.b16 %v573
      %v2385 = vunpack.c.l.b16 %v574
      %v2386 = vunpack.c.h.b16 %v574
      %v2387 = vunpack.c.l.b16 %v575
      %v2388 = vunpack.c.h.b16 %v575
      %v2389 = vunpack.c.l.b16 %v576
      %v2390 = vunpack.c.h.b16 %v576
      %v2391 = vunpack.c.l.b16 %v577
      %v2392 = vunpack.c.h.b16 %v577
      %v2393 = vunpack.c.l.b16 %v578
      %v2394 = vunpack.c.h.b16 %v578
      %v2395 = vunpack.c.l.b16 %v579
      %v2396 = vunpack.c.h.b16 %v579
      %v2397 = vunpack.c.l.b16 %v580
      %v2398 = vunpack.c.h.b16 %v580
      %v2399 = vunpack.c.l.b16 %v581
      %v2400 = vunpack.c.h.b16 %v581
      %v2401 = vunpack.c.l.b16 %v582
      %v2402 = vunpack.c.h.b16 %v582
      %v2403 = vunpack.c.l.b16 %v583
      %v2404 = vunpack.c.h.b16 %v583
      %v2405 = vunpack.c.l.b16 %v584
      %v2406 = vunpack.c.h.b16 %v584
      %v2407 = vunpack.c.l.b16 %v585
      %v2408 = vunpack.c.h.b16 %v585
      %v2409 = vunpack.c.l.b16 %v586
      %v2410 = vunpack.c.h.b16 %v586
      %v2411 = vunpack.c.l.b16 %v587
      %v2412 = vunpack.c.h.b16 %v587
      %v2413 = vunpack.c.l.b16 %v588
      %v2414 = vunpack.c.h.b16 %v588
      %v2415 = vunpack.c.l.b16 %v589
      %v2416 = vunpack.c.h.b16 %v589
      %v2417 = vunpack.c.l.b16 %v590
      %v2418 = vunpack.c.h.b16 %v590
      %v2419 = vunpack.c.l.b16 %v591
      %v2420 = vunpack.c.h.b16 %v591
      %v2421 = vunpack.c.l.b16 %v592
      %v2422 = vunpack.c.h.b16 %v592
      %v2423 = vunpack.c.l.b16 %v593
      %v2424 = vunpack.c.h.b16 %v593
      %v2425 = vunpack.c.l.b16 %v594
      %v2426 = vunpack.c.h.b16 %v594
      %v2427 = vunpack.c.l.b16 %v595
      %v2428 = vunpack.c.h.b16 %v595
      %v2429 = vunpack.c.l.b16 %v596
      %v2430 = vunpack.c.h.b16 %v596
      %v2431 = vunpack.c.l.b16 %v597
      %v2432 = vunpack.c.h.b16 %v597
      %v2433 = vunpack.c.l.b16 %v598
      %v2434 = vunpack.c.h.b16 %v598
      %v2435 = vunpack.c.l.b16 %v599
      %v2436 = vunpack.c.h.b16 %v599
      %v2437 = vunpack.c.l.b16 %v600
      %v2438 = vunpack.c.h.b16 %v600
      %v2439 = vunpack.c.l.b16 %v601
      %v2440 = vunpack.c.h.b16 %v601
      %v2441 = vunpack.c.l.b16 %v602
      %v2442 = vunpack.c.h.b16 %v602
      %v2443 = vunpack.c.l.b16 %v603
      %v2444 = vunpack.c.h.b16 %v603
      %v2445 = vunpack.c.l.b16 %v604
      %v2446 = vunpack.c.h.b16 %v604
      %v2447 = vunpack.c.l.b16 %v605
      %v2448 = vunpack.c.h.b16 %v605
      %v2449 = vunpack.c.l.b16 %v606
      %v2450 = vunpack.c.h.b16 %v606
      %v2451 = vunpack.c.l.b16 %v607
      %v2452 = vunpack.c.h.b16 %v607
      %v2453 = vunpack.c.l.b16 %v608
      %v2454 = vunpack.c.h.b16 %v608
      %v2455 = vunpack.c.l.b16 %v609
      %v2456 = vunpack.c.h.b16 %v609
      %v2457 = vunpack.c.l.b16 %v610
      %v2458 = vunpack.c.h.b16 %v610
      %v2459 = vunpack.c.l.b16 %v611
      %v2460 = vunpack.c.h.b16 %v611
      %v2461 = vunpack.c.l.b16 %v612
      %v2462 = vunpack.c.h.b16 %v612
      %v2463 = vunpack.c.l.b16 %v613
      %v2464 = vunpack.c.h.b16 %v613
      %v2465 = vunpack.c.l.b16 %v614
      %v2466 = vunpack.c.h.b16 %v614
      %v2467 = vunpack.c.l.b16 %v615
      %v2468 = vunpack.c.h.b16 %v615
      %v2469 = vunpack.c.l.b16 %v616
      %v2470 = vunpack.c.h.b16 %v616
      %v2471 = vunpack.c.l.b16 %v617
      %v2472 = vunpack.c.h.b16 %v617
      %v2473 = vunpack.c.l.b16 %v618
      %v2474 = vunpack.c.h.b16 %v618
      %v2475 = vunpack.c.l.b16 %v619
      %v2476 = vunpack.c.h.b16 %v619
      %v2477 = vunpack.c.l.b16 %v620
      %v2478 = vunpack.c.h.b16 %v620
      %v2479 = vunpack.c.l.b16 %v621
      %v2480 = vunpack.c.h.b16 %v621
      %v2481 = vunpack.c.l.b16 %v622
      %v2482 = vunpack.c.h.b16 %v622
      %v2483 = vunpack.c.l.b16 %v623
      %v2484 = vunpack.c.h.b16 %v623
      %v2485 = vunpack.c.l.b16 %v624
      %v2486 = vunpack.c.h.b16 %v624
      %v2487 = vunpack.c.l.b16 %v625
      %v2488 = vunpack.c.h.b16 %v625
      %v2489 = vunpack.c.l.b16 %v626
      %v2490 = vunpack.c.h.b16 %v626
      %v2491 = vunpack.c.l.b16 %v627
      %v2492 = vunpack.c.h.b16 %v627
      %v2493 = vunpack.c.l.b16 %v628
      %v2494 = vunpack.c.h.b16 %v628
      %v2495 = vunpack.c.l.b16 %v629
      %v2496 = vunpack.c.h.b16 %v629
      %v2497 = vunpack.c.l.b16 %v630
      %v2498 = vunpack.c.h.b16 %v630
      %v2499 = vunpack.c.l.b16 %v631
      %v2500 = vunpack.c.h.b16 %v631
      %v2501 = vunpack.c.l.b16 %v632
      %v2502 = vunpack.c.h.b16 %v632
      %v2503 = vunpack.c.l.b16 %v633
      %v2504 = vunpack.c.h.b16 %v633
      %v2505 = vunpack.c.l.b16 %v634
      %v2506 = vunpack.c.h.b16 %v634
      %v2507 = vunpack.c.l.b16 %v635
      %v2508 = vunpack.c.h.b16 %v635
      %v2509 = vunpack.c.l.b16 %v636
      %v2510 = vunpack.c.h.b16 %v636
      %v2511 = vunpack.c.l.b16 %v637
      %v2512 = vunpack.c.h.b16 %v637
      %v2513 = vunpack.c.l.b16 %v638
      %v2514 = vunpack.c.h.b16 %v638
      %v2515 = vunpack.c.l.b16 %v639
      %v2516 = vunpack.c.h.b16 %v639
      %v2517 = vunpack.c.l.b16 %v640
      %v2518 = vunpack.c.h.b16 %v640
      %v2519 = vunpack.c.l.b16 %v641
      %v2520 = vunpack.c.h.b16 %v641
      %v2521 = vunpack.c.l.b16 %v642
      %v2522 = vunpack.c.h.b16 %v642
      %v2523 = vunpack.c.l.b16 %v643
      %v2524 = vunpack.c.h.b16 %v643
      %v2525 = vunpack.c.l.b16 %v644
      %v2526 = vunpack.c.h.b16 %v644
      %v2527 = vunpack.c.l.b16 %v645
      %v2528 = vunpack.c.h.b16 %v645
      %v2529 = vunpack.c.l.b16 %v646
      %v2530 = vunpack.c.h.b16 %v646
      %v2531 = vunpack.c.l.b16 %v647
      %v2532 = vunpack.c.h.b16 %v647
      %v2533 = vunpack.c.l.b16 %v648
      %v2534 = vunpack.c.h.b16 %v648
      %v2535 = vunpack.c.l.b16 %v649
      %v2536 = vunpack.c.h.b16 %v649
      %v2537 = vunpack.c.l.b16 %v650
      %v2538 = vunpack.c.h.b16 %v650
      %v2539 = vunpack.c.l.b16 %v651
      %v2540 = vunpack.c.h.b16 %v651
      %v2541 = vunpack.c.l.b16 %v652
      %v2542 = vunpack.c.h.b16 %v652
      %v2543 = vunpack.c.l.b16 %v653
      %v2544 = vunpack.c.h.b16 %v653
      %v2545 = vunpack.c.l.b16 %v654
      %v2546 = vunpack.c.h.b16 %v654
      %v2547 = vunpack.c.l.b16 %v655
      %v2548 = vunpack.c.h.b16 %v655
      %v2549 = vunpack.c.l.b16 %v656
      %v2550 = vunpack.c.h.b16 %v656
      %v2551 = vunpack.c.l.b16 %v657
      %v2552 = vunpack.c.h.b16 %v657
      %v2553 = vunpack.c.l.b16 %v658
      %v2554 = vunpack.c.h.b16 %v658
      %v2555 = vunpack.c.l.b16 %v659
      %v2556 = vunpack.c.h.b16 %v659
      %v2557 = vunpack.c.l.b16 %v660
      %v2558 = vunpack.c.h.b16 %v660
      %v2559 = vunpack.c.l.b16 %v661
      %v2560 = vunpack.c.h.b16 %v661
      %v2561 = vunpack.c.l.b16 %v662
      %v2562 = vunpack.c.h.b16 %v662
      %v2563 = vunpack.c.l.b16 %v663
      %v2564 = vunpack.c.h.b16 %v663
      %v2565 = vunpack.c.l.b16 %v664
      %v2566 = vunpack.c.h.b16 %v664
      %v2567 = vunpack.c.l.b16 %v665
      %v2568 = vunpack.c.h.b16 %v665
      %v2569 = vunpack.c.l.b16 %v666
      %v2570 = vunpack.c.h.b16 %v666
      %v2571 = vunpack.c.l.b16 %v667
      %v2572 = vunpack.c.h.b16 %v667
      %v2573 = vunpack.c.l.b16 %v668
      %v2574 = vunpack.c.h.b16 %v668
      %v2575 = vunpack.c.l.b16 %v669
      %v2576 = vunpack.c.h.b16 %v669
      %v2577 = vunpack.c.l.b16 %v670
      %v2578 = vunpack.c.h.b16 %v670
      %v2579 = vunpack.c.l.b16 %v671
      %v2580 = vunpack.c.h.b16 %v671
      %v2581 = vunpack.c.l.b16 %v672
      %v2582 = vunpack.c.h.b16 %v672
      %v2583 = vunpack.c.l.b16 %v673
      %v2584 = vunpack.c.h.b16 %v673
      %v2585 = vunpack.c.l.b16 %v674
      %v2586 = vunpack.c.h.b16 %v674
      %v2587 = vunpack.c.l.b16 %v675
      %v2588 = vunpack.c.h.b16 %v675
      %v2589 = vunpack.c.l.b16 %v676
      %v2590 = vunpack.c.h.b16 %v676
      %v2591 = vunpack.c.l.b16 %v677
      %v2592 = vunpack.c.h.b16 %v677
      %v2593 = vunpack.c.l.b16 %v678
      %v2594 = vunpack.c.h.b16 %v678
      %v2595 = vunpack.c.l.b16 %v679
      %v2596 = vunpack.c.h.b16 %v679
      %v2597 = vunpack.c.l.b16 %v680
      %v2598 = vunpack.c.h.b16 %v680
      %v2599 = vunpack.c.l.b16 %v681
      %v2600 = vunpack.c.h.b16 %v681
      %v2601 = vunpack.c.l.b16 %v682
      %v2602 = vunpack.c.h.b16 %v682
      %v2603 = vunpack.c.l.b16 %v683
      %v2604 = vunpack.c.h.b16 %v683
      %v2605 = vunpack.c.l.b16 %v684
      %v2606 = vunpack.c.h.b16 %v684
      %v2607 = vunpack.c.l.b16 %v685
      %v2608 = vunpack.c.h.b16 %v685
      %v2609 = vunpack.c.l.b16 %v686
      %v2610 = vunpack.c.h.b16 %v686
      %v2611 = vunpack.c.l.b16 %v687
      %v2612 = vunpack.c.h.b16 %v687
      %v2613 = vunpack.c.l.b16 %v688
      %v2614 = vunpack.c.h.b16 %v688
      %v2615 = vunpack.c.l.b16 %v689
      %v2616 = vunpack.c.h.b16 %v689
      %v2617 = vunpack.c.l.b16 %v690
      %v2618 = vunpack.c.h.b16 %v690
      %v2619 = vunpack.c.l.b16 %v691
      %v2620 = vunpack.c.h.b16 %v691
      %v2621 = vunpack.c.l.b16 %v692
      %v2622 = vunpack.c.h.b16 %v692
      %v2623 = vunpack.c.l.b16 %v693
      %v2624 = vunpack.c.h.b16 %v693
      %v2625 = vunpack.c.l.b16 %v694
      %v2626 = vunpack.c.h.b16 %v694
      %v2627 = vunpack.c.l.b16 %v695
      %v2628 = vunpack.c.h.b16 %v695
      %v2629 = vunpack.c.l.b16 %v696
      %v2630 = vunpack.c.h.b16 %v696
      %v2631 = vunpack.c.l.b16 %v697
      %v2632 = vunpack.c.h.b16 %v697
      %v2633 = vunpack.c.l.b16 %v698
      %v2634 = vunpack.c.h.b16 %v698
      %v2635 = vunpack.c.l.b16 %v699
      %v2636 = vunpack.c.h.b16 %v699
      %v2637 = vunpack.c.l.b16 %v700
      %v2638 = vunpack.c.h.b16 %v700
      %v2639 = vunpack.c.l.b16 %v701
      %v2640 = vunpack.c.h.b16 %v701
      %v2641 = vunpack.c.l.b16 %v702
      %v2642 = vunpack.c.h.b16 %v702
      %v2643 = vunpack.c.l.b16 %v703
      %v2644 = vunpack.c.h.b16 %v703
      %v2645 = vunpack.c.l.b16 %v704
      %v2646 = vunpack.c.h.b16 %v704
      %v2647 = vunpack.c.l.b16 %v705
      %v2648 = vunpack.c.h.b16 %v705
      %v2649 = vunpack.c.l.b16 %v706
      %v2650 = vunpack.c.h.b16 %v706
      %v2651 = vunpack.c.l.b16 %v707
      %v2652 = vunpack.c.h.b16 %v707
      %v2653 = vunpack.c.l.b16 %v708
      %v2654 = vunpack.c.h.b16 %v708
      %v2655 = vunpack.c.l.b16 %v709
      %v2656 = vunpack.c.h.b16 %v709
      %v2657 = vunpack.c.l.b16 %v710
      %v2658 = vunpack.c.h.b16 %v710
      %v2659 = vunpack.c.l.b16 %v711
      %v2660 = vunpack.c.h.b16 %v711
      %v2661 = vunpack.c.l.b16 %v712
      %v2662 = vunpack.c.h.b16 %v712
      %v2663 = vunpack.c.l.b16 %v713
      %v2664 = vunpack.c.h.b16 %v713
      %v2665 = vunpack.c.l.b16 %v714
      %v2666 = vunpack.c.h.b16 %v714
      %v2667 = vunpack.c.l.b16 %v715
      %v2668 = vunpack.c.h.b16 %v715
      %v2669 = vunpack.c.l.b16 %v716
      %v2670 = vunpack.c.h.b16 %v716
      %v2671 = vunpack.c.l.b16 %v717
      %v2672 = vunpack.c.h.b16 %v717
      %v2673 = vunpack.c.l.b16 %v718
      %v2674 = vunpack.c.h.b16 %v718
      %v2675 = vunpack.c.l.b16 %v719
      %v2676 = vunpack.c.h.b16 %v719
      %v2677 = vunpack.c.l.b16 %v720
      %v2678 = vunpack.c.h.b16 %v720
      %v2679 = vunpack.c.l.b16 %v721
      %v2680 = vunpack.c.h.b16 %v721
      %v2681 = vunpack.c.l.b16 %v722
      %v2682 = vunpack.c.h.b16 %v722
      %v2683 = vunpack.c.l.b16 %v723
      %v2684 = vunpack.c.h.b16 %v723
      %v2685 = vunpack.c.l.b16 %v724
      %v2686 = vunpack.c.h.b16 %v724
      %v2687 = vunpack.c.l.b16 %v725
      %v2688 = vunpack.c.h.b16 %v725
      %v2689 = vunpack.c.l.b16 %v726
      %v2690 = vunpack.c.h.b16 %v726
      %v2691 = vunpack.c.l.b16 %v727
      %v2692 = vunpack.c.h.b16 %v727
      %v2693 = vunpack.c.l.b16 %v728
      %v2694 = vunpack.c.h.b16 %v728
      %v2695 = vunpack.c.l.b16 %v729
      %v2696 = vunpack.c.h.b16 %v729
      %v2697 = vunpack.c.l.b16 %v730
      %v2698 = vunpack.c.h.b16 %v730
      %v2699 = vunpack.c.l.b16 %v731
      %v2700 = vunpack.c.h.b16 %v731
      %v2701 = vunpack.c.l.b16 %v732
      %v2702 = vunpack.c.h.b16 %v732
      %v2703 = vunpack.c.l.b16 %v733
      %v2704 = vunpack.c.h.b16 %v733
      %v2705 = vunpack.c.l.b16 %v734
      %v2706 = vunpack.c.h.b16 %v734
      %v2707 = vunpack.c.l.b16 %v735
      %v2708 = vunpack.c.h.b16 %v735
      %v2709 = vunpack.c.l.b16 %v736
      %v2710 = vunpack.c.h.b16 %v736
      %v2711 = vunpack.c.l.b16 %v737
      %v2712 = vunpack.c.h.b16 %v737
      %v2713 = vunpack.c.l.b16 %v738
      %v2714 = vunpack.c.h.b16 %v738
      %v2715 = vunpack.c.l.b16 %v739
      %v2716 = vunpack.c.h.b16 %v739
      %v2717 = vunpack.c.l.b16 %v740
      %v2718 = vunpack.c.h.b16 %v740
      %v2719 = vunpack.c.l.b16 %v741
      %v2720 = vunpack.c.h.b16 %v741
      %v2721 = vunpack.c.l.b16 %v742
      %v2722 = vunpack.c.h.b16 %v742
      %v2723 = vunpack.c.l.b16 %v743
      %v2724 = vunpack.c.h.b16 %v743
      %v2725 = vunpack.c.l.b16 %v744
      %v2726 = vunpack.c.h.b16 %v744
      %v2727 = vunpack.c.l.b16 %v745
      %v2728 = vunpack.c.h.b16 %v745
      %v2729 = vunpack.c.l.b16 %v746
      %v2730 = vunpack.c.h.b16 %v746
      %v2731 = vunpack.c.l.b16 %v747
      %v2732 = vunpack.c.h.b16 %v747
      %v2733 = vunpack.c.l.b16 %v748
      %v2734 = vunpack.c.h.b16 %v748
      %v2735 = vunpack.c.l.b16 %v749
      %v2736 = vunpack.c.h.b16 %v749
      %v2737 = vunpack.c.l.b16 %v750
      %v2738 = vunpack.c.h.b16 %v750
      %v2739 = vunpack.c.l.b16 %v751
      %v2740 = vunpack.c.h.b16 %v751
      %v2741 = vunpack.c.l.b16 %v752
      %v2742 = vunpack.c.h.b16 %v752
      %v2743 = vunpack.c.l.b16 %v753
      %v2744 = vunpack.c.h.b16 %v753
      %v2745 = vunpack.c.l.b16 %v754
      %v2746 = vunpack.c.h.b16 %v754
      %v2747 = vunpack.c.l.b16 %v755
      %v2748 = vunpack.c.h.b16 %v755
      %v2749 = vunpack.c.l.b16 %v756
      %v2750 = vunpack.c.h.b16 %v756
      %v2751 = vunpack.c.l.b16 %v757
      %v2752 = vunpack.c.h.b16 %v757
      %v2753 = vunpack.c.l.b16 %v758
      %v2754 = vunpack.c.h.b16 %v758
      %v2755 = vunpack.c.l.b16 %v759
      %v2756 = vunpack.c.h.b16 %v759
      %v2757 = vunpack.c.l.b16 %v760
      %v2758 = vunpack.c.h.b16 %v760
      %v2759 = vunpack.c.l.b16 %v761
      %v2760 = vunpack.c.h.b16 %v761
      %v2761 = vunpack.c.l.b16 %v762
      %v2762 = vunpack.c.h.b16 %v762
      %v2763 = vunpack.c.l.b16 %v763
      %v2764 = vunpack.c.h.b16 %v763
      %v2765 = vunpack.c.l.b16 %v764
      %v2766 = vunpack.c.h.b16 %v764
      %v2767 = vunpack.c.l.b16 %v765
      %v2768 = vunpack.c.h.b16 %v765
      %v2769 = vunpack.c.l.b16 %v766
      %v2770 = vunpack.c.h.b16 %v766
      %v2771 = vunpack.c.l.b16 %v767
      %v2772 = vunpack.c.h.b16 %v767
      %v2773 = vunpack.c.l.b16 %v768
      %v2774 = vunpack.c.h.b16 %v768
      %v2775 = vunpack.c.l.b16 %v769
      %v2776 = vunpack.c.h.b16 %v769
      %v2777 = vunpack.c.l.b16 %v770
      %v2778 = vunpack.c.h.b16 %v770
      %v2779 = vunpack.c.l.b16 %v771
      %v2780 = vunpack.c.h.b16 %v771
      %v2781 = vunpack.c.l.b16 %v772
      %v2782 = vunpack.c.h.b16 %v772
      %v2783 = vunpack.c.l.b16 %v773
      %v2784 = vunpack.c.h.b16 %v773
      %v2785 = vunpack.c.l.b16 %v774
      %v2786 = vunpack.c.h.b16 %v774
      %v2787 = vunpack.c.l.b16 %v775
      %v2788 = vunpack.c.h.b16 %v775
      %v2789 = vunpack.c.l.b16 %v776
      %v2790 = vunpack.c.h.b16 %v776
      %v2791 = vunpack.c.l.b16 %v777
      %v2792 = vunpack.c.h.b16 %v777
      %v2793 = vunpack.c.l.b16 %v778
      %v2794 = vunpack.c.h.b16 %v778
      %v2795 = vunpack.c.l.b16 %v779
      %v2796 = vunpack.c.h.b16 %v779
      %v2797 = vunpack.c.l.b16 %v780
      %v2798 = vunpack.c.h.b16 %v780
      %v2799 = vunpack.c.l.b16 %v781
      %v2800 = vunpack.c.h.b16 %v781
      %v2801 = vunpack.c.l.b16 %v782
      %v2802 = vunpack.c.h.b16 %v782
      %v2803 = vunpack.c.l.b16 %v783
      %v2804 = vunpack.c.h.b16 %v783
      %v2805 = vunpack.c.l.b16 %v784
      %v2806 = vunpack.c.h.b16 %v784
      %v2807 = vunpack.c.l.b16 %v785
      %v2808 = vunpack.c.h.b16 %v785
      %v2809 = vunpack.c.l.b16 %v786
      %v2810 = vunpack.c.h.b16 %v786
      %v2811 = vunpack.c.l.b16 %v787
      %v2812 = vunpack.c.h.b16 %v787
      %v2813 = vunpack.c.l.b16 %v788
      %v2814 = vunpack.c.h.b16 %v788
      %v2815 = vunpack.c.l.b16 %v789
      %v2816 = vunpack.c.h.b16 %v789
      %v2817 = vunpack.c.l.b16 %v790
      %v2818 = vunpack.c.h.b16 %v790
      %v2819 = vunpack.c.l.b16 %v791
      %v2820 = vunpack.c.h.b16 %v791
      %v2821 = vunpack.c.l.b16 %v792
      %v2822 = vunpack.c.h.b16 %v792
      %v2823 = vunpack.c.l.b16 %v793
      %v2824 = vunpack.c.h.b16 %v793
      %v2825 = vunpack.c.l.b16 %v794
      %v2826 = vunpack.c.h.b16 %v794
      %v2827 = vunpack.c.l.b16 %v795
      %v2828 = vunpack.c.h.b16 %v795
      %v2829 = vunpack.c.l.b16 %v796
      %v2830 = vunpack.c.h.b16 %v796
      %v2831 = vunpack.c.l.b16 %v797
      %v2832 = vunpack.c.h.b16 %v797
      %v2833 = vunpack.c.l.b16 %v798
      %v2834 = vunpack.c.h.b16 %v798
      %v2835 = vunpack.c.l.b16 %v799
      %v2836 = vunpack.c.h.b16 %v799
      %v2837 = vunpack.c.l.b16 %v800
      %v2838 = vunpack.c.h.b16 %v800
      %v2839 = vunpack.c.l.b16 %v801
      %v2840 = vunpack.c.h.b16 %v801
      %v2841 = vunpack.c.l.b16 %v802
      %v2842 = vunpack.c.h.b16 %v802
      %v2843 = vunpack.c.l.b16 %v803
      %v2844 = vunpack.c.h.b16 %v803
      %v2845 = vunpack.c.l.b16 %v804
      %v2846 = vunpack.c.h.b16 %v804
      %v2847 = vunpack.c.l.b16 %v805
      %v2848 = vunpack.c.h.b16 %v805
      %v2849 = vunpack.c.l.b16 %v806
      %v2850 = vunpack.c.h.b16 %v806
      %v2851 = vunpack.c.l.b16 %v807
      %v2852 = vunpack.c.h.b16 %v807
      %v2853 = vunpack.c.l.b16 %v808
      %v2854 = vunpack.c.h.b16 %v808
      %v2855 = vunpack.c.l.b16 %v809
      %v2856 = vunpack.c.h.b16 %v809
      %v2857 = vunpack.c.l.b16 %v810
      %v2858 = vunpack.c.h.b16 %v810
      %v2859 = vunpack.c.l.b16 %v811
      %v2860 = vunpack.c.h.b16 %v811
      %v2861 = vunpack.c.l.b16 %v812
      %v2862 = vunpack.c.h.b16 %v812
      %v2863 = vunpack.c.l.b16 %v813
      %v2864 = vunpack.c.h.b16 %v813
      %v2865 = vunpack.c.l.b16 %v814
      %v2866 = vunpack.c.h.b16 %v814
      %v2867 = vunpack.c.l.b16 %v815
      %v2868 = vunpack.c.h.b16 %v815
      %v2869 = vunpack.c.l.b16 %v816
      %v2870 = vunpack.c.h.b16 %v816
      %v2871 = vunpack.c.l.b16 %v817
      %v2872 = vunpack.c.h.b16 %v817
      %v2873 = vunpack.c.l.b16 %v818
      %v2874 = vunpack.c.h.b16 %v818
      %v2875 = vunpack.c.l.b16 %v819
      %v2876 = vunpack.c.h.b16 %v819
      %v2877 = vunpack.c.l.b16 %v820
      %v2878 = vunpack.c.h.b16 %v820
      %v2879 = vunpack.c.l.b16 %v821
      %v2880 = vunpack.c.h.b16 %v821
      %v2881 = vunpack.c.l.b16 %v822
      %v2882 = vunpack.c.h.b16 %v822
      %v2883 = vunpack.c.l.b16 %v823
      %v2884 = vunpack.c.h.b16 %v823
      %v2885 = vunpack.c.l.b16 %v824
      %v2886 = vunpack.c.h.b16 %v824
      %v2887 = vunpack.c.l.b16 %v825
      %v2888 = vunpack.c.h.b16 %v825
      %v2889 = vunpack.c.l.b16 %v826
      %v2890 = vunpack.c.h.b16 %v826
      %v2891 = vunpack.c.l.b16 %v827
      %v2892 = vunpack.c.h.b16 %v827
      %v2893 = vunpack.c.l.b16 %v828
      %v2894 = vunpack.c.h.b16 %v828
      %v2895 = vunpack.c.l.b16 %v829
      %v2896 = vunpack.c.h.b16 %v829
      %v2897 = vunpack.c.l.b16 %v830
      %v2898 = vunpack.c.h.b16 %v830
      %v2899 = vunpack.c.l.b16 %v831
      %v2900 = vunpack.c.h.b16 %v831
      %v2901 = vunpack.c.l.b16 %v832
      %v2902 = vunpack.c.h.b16 %v832
      %v2903 = vunpack.c.l.b16 %v833
      %v2904 = vunpack.c.h.b16 %v833
      %v2905 = vunpack.c.l.b16 %v834
      %v2906 = vunpack.c.h.b16 %v834
      %v2907 = vunpack.c.l.b16 %v835
      %v2908 = vunpack.c.h.b16 %v835
      %v2909 = vunpack.c.l.b16 %v836
      %v2910 = vunpack.c.h.b16 %v836
      %v2911 = vunpack.c.l.b16 %v837
      %v2912 = vunpack.c.h.b16 %v837
      %v2913 = vunpack.c.l.b16 %v838
      %v2914 = vunpack.c.h.b16 %v838
      %v2915 = vunpack.c.l.b16 %v839
      %v2916 = vunpack.c.h.b16 %v839
      %v2917 = vunpack.c.l.b16 %v840
      %v2918 = vunpack.c.h.b16 %v840
      %v2919 = vunpack.c.l.b16 %v841
      %v2920 = vunpack.c.h.b16 %v841
      %v2921 = vunpack.c.l.b16 %v842
      %v2922 = vunpack.c.h.b16 %v842
      %v2923 = vunpack.c.l.b16 %v843
      %v2924 = vunpack.c.h.b16 %v843
      %v2925 = vunpack.c.l.b16 %v844
      %v2926 = vunpack.c.h.b16 %v844
      %v2927 = vunpack.c.l.b16 %v845
      %v2928 = vunpack.c.h.b16 %v845
      %v2929 = vunpack.c.l.b16 %v846
      %v2930 = vunpack.c.h.b16 %v846
      %v2931 = vunpack.c.l.b16 %v847
      %v2932 = vunpack.c.h.b16 %v847
      %v2933 = vunpack.c.l.b16 %v848
      %v2934 = vunpack.c.h.b16 %v848
      %v2935 = vunpack.c.l.b16 %v849
      %v2936 = vunpack.c.h.b16 %v849
      %v2937 = vunpack.c.l.b16 %v850
      %v2938 = vunpack.c.h.b16 %v850
      %v2939 = vunpack.c.l.b16 %v851
      %v2940 = vunpack.c.h.b16 %v851
      %v2941 = vunpack.c.l.b16 %v852
      %v2942 = vunpack.c.h.b16 %v852
      %v2943 = vunpack.c.l.b16 %v853
      %v2944 = vunpack.c.h.b16 %v853
      %v2945 = vunpack.c.l.b16 %v854
      %v2946 = vunpack.c.h.b16 %v854
      %v2947 = vunpack.c.l.b16 %v855
      %v2948 = vunpack.c.h.b16 %v855
      %v2949 = vunpack.c.l.b16 %v856
      %v2950 = vunpack.c.h.b16 %v856
      %v2951 = vunpack.c.l.b16 %v857
      %v2952 = vunpack.c.h.b16 %v857
      %v2953 = vunpack.c.l.b16 %v858
      %v2954 = vunpack.c.h.b16 %v858
      %v2955 = vunpack.c.l.b16 %v859
      %v2956 = vunpack.c.h.b16 %v859
      %v2957 = vunpack.c.l.b16 %v860
      %v2958 = vunpack.c.h.b16 %v860
      %v2959 = vunpack.c.l.b16 %v861
      %v2960 = vunpack.c.h.b16 %v861
      %v2961 = vunpack.c.l.b16 %v862
      %v2962 = vunpack.c.h.b16 %v862
      %v2963 = vunpack.c.l.b16 %v863
      %v2964 = vunpack.c.h.b16 %v863
      %v2965 = vunpack.c.l.b16 %v864
      %v2966 = vunpack.c.h.b16 %v864
      %v2967 = vunpack.c.l.b16 %v865
      %v2968 = vunpack.c.h.b16 %v865
      %v2969 = vunpack.c.l.b16 %v866
      %v2970 = vunpack.c.h.b16 %v866
      %v2971 = vunpack.c.l.b16 %v867
      %v2972 = vunpack.c.h.b16 %v867
      %v2973 = vunpack.c.l.b16 %v868
      %v2974 = vunpack.c.h.b16 %v868
      %v2975 = vunpack.c.l.b16 %v869
      %v2976 = vunpack.c.h.b16 %v869
      %v2977 = vunpack.c.l.b16 %v870
      %v2978 = vunpack.c.h.b16 %v870
      %v2979 = vunpack.c.l.b16 %v871
      %v2980 = vunpack.c.h.b16 %v871
      %v2981 = vunpack.c.l.b16 %v872
      %v2982 = vunpack.c.h.b16 %v872
      %v2983 = vunpack.c.l.b16 %v873
      %v2984 = vunpack.c.h.b16 %v873
      %v2985 = vunpack.c.l.b16 %v874
      %v2986 = vunpack.c.h.b16 %v874
      %v2987 = vunpack.c.l.b16 %v875
      %v2988 = vunpack.c.h.b16 %v875
      %v2989 = vunpack.c.l.b16 %v876
      %v2990 = vunpack.c.h.b16 %v876
      %v2991 = vunpack.c.l.b16 %v877
      %v2992 = vunpack.c.h.b16 %v877
      %v2993 = vunpack.c.l.b16 %v878
      %v2994 = vunpack.c.h.b16 %v878
      %v2995 = vunpack.c.l.b16 %v879
      %v2996 = vunpack.c.h.b16 %v879
      %v2997 = vunpack.c.l.b16 %v880
      %v2998 = vunpack.c.h.b16 %v880
      %v2999 = vunpack.c.l.b16 %v881
      %v3000 = vunpack.c.h.b16 %v881
      %v3001 = vunpack.c.l.b16 %v882
      %v3002 = vunpack.c.h.b16 %v882
      %v3003 = vunpack.c.l.b16 %v883
      %v3004 = vunpack.c.h.b16 %v883
      %v3005 = vunpack.c.l.b16 %v884
      %v3006 = vunpack.c.h.b16 %v884
      %v3007 = vunpack.c.l.b16 %v885
      %v3008 = vunpack.c.h.b16 %v885
      %v3009 = vunpack.c.l.b16 %v886
      %v3010 = vunpack.c.h.b16 %v886
      %v3011 = vunpack.c.l.b16 %v887
      %v3012 = vunpack.c.h.b16 %v887
      %v3013 = vunpack.c.l.b16 %v888
      %v3014 = vunpack.c.h.b16 %v888
      %v3015 = vunpack.c.l.b16 %v889
      %v3016 = vunpack.c.h.b16 %v889
      %v3017 = vunpack.c.l.b16 %v890
      %v3018 = vunpack.c.h.b16 %v890
      %v3019 = vunpack.c.l.b16 %v891
      %v3020 = vunpack.c.h.b16 %v891
      %v3021 = vunpack.c.l.b16 %v892
      %v3022 = vunpack.c.h.b16 %v892
      %v3023 = vunpack.c.l.b16 %v893
      %v3024 = vunpack.c.h.b16 %v893
      %v3025 = vunpack.c.l.b16 %v894
      %v3026 = vunpack.c.h.b16 %v894
      %v3027 = vunpack.c.l.b16 %v895
      %v3028 = vunpack.c.h.b16 %v895
      %v3029 = vunpack.c.l.b16 %v896
      %v3030 = vunpack.c.h.b16 %v896
      %v3031 = vunpack.c.l.b16 %v897
      %v3032 = vunpack.c.h.b16 %v897
      %v3033 = vunpack.c.l.b16 %v898
      %v3034 = vunpack.c.h.b16 %v898
      %v3035 = vunpack.c.l.b16 %v899
      %v3036 = vunpack.c.h.b16 %v899
      %v3037 = vunpack.c.l.b16 %v900
      %v3038 = vunpack.c.h.b16 %v900
      %v3039 = vunpack.c.l.b16 %v901
      %v3040 = vunpack.c.h.b16 %v901
      %v3041 = vunpack.c.l.b16 %v902
      %v3042 = vunpack.c.h.b16 %v902
      %v3043 = vunpack.c.l.b16 %v903
      %v3044 = vunpack.c.h.b16 %v903
      %v3045 = vunpack.c.l.b16 %v904
      %v3046 = vunpack.c.h.b16 %v904
      %v3047 = vunpack.c.l.b16 %v905
      %v3048 = vunpack.c.h.b16 %v905
      %v3049 = vunpack.c.l.b16 %v906
      %v3050 = vunpack.c.h.b16 %v906
      %v3051 = vpack.c.b16 %v2285, %v2283
      %v3052 = vpack.c.b16 %v2286, %v2284
      %v3053 = vpack.c.b16 %v2289, %v2287
      %v3054 = vpack.c.b16 %v2290, %v2288
      %v3055 = vpack.c.b16 %v2293, %v2291
      %v3056 = vpack.c.b16 %v2294, %v2292
      %v3057 = vpack.c.b16 %v2297, %v2295
      %v3058 = vpack.c.b16 %v2298, %v2296
      %v3059 = vpack.c.b16 %v2301, %v2299
      %v3060 = vpack.c.b16 %v2302, %v2300
      %v3061 = vpack.c.b16 %v2305, %v2303
      %v3062 = vpack.c.b16 %v2306, %v2304
      %v3063 = vpack.c.b16 %v2309, %v2307
      %v3064 = vpack.c.b16 %v2310, %v2308
      %v3065 = vpack.c.b16 %v2313, %v2311
      %v3066 = vpack.c.b16 %v2314, %v2312
      %v3067 = vpack.c.b16 %v2317, %v2315
      %v3068 = vpack.c.b16 %v2318, %v2316
      %v3069 = vpack.c.b16 %v2321, %v2319
      %v3070 = vpack.c.b16 %v2322, %v2320
      %v3071 = vpack.c.b16 %v2325, %v2323
      %v3072 = vpack.c.b16 %v2326, %v2324
      %v3073 = vpack.c.b16 %v2329, %v2327
      %v3074 = vpack.c.b16 %v2330, %v2328
      %v3075 = vpack.c.b16 %v2333, %v2331
      %v3076 = vpack.c.b16 %v2334, %v2332
      %v3077 = vpack.c.b16 %v2337, %v2335
      %v3078 = vpack.c.b16 %v2338, %v2336
      %v3079 = vpack.c.b16 %v2341, %v2339
      %v3080 = vpack.c.b16 %v2342, %v2340
      %v3081 = vpack.c.b16 %v2345, %v2343
      %v3082 = vpack.c.b16 %v2346, %v2344
      %v3083 = vpack.c.b16 %v2349, %v2347
      %v3084 = vpack.c.b16 %v2350, %v2348
      %v3085 = vpack.c.b16 %v2353, %v2351
      %v3086 = vpack.c.b16 %v2354, %v2352
      %v3087 = vpack.c.b16 %v2357, %v2355
      %v3088 = vpack.c.b16 %v2358, %v2356
      %v3089 = vpack.c.b16 %v2361, %v2359
      %v3090 = vpack.c.b16 %v2362, %v2360
      %v3091 = vpack.c.b16 %v2365, %v2363
      %v3092 = vpack.c.b16 %v2366, %v2364
      %v3093 = vpack.c.b16 %v2369, %v2367
      %v3094 = vpack.c.b16 %v2370, %v2368
      %v3095 = vpack.c.b16 %v2373, %v2371
      %v3096 = vpack.c.b16 %v2374, %v2372
      %v3097 = vpack.c.b16 %v2377, %v2375
      %v3098 = vpack.c.b16 %v2378, %v2376
      %v3099 = vpack.c.b16 %v2381, %v2379
      %v3100 = vpack.c.b16 %v2382, %v2380
      %v3101 = vpack.c.b16 %v2385, %v2383
      %v3102 = vpack.c.b16 %v2386, %v2384
      %v3103 = vpack.c.b16 %v2389, %v2387
      %v3104 = vpack.c.b16 %v2390, %v2388
      %v3105 = vpack.c.b16 %v2393, %v2391
      %v3106 = vpack.c.b16 %v2394, %v2392
      %v3107 = vpack.c.b16 %v2397, %v2395
      %v3108 = vpack.c.b16 %v2398, %v2396
      %v3109 = vpack.c.b16 %v2401, %v2399
      %v3110 = vpack.c.b16 %v2402, %v2400
      %v3111 = vpack.c.b16 %v2405, %v2403
      %v3112 = vpack.c.b16 %v2406, %v2404
      %v3113 = vpack.c.b16 %v2409, %v2407
      %v3114 = vpack.c.b16 %v2410, %v2408
      %v3115 = vpack.c.b16 %v2413, %v2411
      %v3116 = vpack.c.b16 %v2414, %v2412
      %v3117 = vpack.c.b16 %v2417, %v2415
      %v3118 = vpack.c.b16 %v2418, %v2416
      %v3119 = vpack.c.b16 %v2421, %v2419
      %v3120 = vpack.c.b16 %v2422, %v2420
      %v3121 = vpack.c.b16 %v2425, %v2423
      %v3122 = vpack.c.b16 %v2426, %v2424
      %v3123 = vpack.c.b16 %v2429, %v2427
      %v3124 = vpack.c.b16 %v2430, %v2428
      %v3125 = vpack.c.b16 %v2433, %v2431
      %v3126 = vpack.c.b16 %v2434, %v2432
      %v3127 = vpack.c.b16 %v2437, %v2435
      %v3128 = vpack.c.b16 %v2438, %v2436
      %v3129 = vpack.c.b16 %v2441, %v2439
      %v3130 = vpack.c.b16 %v2442, %v2440
      %v3131 = vpack.c.b16 %v2445, %v2443
      %v3132 = vpack.c.b16 %v2446, %v2444
      %v3133 = vpack.c.b16 %v2449, %v2447
      %v3134 = vpack.c.b16 %v2450, %v2448
      %v3135 = vpack.c.b16 %v2453, %v2451
      %v3136 = vpack.c.b16 %v2454, %v2452
      %v3137 = vpack.c.b16 %v2457, %v2455
      %v3138 = vpack.c.b16 %v2458, %v2456
      %v3139 = vpack.c.b16 %v2461, %v2459
      %v3140 = vpack.c.b16 %v2462, %v2460
      %v3141 = vpack.c.b16 %v2465, %v2463
      %v3142 = vpack.c.b16 %v2466, %v2464
      %v3143 = vpack.c.b16 %v2469, %v2467
      %v3144 = vpack.c.b16 %v2470, %v2468
      %v3145 = vpack.c.b16 %v2473, %v2471
      %v3146 = vpack.c.b16 %v2474, %v2472
      %v3147 = vpack.c.b16 %v2477, %v2475
      %v3148 = vpack.c.b16 %v2478, %v2476
      %v3149 = vpack.c.b16 %v2481, %v2479
      %v3150 = vpack.c.b16 %v2482, %v2480
      %v3151 = vpack.c.b16 %v2485, %v2483
      %v3152 = vpack.c.b16 %v2486, %v2484
      %v3153 = vpack.c.b16 %v2489, %v2487
      %v3154 = vpack.c.b16 %v2490, %v2488
      %v3155 = vpack.c.b16 %v2493, %v2491
      %v3156 = vpack.c.b16 %v2494, %v2492
      %v3157 = vpack.c.b16 %v2497, %v2495
      %v3158 = vpack.c.b16 %v2498, %v2496
      %v3159 = vpack.c.b16 %v2501, %v2499
      %v3160 = vpack.c.b16 %v2502, %v2500
      %v3161 = vpack.c.b16 %v2505, %v2503
      %v3162 = vpack.c.b16 %v2506, %v2504
      %v3163 = vpack.c.b16 %v2509, %v2507
      %v3164 = vpack.c.b16 %v2510, %v2508
      %v3165 = vpack.c.b16 %v2513, %v2511
      %v3166 = vpack.c.b16 %v2514, %v2512
      %v3167 = vpack.c.b16 %v2517, %v2515
      %v3168 = vpack.c.b16 %v2518, %v2516
      %v3169 = vpack.c.b16 %v2521, %v2519
      %v3170 = vpack.c.b16 %v2522, %v2520
      %v3171 = vpack.c.b16 %v2525, %v2523
      %v3172 = vpack.c.b16 %v2526, %v2524
      %v3173 = vpack.c.b16 %v2529, %v2527
      %v3174 = vpack.c.b16 %v2530, %v2528
      %v3175 = vpack.c.b16 %v2533, %v2531
      %v3176 = vpack.c.b16 %v2534, %v2532
      %v3177 = vpack.c.b16 %v2537, %v2535
      %v3178 = vpack.c.b16 %v2538, %v2536
      %v3179 = vpack.c.b16 %v2541, %v2539
      %v3180 = vpack.c.b16 %v2542, %v2540
      %v3181 = vpack.c.b16 %v2545, %v2543
      %v3182 = vpack.c.b16 %v2546, %v2544
      %v3183 = vpack.c.b16 %v2549, %v2547
      %v3184 = vpack.c.b16 %v2550, %v2548
      %v3185 = vpack.c.b16 %v2553, %v2551
      %v3186 = vpack.c.b16 %v2554, %v2552
      %v3187 = vpack.c.b16 %v2557, %v2555
      %v3188 = vpack.c.b16 %v2558, %v2556
      %v3189 = vpack.c.b16 %v2561, %v2559
      %v3190 = vpack.c.b16 %v2562, %v2560
      %v3191 = vpack.c.b16 %v2565, %v2563
      %v3192 = vpack.c.b16 %v2566, %v2564
      %v3193 = vpack.c.b16 %v2569, %v2567
      %v3194 = vpack.c.b16 %v2570, %v2568
      %v3195 = vpack.c.b16 %v2573, %v2571
      %v3196 = vpack.c.b16 %v2574, %v2572
      %v3197 = vpack.c.b16 %v2577, %v2575
      %v3198 = vpack.c.b16 %v2578, %v2576
      %v3199 = vpack.c.b16 %v2581, %v2579
      %v3200 = vpack.c.b16 %v2582, %v2580
      %v3201 = vpack.c.b16 %v2585, %v2583
      %v3202 = vpack.c.b16 %v2586, %v2584
      %v3203 = vpack.c.b16 %v2589, %v2587
      %v3204 = vpack.c.b16 %v2590, %v2588
      %v3205 = vpack.c.b16 %v2593, %v2591
      %v3206 = vpack.c.b16 %v2594, %v2592
      %v3207 = vpack.c.b16 %v2597, %v2595
      %v3208 = vpack.c.b16 %v2598, %v2596
      %v3209 = vpack.c.b16 %v2601, %v2599
      %v3210 = vpack.c.b16 %v2602, %v2600
      %v3211 = vpack.c.b16 %v2605, %v2603
      %v3212 = vpack.c.b16 %v2606, %v2604
      %v3213 = vpack.c.b16 %v2609, %v2607
      %v3214 = vpack.c.b16 %v2610, %v2608
      %v3215 = vpack.c.b16 %v2613, %v2611
      %v3216 = vpack.c.b16 %v2614, %v2612
      %v3217 = vpack.c.b16 %v2617, %v2615
      %v3218 = vpack.c.b16 %v2618, %v2616
      %v3219 = vpack.c.b16 %v2621, %v2619
      %v3220 = vpack.c.b16 %v2622, %v2620
      %v3221 = vpack.c.b16 %v2625, %v2623
      %v3222 = vpack.c.b16 %v2626, %v2624
      %v3223 = vpack.c.b16 %v2629, %v2627
      %v3224 = vpack.c.b16 %v2630, %v2628
      %v3225 = vpack.c.b16 %v2633, %v2631
      %v3226 = vpack.c.b16 %v2634, %v2632
      %v3227 = vpack.c.b16 %v2637, %v2635
      %v3228 = vpack.c.b16 %v2638, %v2636
      %v3229 = vpack.c.b16 %v2641, %v2639
      %v3230 = vpack.c.b16 %v2642, %v2640
      %v3231 = vpack.c.b16 %v2645, %v2643
      %v3232 = vpack.c.b16 %v2646, %v2644
      %v3233 = vpack.c.b16 %v2649, %v2647
      %v3234 = vpack.c.b16 %v2650, %v2648
      %v3235 = vpack.c.b16 %v2653, %v2651
      %v3236 = vpack.c.b16 %v2654, %v2652
      %v3237 = vpack.c.b16 %v2657, %v2655
      %v3238 = vpack.c.b16 %v2658, %v2656
      %v3239 = vpack.c.b16 %v2661, %v2659
      %v3240 = vpack.c.b16 %v2662, %v2660
      %v3241 = vpack.c.b16 %v2665, %v2663
      %v3242 = vpack.c.b16 %v2666, %v2664
      %v3243 = vpack.c.b16 %v2669, %v2667
      %v3244 = vpack.c.b16 %v2670, %v2668
      %v3245 = vpack.c.b16 %v2673, %v2671
      %v3246 = vpack.c.b16 %v2674, %v2672
      %v3247 = vpack.c.b16 %v2677, %v2675
      %v3248 = vpack.c.b16 %v2678, %v2676
      %v3249 = vpack.c.b16 %v2681, %v2679
      %v3250 = vpack.c.b16 %v2682, %v2680
      %v3251 = vpack.c.b16 %v2685, %v2683
      %v3252 = vpack.c.b16 %v2686, %v2684
      %v3253 = vpack.c.b16 %v2689, %v2687
      %v3254 = vpack.c.b16 %v2690, %v2688
      %v3255 = vpack.c.b16 %v2693, %v2691
      %v3256 = vpack.c.b16 %v2694, %v2692
      %v3257 = vpack.c.b16 %v2697, %v2695
      %v3258 = vpack.c.b16 %v2698, %v2696
      %v3259 = vpack.c.b16 %v2701, %v2699
      %v3260 = vpack.c.b16 %v2702, %v2700
      %v3261 = vpack.c.b16 %v2705, %v2703
      %v3262 = vpack.c.b16 %v2706, %v2704
      %v3263 = vpack.c.b16 %v2709, %v2707
      %v3264 = vpack.c.b16 %v2710, %v2708
      %v3265 = vpack.c.b16 %v2713, %v2711
      %v3266 = vpack.c.b16 %v2714, %v2712
      %v3267 = vpack.c.b16 %v2717, %v2715
      %v3268 = vpack.c.b16 %v2718, %v2716
      %v3269 = vpack.c.b16 %v2721, %v2719
      %v3270 = vpack.c.b16 %v2722, %v2720
      %v3271 = vpack.c.b16 %v2725, %v2723
      %v3272 = vpack.c.b16 %v2726, %v2724
      %v3273 = vpack.c.b16 %v2729, %v2727
      %v3274 = vpack.c.b16 %v2730, %v2728
      %v3275 = vpack.c.b16 %v2733, %v2731
      %v3276 = vpack.c.b16 %v2734, %v2732
      %v3277 = vpack.c.b16 %v2737, %v2735
      %v3278 = vpack.c.b16 %v2738, %v2736
      %v3279 = vpack.c.b16 %v2741, %v2739
      %v3280 = vpack.c.b16 %v2742, %v2740
      %v3281 = vpack.c.b16 %v2745, %v2743
      %v3282 = vpack.c.b16 %v2746, %v2744
      %v3283 = vpack.c.b16 %v2749, %v2747
      %v3284 = vpack.c.b16 %v2750, %v2748
      %v3285 = vpack.c.b16 %v2753, %v2751
      %v3286 = vpack.c.b16 %v2754, %v2752
      %v3287 = vpack.c.b16 %v2757, %v2755
      %v3288 = vpack.c.b16 %v2758, %v2756
      %v3289 = vpack.c.b16 %v2761, %v2759
      %v3290 = vpack.c.b16 %v2762, %v2760
      %v3291 = vpack.c.b16 %v2765, %v2763
      %v3292 = vpack.c.b16 %v2766, %v2764
      %v3293 = vpack.c.b16 %v2769, %v2767
      %v3294 = vpack.c.b16 %v2770, %v2768
      %v3295 = vpack.c.b16 %v2773, %v2771
      %v3296 = vpack.c.b16 %v2774, %v2772
      %v3297 = vpack.c.b16 %v2777, %v2775
      %v3298 = vpack.c.b16 %v2778, %v2776
      %v3299 = vpack.c.b16 %v2781, %v2779
      %v3300 = vpack.c.b16 %v2782, %v2780
      %v3301 = vpack.c.b16 %v2785, %v2783
      %v3302 = vpack.c.b16 %v2786, %v2784
      %v3303 = vpack.c.b16 %v2789, %v2787
      %v3304 = vpack.c.b16 %v2790, %v2788
      %v3305 = vpack.c.b16 %v2793, %v2791
      %v3306 = vpack.c.b16 %v2794, %v2792
      %v3307 = vpack.c.b16 %v2797, %v2795
      %v3308 = vpack.c.b16 %v2798, %v2796
      %v3309 = vpack.c.b16 %v2801, %v2799
      %v3310 = vpack.c.b16 %v2802, %v2800
      %v3311 = vpack.c.b16 %v2805, %v2803
      %v3312 = vpack.c.b16 %v2806, %v2804
      %v3313 = vpack.c.b16 %v2809, %v2807
      %v3314 = vpack.c.b16 %v2810, %v2808
      %v3315 = vpack.c.b16 %v2813, %v2811
      %v3316 = vpack.c.b16 %v2814, %v2812
      %v3317 = vpack.c.b16 %v2817, %v2815
      %v3318 = vpack.c.b16 %v2818, %v2816
      %v3319 = vpack.c.b16 %v2821, %v2819
      %v3320 = vpack.c.b16 %v2822, %v2820
      %v3321 = vpack.c.b16 %v2825, %v2823
      %v3322 = vpack.c.b16 %v2826, %v2824
      %v3323 = vpack.c.b16 %v2829, %v2827
      %v3324 = vpack.c.b16 %v2830, %v2828
      %v3325 = vpack.c.b16 %v2833, %v2831
      %v3326 = vpack.c.b16 %v2834, %v2832
      %v3327 = vpack.c.b16 %v2837, %v2835
      %v3328 = vpack.c.b16 %v2838, %v2836
      %v3329 = vpack.c.b16 %v2841, %v2839
      %v3330 = vpack.c.b16 %v2842, %v2840
      %v3331 = vpack.c.b16 %v2845, %v2843
      %v3332 = vpack.c.b16 %v2846, %v2844
      %v3333 = vpack.c.b16 %v2849, %v2847
      %v3334 = vpack.c.b16 %v2850, %v2848
      %v3335 = vpack.c.b16 %v2853, %v2851
      %v3336 = vpack.c.b16 %v2854, %v2852
      %v3337 = vpack.c.b16 %v2857, %v2855
      %v3338 = vpack.c.b16 %v2858, %v2856
      %v3339 = vpack.c.b16 %v2861, %v2859
      %v3340 = vpack.c.b16 %v2862, %v2860
      %v3341 = vpack.c.b16 %v2865, %v2863
      %v3342 = vpack.c.b16 %v2866, %v2864
      %v3343 = vpack.c.b16 %v2869, %v2867
      %v3344 = vpack.c.b16 %v2870, %v2868
      %v3345 = vpack.c.b16 %v2873, %v2871
      %v3346 = vpack.c.b16 %v2874, %v2872
      %v3347 = vpack.c.b16 %v2877, %v2875
      %v3348 = vpack.c.b16 %v2878, %v2876
      %v3349 = vpack.c.b16 %v2881, %v2879
      %v3350 = vpack.c.b16 %v2882, %v2880
      %v3351 = vpack.c.b16 %v2885, %v2883
      %v3352 = vpack.c.b16 %v2886, %v2884
      %v3353 = vpack.c.b16 %v2889, %v2887
      %v3354 = vpack.c.b16 %v2890, %v2888
      %v3355 = vpack.c.b16 %v2893, %v2891
      %v3356 = vpack.c.b16 %v2894, %v2892
      %v3357 = vpack.c.b16 %v2897, %v2895
      %v3358 = vpack.c.b16 %v2898, %v2896
      %v3359 = vpack.c.b16 %v2901, %v2899
      %v3360 = vpack.c.b16 %v2902, %v2900
      %v3361 = vpack.c.b16 %v2905, %v2903
      %v3362 = vpack.c.b16 %v2906, %v2904
      %v3363 = vpack.c.b16 %v2909, %v2907
      %v3364 = vpack.c.b16 %v2910, %v2908
      %v3365 = vpack.c.b16 %v2913, %v2911
      %v3366 = vpack.c.b16 %v2914, %v2912
      %v3367 = vpack.c.b16 %v2917, %v2915
      %v3368 = vpack.c.b16 %v2918, %v2916
      %v3369 = vpack.c.b16 %v2921, %v2919
      %v3370 = vpack.c.b16 %v2922, %v2920
      %v3371 = vpack.c.b16 %v2925, %v2923
      %v3372 = vpack.c.b16 %v2926, %v2924
      %v3373 = vpack.c.b16 %v2929, %v2927
      %v3374 = vpack.c.b16 %v2930, %v2928
      %v3375 = vpack.c.b16 %v2933, %v2931
      %v3376 = vpack.c.b16 %v2934, %v2932
      %v3377 = vpack.c.b16 %v2937, %v2935
      %v3378 = vpack.c.b16 %v2938, %v2936
      %v3379 = vpack.c.b16 %v2941, %v2939
      %v3380 = vpack.c.b16 %v2942, %v2940
      %v3381 = vpack.c.b16 %v2945, %v2943
      %v3382 = vpack.c.b16 %v2946, %v2944
      %v3383 = vpack.c.b16 %v2949, %v2947
      %v3384 = vpack.c.b16 %v2950, %v2948
      %v3385 = vpack.c.b16 %v2953, %v2951
      %v3386 = vpack.c.b16 %v2954, %v2952
      %v3387 = vpack.c.b16 %v2957, %v2955
      %v3388 = vpack.c.b16 %v2958, %v2956
      %v3389 = vpack.c.b16 %v2961, %v2959
      %v3390 = vpack.c.b16 %v2962, %v2960
      %v3391 = vpack.c.b16 %v2965, %v2963
      %v3392 = vpack.c.b16 %v2966, %v2964
      %v3393 = vpack.c.b16 %v2969, %v2967
      %v3394 = vpack.c.b16 %v2970, %v2968
      %v3395 = vpack.c.b16 %v2973, %v2971
      %v3396 = vpack.c.b16 %v2974, %v2972
      %v3397 = vpack.c.b16 %v2977, %v2975
      %v3398 = vpack.c.b16 %v2978, %v2976
      %v3399 = vpack.c.b16 %v2981, %v2979
      %v3400 = vpack.c.b16 %v2982, %v2980
      %v3401 = vpack.c.b16 %v2985, %v2983
      %v3402 = vpack.c.b16 %v2986, %v2984
      %v3403 = vpack.c.b16 %v2989, %v2987
      %v3404 = vpack.c.b16 %v2990, %v2988
      %v3405 = vpack.c.b16 %v2993, %v2991
      %v3406 = vpack.c.b16 %v2994, %v2992
      %v3407 = vpack.c.b16 %v2997, %v2995
      %v3408 = vpack.c.b16 %v2998, %v2996
      %v3409 = vpack.c.b16 %v3001, %v2999
      %v3410 = vpack.c.b16 %v3002, %v3000
      %v3411 = vpack.c.b16 %v3005, %v3003
      %v3412 = vpack.c.b16 %v3006, %v3004
      %v3413 = vpack.c.b16 %v3009, %v3007
      %v3414 = vpack.c.b16 %v3010, %v3008
      %v3415 = vpack.c.b16 %v3013, %v3011
      %v3416 = vpack.c.b16 %v3014, %v3012
      %v3417 = vpack.c.b16 %v3017, %v3015
      %v3418 = vpack.c.b16 %v3018, %v3016
      %v3419 = vpack.c.b16 %v3021, %v3019
      %v3420 = vpack.c.b16 %v3022, %v3020
      %v3421 = vpack.c.b16 %v3025, %v3023
      %v3422 = vpack.c.b16 %v3026, %v3024
      %v3423 = vpack.c.b16 %v3029, %v3027
      %v3424 = vpack.c.b16 %v3030, %v3028
      %v3425 = vpack.c.b16 %v3033, %v3031
      %v3426 = vpack.c.b16 %v3034, %v3032
      %v3427 = vpack.c.b16 %v3037, %v3035
      %v3428 = vpack.c.b16 %v3038, %v3036
      %v3429 = vpack.c.b16 %v3041, %v3039
      %v3430 = vpack.c.b16 %v3042, %v3040
      %v3431 = vpack.c.b16 %v3045, %v3043
      %v3432 = vpack.c.b16 %v3046, %v3044
      %v3433 = vpack.c.b16 %v3049, %v3047
      %v3434 = vpack.c.b16 %v3050, %v3048
      %3819 = vmatpush.bf16.msra.mxu0 %v3065
      %3820 = vmatpush.bf16.msra.mxu0 %v3063
      %3821 = vmatpush.bf16.msra.mxu0 %v3061
      %3822 = vmatpush.bf16.msra.mxu0 %v3059
      %3823 = vmatpush.bf16.msra.mxu0 %v3057
      %3824 = vmatpush.bf16.msra.mxu0 %v3055
      %3825 = vmatpush.bf16.msra.mxu0 %v3053
      %3826 = vmatpush.bf16.msra.mxu0 %v3051
      %3827 = vmatmul.bf16.gmra.mxu0 %v1515
      %v3828 = vpop.f32.mrf.mxu0
      %v3829 = vadd.f32 %v907, %v3828
      %v3830 = vpop.f32.mrf.mxu0
      %v3831 = vadd.f32 %v909, %v3830
      %3832 = vmatmul.bf16.gmra.mxu0 %v1539
      %v3833 = vpop.f32.mrf.mxu0
      %v3834 = vadd.f32 %v911, %v3833
      %v3835 = vpop.f32.mrf.mxu0
      %v3836 = vadd.f32 %v913, %v3835
      %3837 = vmatmul.bf16.gmra.mxu0 %v1563
      %v3838 = vpop.f32.mrf.mxu0
      %v3839 = vadd.f32 %v915, %v3838
      %v3840 = vpop.f32.mrf.mxu0
      %v3841 = vadd.f32 %v917, %v3840
      %3842 = vmatmul.bf16.gmra.mxu0 %v1587
      %v3843 = vpop.f32.mrf.mxu0
      %v3844 = vadd.f32 %v919, %v3843
      %v3845 = vpop.f32.mrf.mxu0
      %v3846 = vadd.f32 %v921, %v3845
      %3847 = vmatmul.bf16.gmra.mxu0 %v1611
      %v3848 = vpop.f32.mrf.mxu0
      %v3849 = vadd.f32 %v923, %v3848
      %v3850 = vpop.f32.mrf.mxu0
      %v3851 = vadd.f32 %v925, %v3850
      %3852 = vmatmul.bf16.gmra.mxu0 %v1635
      %v3853 = vpop.f32.mrf.mxu0
      %v3854 = vadd.f32 %v927, %v3853
      %v3855 = vpop.f32.mrf.mxu0
      %v3856 = vadd.f32 %v929, %v3855
      %3857 = vmatmul.bf16.gmra.mxu0 %v1659
      %v3858 = vpop.f32.mrf.mxu0
      %v3859 = vadd.f32 %v931, %v3858
      %v3860 = vpop.f32.mrf.mxu0
      %v3861 = vadd.f32 %v933, %v3860
      %3862 = vmatmul.bf16.gmra.mxu0 %v1683
      %v3863 = vpop.f32.mrf.mxu0
      %v3864 = vadd.f32 %v935, %v3863
      %v3865 = vpop.f32.mrf.mxu0
      %v3866 = vadd.f32 %v937, %v3865
      %3867 = vdwg.mxu0
      %3868 = vmatpush.bf16.msra.mxu0 %v3081
      %3869 = vmatpush.bf16.msra.mxu0 %v3079
      %3870 = vmatpush.bf16.msra.mxu0 %v3077
      %3871 = vmatpush.bf16.msra.mxu0 %v3075
      %3872 = vmatpush.bf16.msra.mxu0 %v3073
      %3873 = vmatpush.bf16.msra.mxu0 %v3071
      %3874 = vmatpush.bf16.msra.mxu0 %v3069
      %3875 = vmatpush.bf16.msra.mxu0 %v3067
      %3876 = vmatmul.bf16.gmra.mxu0 %v1516
      %v3877 = vpop.f32.mrf.mxu0
      %v3878 = vadd.f32 %v3829, %v3877
      %v3879 = vpop.f32.mrf.mxu0
      %v3880 = vadd.f32 %v3831, %v3879
      %3881 = vmatmul.bf16.gmra.mxu0 %v1540
      %v3882 = vpop.f32.mrf.mxu0
      %v3883 = vadd.f32 %v3834, %v3882
      %v3884 = vpop.f32.mrf.mxu0
      %v3885 = vadd.f32 %v3836, %v3884
      %3886 = vmatmul.bf16.gmra.mxu0 %v1564
      %v3887 = vpop.f32.mrf.mxu0
      %v3888 = vadd.f32 %v3839, %v3887
      %v3889 = vpop.f32.mrf.mxu0
      %v3890 = vadd.f32 %v3841, %v3889
      %3891 = vmatmul.bf16.gmra.mxu0 %v1588
      %v3892 = vpop.f32.mrf.mxu0
      %v3893 = vadd.f32 %v3844, %v3892
      %v3894 = vpop.f32.mrf.mxu0
      %v3895 = vadd.f32 %v3846, %v3894
      %3896 = vmatmul.bf16.gmra.mxu0 %v1612
      %v3897 = vpop.f32.mrf.mxu0
      %v3898 = vadd.f32 %v3849, %v3897
      %v3899 = vpop.f32.mrf.mxu0
      %v3900 = vadd.f32 %v3851, %v3899
      %3901 = vmatmul.bf16.gmra.mxu0 %v1636
      %v3902 = vpop.f32.mrf.mxu0
      %v3903 = vadd.f32 %v3854, %v3902
      %v3904 = vpop.f32.mrf.mxu0
      %v3905 = vadd.f32 %v3856, %v3904
      %3906 = vmatmul.bf16.gmra.mxu0 %v1660
      %v3907 = vpop.f32.mrf.mxu0
      %v3908 = vadd.f32 %v3859, %v3907
      %v3909 = vpop.f32.mrf.mxu0
      %v3910 = vadd.f32 %v3861, %v3909
      %3911 = vmatmul.bf16.gmra.mxu0 %v1684
      %v3912 = vpop.f32.mrf.mxu0
      %v3913 = vadd.f32 %v3864, %v3912
      %v3914 = vpop.f32.mrf.mxu0
      %v3915 = vadd.f32 %v3866, %v3914
      %3916 = vdwg.mxu0
      %3917 = vmatpush.bf16.msra.mxu0 %v3097
      %3918 = vmatpush.bf16.msra.mxu0 %v3095
      %3919 = vmatpush.bf16.msra.mxu0 %v3093
      %3920 = vmatpush.bf16.msra.mxu0 %v3091
      %3921 = vmatpush.bf16.msra.mxu0 %v3089
      %3922 = vmatpush.bf16.msra.mxu0 %v3087
      %3923 = vmatpush.bf16.msra.mxu0 %v3085
      %3924 = vmatpush.bf16.msra.mxu0 %v3083
      %3925 = vmatmul.bf16.gmra.mxu0 %v1517
      %v3926 = vpop.f32.mrf.mxu0
      %v3927 = vadd.f32 %v3878, %v3926
      %v3928 = vpop.f32.mrf.mxu0
      %v3929 = vadd.f32 %v3880, %v3928
      %3930 = vmatmul.bf16.gmra.mxu0 %v1541
      %v3931 = vpop.f32.mrf.mxu0
      %v3932 = vadd.f32 %v3883, %v3931
      %v3933 = vpop.f32.mrf.mxu0
      %v3934 = vadd.f32 %v3885, %v3933
      %3935 = vmatmul.bf16.gmra.mxu0 %v1565
      %v3936 = vpop.f32.mrf.mxu0
      %v3937 = vadd.f32 %v3888, %v3936
      %v3938 = vpop.f32.mrf.mxu0
      %v3939 = vadd.f32 %v3890, %v3938
      %3940 = vmatmul.bf16.gmra.mxu0 %v1589
      %v3941 = vpop.f32.mrf.mxu0
      %v3942 = vadd.f32 %v3893, %v3941
      %v3943 = vpop.f32.mrf.mxu0
      %v3944 = vadd.f32 %v3895, %v3943
      %3945 = vmatmul.bf16.gmra.mxu0 %v1613
      %v3946 = vpop.f32.mrf.mxu0
      %v3947 = vadd.f32 %v3898, %v3946
      %v3948 = vpop.f32.mrf.mxu0
      %v3949 = vadd.f32 %v3900, %v3948
      %3950 = vmatmul.bf16.gmra.mxu0 %v1637
      %v3951 = vpop.f32.mrf.mxu0
      %v3952 = vadd.f32 %v3903, %v3951
      %v3953 = vpop.f32.mrf.mxu0
      %v3954 = vadd.f32 %v3905, %v3953
      %3955 = vmatmul.bf16.gmra.mxu0 %v1661
      %v3956 = vpop.f32.mrf.mxu0
      %v3957 = vadd.f32 %v3908, %v3956
      %v3958 = vpop.f32.mrf.mxu0
      %v3959 = vadd.f32 %v3910, %v3958
      %3960 = vmatmul.bf16.gmra.mxu0 %v1685
      %v3961 = vpop.f32.mrf.mxu0
      %v3962 = vadd.f32 %v3913, %v3961
      %v3963 = vpop.f32.mrf.mxu0
      %v3964 = vadd.f32 %v3915, %v3963
      %3965 = vdwg.mxu0
      %3966 = vmatpush.bf16.msra.mxu0 %v3113
      %3967 = vmatpush.bf16.msra.mxu0 %v3111
      %3968 = vmatpush.bf16.msra.mxu0 %v3109
      %3969 = vmatpush.bf16.msra.mxu0 %v3107
      %3970 = vmatpush.bf16.msra.mxu0 %v3105
      %3971 = vmatpush.bf16.msra.mxu0 %v3103
      %3972 = vmatpush.bf16.msra.mxu0 %v3101
      %3973 = vmatpush.bf16.msra.mxu0 %v3099
      %3974 = vmatmul.bf16.gmra.mxu0 %v1518
      %v3975 = vpop.f32.mrf.mxu0
      %v3976 = vadd.f32 %v3927, %v3975
      %v3977 = vpop.f32.mrf.mxu0
      %v3978 = vadd.f32 %v3929, %v3977
      %3979 = vmatmul.bf16.gmra.mxu0 %v1542
      %v3980 = vpop.f32.mrf.mxu0
      %v3981 = vadd.f32 %v3932, %v3980
      %v3982 = vpop.f32.mrf.mxu0
      %v3983 = vadd.f32 %v3934, %v3982
      %3984 = vmatmul.bf16.gmra.mxu0 %v1566
      %v3985 = vpop.f32.mrf.mxu0
      %v3986 = vadd.f32 %v3937, %v3985
      %v3987 = vpop.f32.mrf.mxu0
      %v3988 = vadd.f32 %v3939, %v3987
      %3989 = vmatmul.bf16.gmra.mxu0 %v1590
      %v3990 = vpop.f32.mrf.mxu0
      %v3991 = vadd.f32 %v3942, %v3990
      %v3992 = vpop.f32.mrf.mxu0
      %v3993 = vadd.f32 %v3944, %v3992
      %3994 = vmatmul.bf16.gmra.mxu0 %v1614
      %v3995 = vpop.f32.mrf.mxu0
      %v3996 = vadd.f32 %v3947, %v3995
      %v3997 = vpop.f32.mrf.mxu0
      %v3998 = vadd.f32 %v3949, %v3997
      %3999 = vmatmul.bf16.gmra.mxu0 %v1638
      %v4000 = vpop.f32.mrf.mxu0
      %v4001 = vadd.f32 %v3952, %v4000
      %v4002 = vpop.f32.mrf.mxu0
      %v4003 = vadd.f32 %v3954, %v4002
      %4004 = vmatmul.bf16.gmra.mxu0 %v1662
      %v4005 = vpop.f32.mrf.mxu0
      %v4006 = vadd.f32 %v3957, %v4005
      %v4007 = vpop.f32.mrf.mxu0
      %v4008 = vadd.f32 %v3959, %v4007
      %4009 = vmatmul.bf16.gmra.mxu0 %v1686
      %v4010 = vpop.f32.mrf.mxu0
      %v4011 = vadd.f32 %v3962, %v4010
      %v4012 = vpop.f32.mrf.mxu0
      %v4013 = vadd.f32 %v3964, %v4012
      %4014 = vdwg.mxu0
      %4015 = vmatpush.bf16.msra.mxu0 %v3129
      %4016 = vmatpush.bf16.msra.mxu0 %v3127
      %4017 = vmatpush.bf16.msra.mxu0 %v3125
      %4018 = vmatpush.bf16.msra.mxu0 %v3123
      %4019 = vmatpush.bf16.msra.mxu0 %v3121
      %4020 = vmatpush.bf16.msra.mxu0 %v3119
      %4021 = vmatpush.bf16.msra.mxu0 %v3117
      %4022 = vmatpush.bf16.msra.mxu0 %v3115
      %4023 = vmatmul.bf16.gmra.mxu0 %v1519
      %v4024 = vpop.f32.mrf.mxu0
      %v4025 = vadd.f32 %v3976, %v4024
      %v4026 = vpop.f32.mrf.mxu0
      %v4027 = vadd.f32 %v3978, %v4026
      %4028 = vmatmul.bf16.gmra.mxu0 %v1543
      %v4029 = vpop.f32.mrf.mxu0
      %v4030 = vadd.f32 %v3981, %v4029
      %v4031 = vpop.f32.mrf.mxu0
      %v4032 = vadd.f32 %v3983, %v4031
      %4033 = vmatmul.bf16.gmra.mxu0 %v1567
      %v4034 = vpop.f32.mrf.mxu0
      %v4035 = vadd.f32 %v3986, %v4034
      %v4036 = vpop.f32.mrf.mxu0
      %v4037 = vadd.f32 %v3988, %v4036
      %4038 = vmatmul.bf16.gmra.mxu0 %v1591
      %v4039 = vpop.f32.mrf.mxu0
      %v4040 = vadd.f32 %v3991, %v4039
      %v4041 = vpop.f32.mrf.mxu0
      %v4042 = vadd.f32 %v3993, %v4041
      %4043 = vmatmul.bf16.gmra.mxu0 %v1615
      %v4044 = vpop.f32.mrf.mxu0
      %v4045 = vadd.f32 %v3996, %v4044
      %v4046 = vpop.f32.mrf.mxu0
      %v4047 = vadd.f32 %v3998, %v4046
      %4048 = vmatmul.bf16.gmra.mxu0 %v1639
      %v4049 = vpop.f32.mrf.mxu0
      %v4050 = vadd.f32 %v4001, %v4049
      %v4051 = vpop.f32.mrf.mxu0
      %v4052 = vadd.f32 %v4003, %v4051
      %4053 = vmatmul.bf16.gmra.mxu0 %v1663
      %v4054 = vpop.f32.mrf.mxu0
      %v4055 = vadd.f32 %v4006, %v4054
      %v4056 = vpop.f32.mrf.mxu0
      %v4057 = vadd.f32 %v4008, %v4056
      %4058 = vmatmul.bf16.gmra.mxu0 %v1687
      %v4059 = vpop.f32.mrf.mxu0
      %v4060 = vadd.f32 %v4011, %v4059
      %v4061 = vpop.f32.mrf.mxu0
      %v4062 = vadd.f32 %v4013, %v4061
      %4063 = vdwg.mxu0
      %4064 = vmatpush.bf16.msra.mxu0 %v3145
      %4065 = vmatpush.bf16.msra.mxu0 %v3143
      %4066 = vmatpush.bf16.msra.mxu0 %v3141
      %4067 = vmatpush.bf16.msra.mxu0 %v3139
      %4068 = vmatpush.bf16.msra.mxu0 %v3137
      %4069 = vmatpush.bf16.msra.mxu0 %v3135
      %4070 = vmatpush.bf16.msra.mxu0 %v3133
      %4071 = vmatpush.bf16.msra.mxu0 %v3131
      %4072 = vmatmul.bf16.gmra.mxu0 %v1520
      %v4073 = vpop.f32.mrf.mxu0
      %v4074 = vadd.f32 %v4025, %v4073
      %v4075 = vpop.f32.mrf.mxu0
      %v4076 = vadd.f32 %v4027, %v4075
      %4077 = vmatmul.bf16.gmra.mxu0 %v1544
      %v4078 = vpop.f32.mrf.mxu0
      %v4079 = vadd.f32 %v4030, %v4078
      %v4080 = vpop.f32.mrf.mxu0
      %v4081 = vadd.f32 %v4032, %v4080
      %4082 = vmatmul.bf16.gmra.mxu0 %v1568
      %v4083 = vpop.f32.mrf.mxu0
      %v4084 = vadd.f32 %v4035, %v4083
      %v4085 = vpop.f32.mrf.mxu0
      %v4086 = vadd.f32 %v4037, %v4085
      %4087 = vmatmul.bf16.gmra.mxu0 %v1592
      %v4088 = vpop.f32.mrf.mxu0
      %v4089 = vadd.f32 %v4040, %v4088
      %v4090 = vpop.f32.mrf.mxu0
      %v4091 = vadd.f32 %v4042, %v4090
      %4092 = vmatmul.bf16.gmra.mxu0 %v1616
      %v4093 = vpop.f32.mrf.mxu0
      %v4094 = vadd.f32 %v4045, %v4093
      %v4095 = vpop.f32.mrf.mxu0
      %v4096 = vadd.f32 %v4047, %v4095
      %4097 = vmatmul.bf16.gmra.mxu0 %v1640
      %v4098 = vpop.f32.mrf.mxu0
      %v4099 = vadd.f32 %v4050, %v4098
      %v4100 = vpop.f32.mrf.mxu0
      %v4101 = vadd.f32 %v4052, %v4100
      %4102 = vmatmul.bf16.gmra.mxu0 %v1664
      %v4103 = vpop.f32.mrf.mxu0
      %v4104 = vadd.f32 %v4055, %v4103
      %v4105 = vpop.f32.mrf.mxu0
      %v4106 = vadd.f32 %v4057, %v4105
      %4107 = vmatmul.bf16.gmra.mxu0 %v1688
      %v4108 = vpop.f32.mrf.mxu0
      %v4109 = vadd.f32 %v4060, %v4108
      %v4110 = vpop.f32.mrf.mxu0
      %v4111 = vadd.f32 %v4062, %v4110
      %4112 = vdwg.mxu0
      %4113 = vmatpush.bf16.msra.mxu0 %v3161
      %4114 = vmatpush.bf16.msra.mxu0 %v3159
      %4115 = vmatpush.bf16.msra.mxu0 %v3157
      %4116 = vmatpush.bf16.msra.mxu0 %v3155
      %4117 = vmatpush.bf16.msra.mxu0 %v3153
      %4118 = vmatpush.bf16.msra.mxu0 %v3151
      %4119 = vmatpush.bf16.msra.mxu0 %v3149
      %4120 = vmatpush.bf16.msra.mxu0 %v3147
      %4121 = vmatmul.bf16.gmra.mxu0 %v1521
      %v4122 = vpop.f32.mrf.mxu0
      %v4123 = vadd.f32 %v4074, %v4122
      %v4124 = vpop.f32.mrf.mxu0
      %v4125 = vadd.f32 %v4076, %v4124
      %4126 = vmatmul.bf16.gmra.mxu0 %v1545
      %v4127 = vpop.f32.mrf.mxu0
      %v4128 = vadd.f32 %v4079, %v4127
      %v4129 = vpop.f32.mrf.mxu0
      %v4130 = vadd.f32 %v4081, %v4129
      %4131 = vmatmul.bf16.gmra.mxu0 %v1569
      %v4132 = vpop.f32.mrf.mxu0
      %v4133 = vadd.f32 %v4084, %v4132
      %v4134 = vpop.f32.mrf.mxu0
      %v4135 = vadd.f32 %v4086, %v4134
      %4136 = vmatmul.bf16.gmra.mxu0 %v1593
      %v4137 = vpop.f32.mrf.mxu0
      %v4138 = vadd.f32 %v4089, %v4137
      %v4139 = vpop.f32.mrf.mxu0
      %v4140 = vadd.f32 %v4091, %v4139
      %4141 = vmatmul.bf16.gmra.mxu0 %v1617
      %v4142 = vpop.f32.mrf.mxu0
      %v4143 = vadd.f32 %v4094, %v4142
      %v4144 = vpop.f32.mrf.mxu0
      %v4145 = vadd.f32 %v4096, %v4144
      %4146 = vmatmul.bf16.gmra.mxu0 %v1641
      %v4147 = vpop.f32.mrf.mxu0
      %v4148 = vadd.f32 %v4099, %v4147
      %v4149 = vpop.f32.mrf.mxu0
      %v4150 = vadd.f32 %v4101, %v4149
      %4151 = vmatmul.bf16.gmra.mxu0 %v1665
      %v4152 = vpop.f32.mrf.mxu0
      %v4153 = vadd.f32 %v4104, %v4152
      %v4154 = vpop.f32.mrf.mxu0
      %v4155 = vadd.f32 %v4106, %v4154
      %4156 = vmatmul.bf16.gmra.mxu0 %v1689
      %v4157 = vpop.f32.mrf.mxu0
      %v4158 = vadd.f32 %v4109, %v4157
      %v4159 = vpop.f32.mrf.mxu0
      %v4160 = vadd.f32 %v4111, %v4159
      %4161 = vdwg.mxu0
      %4162 = vmatpush.bf16.msra.mxu0 %v3177
      %4163 = vmatpush.bf16.msra.mxu0 %v3175
      %4164 = vmatpush.bf16.msra.mxu0 %v3173
      %4165 = vmatpush.bf16.msra.mxu0 %v3171
      %4166 = vmatpush.bf16.msra.mxu0 %v3169
      %4167 = vmatpush.bf16.msra.mxu0 %v3167
      %4168 = vmatpush.bf16.msra.mxu0 %v3165
      %4169 = vmatpush.bf16.msra.mxu0 %v3163
      %4170 = vmatmul.bf16.gmra.mxu0 %v1522
      %v4171 = vpop.f32.mrf.mxu0
      %v4172 = vadd.f32 %v4123, %v4171
      %v4173 = vpop.f32.mrf.mxu0
      %v4174 = vadd.f32 %v4125, %v4173
      %4175 = vmatmul.bf16.gmra.mxu0 %v1546
      %v4176 = vpop.f32.mrf.mxu0
      %v4177 = vadd.f32 %v4128, %v4176
      %v4178 = vpop.f32.mrf.mxu0
      %v4179 = vadd.f32 %v4130, %v4178
      %4180 = vmatmul.bf16.gmra.mxu0 %v1570
      %v4181 = vpop.f32.mrf.mxu0
      %v4182 = vadd.f32 %v4133, %v4181
      %v4183 = vpop.f32.mrf.mxu0
      %v4184 = vadd.f32 %v4135, %v4183
      %4185 = vmatmul.bf16.gmra.mxu0 %v1594
      %v4186 = vpop.f32.mrf.mxu0
      %v4187 = vadd.f32 %v4138, %v4186
      %v4188 = vpop.f32.mrf.mxu0
      %v4189 = vadd.f32 %v4140, %v4188
      %4190 = vmatmul.bf16.gmra.mxu0 %v1618
      %v4191 = vpop.f32.mrf.mxu0
      %v4192 = vadd.f32 %v4143, %v4191
      %v4193 = vpop.f32.mrf.mxu0
      %v4194 = vadd.f32 %v4145, %v4193
      %4195 = vmatmul.bf16.gmra.mxu0 %v1642
      %v4196 = vpop.f32.mrf.mxu0
      %v4197 = vadd.f32 %v4148, %v4196
      %v4198 = vpop.f32.mrf.mxu0
      %v4199 = vadd.f32 %v4150, %v4198
      %4200 = vmatmul.bf16.gmra.mxu0 %v1666
      %v4201 = vpop.f32.mrf.mxu0
      %v4202 = vadd.f32 %v4153, %v4201
      %v4203 = vpop.f32.mrf.mxu0
      %v4204 = vadd.f32 %v4155, %v4203
      %4205 = vmatmul.bf16.gmra.mxu0 %v1690
      %v4206 = vpop.f32.mrf.mxu0
      %v4207 = vadd.f32 %v4158, %v4206
      %v4208 = vpop.f32.mrf.mxu0
      %v4209 = vadd.f32 %v4160, %v4208
      %4210 = vdwg.mxu0
      %4211 = vmatpush.bf16.msra.mxu0 %v3193
      %4212 = vmatpush.bf16.msra.mxu0 %v3191
      %4213 = vmatpush.bf16.msra.mxu0 %v3189
      %4214 = vmatpush.bf16.msra.mxu0 %v3187
      %4215 = vmatpush.bf16.msra.mxu0 %v3185
      %4216 = vmatpush.bf16.msra.mxu0 %v3183
      %4217 = vmatpush.bf16.msra.mxu0 %v3181
      %4218 = vmatpush.bf16.msra.mxu0 %v3179
      %4219 = vmatmul.bf16.gmra.mxu0 %v1523
      %v4220 = vpop.f32.mrf.mxu0
      %v4221 = vadd.f32 %v4172, %v4220
      %v4222 = vpop.f32.mrf.mxu0
      %v4223 = vadd.f32 %v4174, %v4222
      %4224 = vmatmul.bf16.gmra.mxu0 %v1547
      %v4225 = vpop.f32.mrf.mxu0
      %v4226 = vadd.f32 %v4177, %v4225
      %v4227 = vpop.f32.mrf.mxu0
      %v4228 = vadd.f32 %v4179, %v4227
      %4229 = vmatmul.bf16.gmra.mxu0 %v1571
      %v4230 = vpop.f32.mrf.mxu0
      %v4231 = vadd.f32 %v4182, %v4230
      %v4232 = vpop.f32.mrf.mxu0
      %v4233 = vadd.f32 %v4184, %v4232
      %4234 = vmatmul.bf16.gmra.mxu0 %v1595
      %v4235 = vpop.f32.mrf.mxu0
      %v4236 = vadd.f32 %v4187, %v4235
      %v4237 = vpop.f32.mrf.mxu0
      %v4238 = vadd.f32 %v4189, %v4237
      %4239 = vmatmul.bf16.gmra.mxu0 %v1619
      %v4240 = vpop.f32.mrf.mxu0
      %v4241 = vadd.f32 %v4192, %v4240
      %v4242 = vpop.f32.mrf.mxu0
      %v4243 = vadd.f32 %v4194, %v4242
      %4244 = vmatmul.bf16.gmra.mxu0 %v1643
      %v4245 = vpop.f32.mrf.mxu0
      %v4246 = vadd.f32 %v4197, %v4245
      %v4247 = vpop.f32.mrf.mxu0
      %v4248 = vadd.f32 %v4199, %v4247
      %4249 = vmatmul.bf16.gmra.mxu0 %v1667
      %v4250 = vpop.f32.mrf.mxu0
      %v4251 = vadd.f32 %v4202, %v4250
      %v4252 = vpop.f32.mrf.mxu0
      %v4253 = vadd.f32 %v4204, %v4252
      %4254 = vmatmul.bf16.gmra.mxu0 %v1691
      %v4255 = vpop.f32.mrf.mxu0
      %v4256 = vadd.f32 %v4207, %v4255
      %v4257 = vpop.f32.mrf.mxu0
      %v4258 = vadd.f32 %v4209, %v4257
      %4259 = vdwg.mxu0
      %4260 = vmatpush.bf16.msra.mxu0 %v3209
      %4261 = vmatpush.bf16.msra.mxu0 %v3207
      %4262 = vmatpush.bf16.msra.mxu0 %v3205
      %4263 = vmatpush.bf16.msra.mxu0 %v3203
      %4264 = vmatpush.bf16.msra.mxu0 %v3201
      %4265 = vmatpush.bf16.msra.mxu0 %v3199
      %4266 = vmatpush.bf16.msra.mxu0 %v3197
      %4267 = vmatpush.bf16.msra.mxu0 %v3195
      %4268 = vmatmul.bf16.gmra.mxu0 %v1524
      %v4269 = vpop.f32.mrf.mxu0
      %v4270 = vadd.f32 %v4221, %v4269
      %v4271 = vpop.f32.mrf.mxu0
      %v4272 = vadd.f32 %v4223, %v4271
      %4273 = vmatmul.bf16.gmra.mxu0 %v1548
      %v4274 = vpop.f32.mrf.mxu0
      %v4275 = vadd.f32 %v4226, %v4274
      %v4276 = vpop.f32.mrf.mxu0
      %v4277 = vadd.f32 %v4228, %v4276
      %4278 = vmatmul.bf16.gmra.mxu0 %v1572
      %v4279 = vpop.f32.mrf.mxu0
      %v4280 = vadd.f32 %v4231, %v4279
      %v4281 = vpop.f32.mrf.mxu0
      %v4282 = vadd.f32 %v4233, %v4281
      %4283 = vmatmul.bf16.gmra.mxu0 %v1596
      %v4284 = vpop.f32.mrf.mxu0
      %v4285 = vadd.f32 %v4236, %v4284
      %v4286 = vpop.f32.mrf.mxu0
      %v4287 = vadd.f32 %v4238, %v4286
      %4288 = vmatmul.bf16.gmra.mxu0 %v1620
      %v4289 = vpop.f32.mrf.mxu0
      %v4290 = vadd.f32 %v4241, %v4289
      %v4291 = vpop.f32.mrf.mxu0
      %v4292 = vadd.f32 %v4243, %v4291
      %4293 = vmatmul.bf16.gmra.mxu0 %v1644
      %v4294 = vpop.f32.mrf.mxu0
      %v4295 = vadd.f32 %v4246, %v4294
      %v4296 = vpop.f32.mrf.mxu0
      %v4297 = vadd.f32 %v4248, %v4296
      %4298 = vmatmul.bf16.gmra.mxu0 %v1668
      %v4299 = vpop.f32.mrf.mxu0
      %v4300 = vadd.f32 %v4251, %v4299
      %v4301 = vpop.f32.mrf.mxu0
      %v4302 = vadd.f32 %v4253, %v4301
      %4303 = vmatmul.bf16.gmra.mxu0 %v1692
      %v4304 = vpop.f32.mrf.mxu0
      %v4305 = vadd.f32 %v4256, %v4304
      %v4306 = vpop.f32.mrf.mxu0
      %v4307 = vadd.f32 %v4258, %v4306
      %4308 = vdwg.mxu0
      %4309 = vmatpush.bf16.msra.mxu0 %v3225
      %4310 = vmatpush.bf16.msra.mxu0 %v3223
      %4311 = vmatpush.bf16.msra.mxu0 %v3221
      %4312 = vmatpush.bf16.msra.mxu0 %v3219
      %4313 = vmatpush.bf16.msra.mxu0 %v3217
      %4314 = vmatpush.bf16.msra.mxu0 %v3215
      %4315 = vmatpush.bf16.msra.mxu0 %v3213
      %4316 = vmatpush.bf16.msra.mxu0 %v3211
      %4317 = vmatmul.bf16.gmra.mxu0 %v1525
      %v4318 = vpop.f32.mrf.mxu0
      %v4319 = vadd.f32 %v4270, %v4318
      %v4320 = vpop.f32.mrf.mxu0
      %v4321 = vadd.f32 %v4272, %v4320
      %4322 = vmatmul.bf16.gmra.mxu0 %v1549
      %v4323 = vpop.f32.mrf.mxu0
      %v4324 = vadd.f32 %v4275, %v4323
      %v4325 = vpop.f32.mrf.mxu0
      %v4326 = vadd.f32 %v4277, %v4325
      %4327 = vmatmul.bf16.gmra.mxu0 %v1573
      %v4328 = vpop.f32.mrf.mxu0
      %v4329 = vadd.f32 %v4280, %v4328
      %v4330 = vpop.f32.mrf.mxu0
      %v4331 = vadd.f32 %v4282, %v4330
      %4332 = vmatmul.bf16.gmra.mxu0 %v1597
      %v4333 = vpop.f32.mrf.mxu0
      %v4334 = vadd.f32 %v4285, %v4333
      %v4335 = vpop.f32.mrf.mxu0
      %v4336 = vadd.f32 %v4287, %v4335
      %4337 = vmatmul.bf16.gmra.mxu0 %v1621
      %v4338 = vpop.f32.mrf.mxu0
      %v4339 = vadd.f32 %v4290, %v4338
      %v4340 = vpop.f32.mrf.mxu0
      %v4341 = vadd.f32 %v4292, %v4340
      %4342 = vmatmul.bf16.gmra.mxu0 %v1645
      %v4343 = vpop.f32.mrf.mxu0
      %v4344 = vadd.f32 %v4295, %v4343
      %v4345 = vpop.f32.mrf.mxu0
      %v4346 = vadd.f32 %v4297, %v4345
      %4347 = vmatmul.bf16.gmra.mxu0 %v1669
      %v4348 = vpop.f32.mrf.mxu0
      %v4349 = vadd.f32 %v4300, %v4348
      %v4350 = vpop.f32.mrf.mxu0
      %v4351 = vadd.f32 %v4302, %v4350
      %4352 = vmatmul.bf16.gmra.mxu0 %v1693
      %v4353 = vpop.f32.mrf.mxu0
      %v4354 = vadd.f32 %v4305, %v4353
      %v4355 = vpop.f32.mrf.mxu0
      %v4356 = vadd.f32 %v4307, %v4355
      %4357 = vdwg.mxu0
      %4358 = vmatpush.bf16.msra.mxu0 %v3241
      %4359 = vmatpush.bf16.msra.mxu0 %v3239
      %4360 = vmatpush.bf16.msra.mxu0 %v3237
      %4361 = vmatpush.bf16.msra.mxu0 %v3235
      %4362 = vmatpush.bf16.msra.mxu0 %v3233
      %4363 = vmatpush.bf16.msra.mxu0 %v3231
      %4364 = vmatpush.bf16.msra.mxu0 %v3229
      %4365 = vmatpush.bf16.msra.mxu0 %v3227
      %4366 = vmatmul.bf16.gmra.mxu0 %v1526
      %v4367 = vpop.f32.mrf.mxu0
      %v4368 = vadd.f32 %v4319, %v4367
      %v4369 = vpop.f32.mrf.mxu0
      %v4370 = vadd.f32 %v4321, %v4369
      %4371 = vmatmul.bf16.gmra.mxu0 %v1550
      %v4372 = vpop.f32.mrf.mxu0
      %v4373 = vadd.f32 %v4324, %v4372
      %v4374 = vpop.f32.mrf.mxu0
      %v4375 = vadd.f32 %v4326, %v4374
      %4376 = vmatmul.bf16.gmra.mxu0 %v1574
      %v4377 = vpop.f32.mrf.mxu0
      %v4378 = vadd.f32 %v4329, %v4377
      %v4379 = vpop.f32.mrf.mxu0
      %v4380 = vadd.f32 %v4331, %v4379
      %4381 = vmatmul.bf16.gmra.mxu0 %v1598
      %v4382 = vpop.f32.mrf.mxu0
      %v4383 = vadd.f32 %v4334, %v4382
      %v4384 = vpop.f32.mrf.mxu0
      %v4385 = vadd.f32 %v4336, %v4384
      %4386 = vmatmul.bf16.gmra.mxu0 %v1622
      %v4387 = vpop.f32.mrf.mxu0
      %v4388 = vadd.f32 %v4339, %v4387
      %v4389 = vpop.f32.mrf.mxu0
      %v4390 = vadd.f32 %v4341, %v4389
      %4391 = vmatmul.bf16.gmra.mxu0 %v1646
      %v4392 = vpop.f32.mrf.mxu0
      %v4393 = vadd.f32 %v4344, %v4392
      %v4394 = vpop.f32.mrf.mxu0
      %v4395 = vadd.f32 %v4346, %v4394
      %4396 = vmatmul.bf16.gmra.mxu0 %v1670
      %v4397 = vpop.f32.mrf.mxu0
      %v4398 = vadd.f32 %v4349, %v4397
      %v4399 = vpop.f32.mrf.mxu0
      %v4400 = vadd.f32 %v4351, %v4399
      %4401 = vmatmul.bf16.gmra.mxu0 %v1694
      %v4402 = vpop.f32.mrf.mxu0
      %v4403 = vadd.f32 %v4354, %v4402
      %v4404 = vpop.f32.mrf.mxu0
      %v4405 = vadd.f32 %v4356, %v4404
      %4406 = vdwg.mxu0
      %4407 = vmatpush.bf16.msra.mxu0 %v3257
      %4408 = vmatpush.bf16.msra.mxu0 %v3255
      %4409 = vmatpush.bf16.msra.mxu0 %v3253
      %4410 = vmatpush.bf16.msra.mxu0 %v3251
      %4411 = vmatpush.bf16.msra.mxu0 %v3249
      %4412 = vmatpush.bf16.msra.mxu0 %v3247
      %4413 = vmatpush.bf16.msra.mxu0 %v3245
      %4414 = vmatpush.bf16.msra.mxu0 %v3243
      %4415 = vmatmul.bf16.gmra.mxu0 %v1527
      %v4416 = vpop.f32.mrf.mxu0
      %v4417 = vadd.f32 %v4368, %v4416
      %v4418 = vpop.f32.mrf.mxu0
      %v4419 = vadd.f32 %v4370, %v4418
      %4420 = vmatmul.bf16.gmra.mxu0 %v1551
      %v4421 = vpop.f32.mrf.mxu0
      %v4422 = vadd.f32 %v4373, %v4421
      %v4423 = vpop.f32.mrf.mxu0
      %v4424 = vadd.f32 %v4375, %v4423
      %4425 = vmatmul.bf16.gmra.mxu0 %v1575
      %v4426 = vpop.f32.mrf.mxu0
      %v4427 = vadd.f32 %v4378, %v4426
      %v4428 = vpop.f32.mrf.mxu0
      %v4429 = vadd.f32 %v4380, %v4428
      %4430 = vmatmul.bf16.gmra.mxu0 %v1599
      %v4431 = vpop.f32.mrf.mxu0
      %v4432 = vadd.f32 %v4383, %v4431
      %v4433 = vpop.f32.mrf.mxu0
      %v4434 = vadd.f32 %v4385, %v4433
      %4435 = vmatmul.bf16.gmra.mxu0 %v1623
      %v4436 = vpop.f32.mrf.mxu0
      %v4437 = vadd.f32 %v4388, %v4436
      %v4438 = vpop.f32.mrf.mxu0
      %v4439 = vadd.f32 %v4390, %v4438
      %4440 = vmatmul.bf16.gmra.mxu0 %v1647
      %v4441 = vpop.f32.mrf.mxu0
      %v4442 = vadd.f32 %v4393, %v4441
      %v4443 = vpop.f32.mrf.mxu0
      %v4444 = vadd.f32 %v4395, %v4443
      %4445 = vmatmul.bf16.gmra.mxu0 %v1671
      %v4446 = vpop.f32.mrf.mxu0
      %v4447 = vadd.f32 %v4398, %v4446
      %v4448 = vpop.f32.mrf.mxu0
      %v4449 = vadd.f32 %v4400, %v4448
      %4450 = vmatmul.bf16.gmra.mxu0 %v1695
      %v4451 = vpop.f32.mrf.mxu0
      %v4452 = vadd.f32 %v4403, %v4451
      %v4453 = vpop.f32.mrf.mxu0
      %v4454 = vadd.f32 %v4405, %v4453
      %4455 = vdwg.mxu0
      %4456 = vmatpush.bf16.msra.mxu0 %v3273
      %4457 = vmatpush.bf16.msra.mxu0 %v3271
      %4458 = vmatpush.bf16.msra.mxu0 %v3269
      %4459 = vmatpush.bf16.msra.mxu0 %v3267
      %4460 = vmatpush.bf16.msra.mxu0 %v3265
      %4461 = vmatpush.bf16.msra.mxu0 %v3263
      %4462 = vmatpush.bf16.msra.mxu0 %v3261
      %4463 = vmatpush.bf16.msra.mxu0 %v3259
      %4464 = vmatmul.bf16.gmra.mxu0 %v1528
      %v4465 = vpop.f32.mrf.mxu0
      %v4466 = vadd.f32 %v4417, %v4465
      %v4467 = vpop.f32.mrf.mxu0
      %v4468 = vadd.f32 %v4419, %v4467
      %4469 = vmatmul.bf16.gmra.mxu0 %v1552
      %v4470 = vpop.f32.mrf.mxu0
      %v4471 = vadd.f32 %v4422, %v4470
      %v4472 = vpop.f32.mrf.mxu0
      %v4473 = vadd.f32 %v4424, %v4472
      %4474 = vmatmul.bf16.gmra.mxu0 %v1576
      %v4475 = vpop.f32.mrf.mxu0
      %v4476 = vadd.f32 %v4427, %v4475
      %v4477 = vpop.f32.mrf.mxu0
      %v4478 = vadd.f32 %v4429, %v4477
      %4479 = vmatmul.bf16.gmra.mxu0 %v1600
      %v4480 = vpop.f32.mrf.mxu0
      %v4481 = vadd.f32 %v4432, %v4480
      %v4482 = vpop.f32.mrf.mxu0
      %v4483 = vadd.f32 %v4434, %v4482
      %4484 = vmatmul.bf16.gmra.mxu0 %v1624
      %v4485 = vpop.f32.mrf.mxu0
      %v4486 = vadd.f32 %v4437, %v4485
      %v4487 = vpop.f32.mrf.mxu0
      %v4488 = vadd.f32 %v4439, %v4487
      %4489 = vmatmul.bf16.gmra.mxu0 %v1648
      %v4490 = vpop.f32.mrf.mxu0
      %v4491 = vadd.f32 %v4442, %v4490
      %v4492 = vpop.f32.mrf.mxu0
      %v4493 = vadd.f32 %v4444, %v4492
      %4494 = vmatmul.bf16.gmra.mxu0 %v1672
      %v4495 = vpop.f32.mrf.mxu0
      %v4496 = vadd.f32 %v4447, %v4495
      %v4497 = vpop.f32.mrf.mxu0
      %v4498 = vadd.f32 %v4449, %v4497
      %4499 = vmatmul.bf16.gmra.mxu0 %v1696
      %v4500 = vpop.f32.mrf.mxu0
      %v4501 = vadd.f32 %v4452, %v4500
      %v4502 = vpop.f32.mrf.mxu0
      %v4503 = vadd.f32 %v4454, %v4502
      %4504 = vdwg.mxu0
      %4505 = vmatpush.bf16.msra.mxu0 %v3289
      %4506 = vmatpush.bf16.msra.mxu0 %v3287
      %4507 = vmatpush.bf16.msra.mxu0 %v3285
      %4508 = vmatpush.bf16.msra.mxu0 %v3283
      %4509 = vmatpush.bf16.msra.mxu0 %v3281
      %4510 = vmatpush.bf16.msra.mxu0 %v3279
      %4511 = vmatpush.bf16.msra.mxu0 %v3277
      %4512 = vmatpush.bf16.msra.mxu0 %v3275
      %4513 = vmatmul.bf16.gmra.mxu0 %v1529
      %v4514 = vpop.f32.mrf.mxu0
      %v4515 = vadd.f32 %v4466, %v4514
      %v4516 = vpop.f32.mrf.mxu0
      %v4517 = vadd.f32 %v4468, %v4516
      %4518 = vmatmul.bf16.gmra.mxu0 %v1553
      %v4519 = vpop.f32.mrf.mxu0
      %v4520 = vadd.f32 %v4471, %v4519
      %v4521 = vpop.f32.mrf.mxu0
      %v4522 = vadd.f32 %v4473, %v4521
      %4523 = vmatmul.bf16.gmra.mxu0 %v1577
      %v4524 = vpop.f32.mrf.mxu0
      %v4525 = vadd.f32 %v4476, %v4524
      %v4526 = vpop.f32.mrf.mxu0
      %v4527 = vadd.f32 %v4478, %v4526
      %4528 = vmatmul.bf16.gmra.mxu0 %v1601
      %v4529 = vpop.f32.mrf.mxu0
      %v4530 = vadd.f32 %v4481, %v4529
      %v4531 = vpop.f32.mrf.mxu0
      %v4532 = vadd.f32 %v4483, %v4531
      %4533 = vmatmul.bf16.gmra.mxu0 %v1625
      %v4534 = vpop.f32.mrf.mxu0
      %v4535 = vadd.f32 %v4486, %v4534
      %v4536 = vpop.f32.mrf.mxu0
      %v4537 = vadd.f32 %v4488, %v4536
      %4538 = vmatmul.bf16.gmra.mxu0 %v1649
      %v4539 = vpop.f32.mrf.mxu0
      %v4540 = vadd.f32 %v4491, %v4539
      %v4541 = vpop.f32.mrf.mxu0
      %v4542 = vadd.f32 %v4493, %v4541
      %4543 = vmatmul.bf16.gmra.mxu0 %v1673
      %v4544 = vpop.f32.mrf.mxu0
      %v4545 = vadd.f32 %v4496, %v4544
      %v4546 = vpop.f32.mrf.mxu0
      %v4547 = vadd.f32 %v4498, %v4546
      %4548 = vmatmul.bf16.gmra.mxu0 %v1697
      %v4549 = vpop.f32.mrf.mxu0
      %v4550 = vadd.f32 %v4501, %v4549
      %v4551 = vpop.f32.mrf.mxu0
      %v4552 = vadd.f32 %v4503, %v4551
      %4553 = vdwg.mxu0
      %4554 = vmatpush.bf16.msra.mxu0 %v3305
      %4555 = vmatpush.bf16.msra.mxu0 %v3303
      %4556 = vmatpush.bf16.msra.mxu0 %v3301
      %4557 = vmatpush.bf16.msra.mxu0 %v3299
      %4558 = vmatpush.bf16.msra.mxu0 %v3297
      %4559 = vmatpush.bf16.msra.mxu0 %v3295
      %4560 = vmatpush.bf16.msra.mxu0 %v3293
      %4561 = vmatpush.bf16.msra.mxu0 %v3291
      %4562 = vmatmul.bf16.gmra.mxu0 %v1530
      %v4563 = vpop.f32.mrf.mxu0
      %v4564 = vadd.f32 %v4515, %v4563
      %v4565 = vpop.f32.mrf.mxu0
      %v4566 = vadd.f32 %v4517, %v4565
      %4567 = vmatmul.bf16.gmra.mxu0 %v1554
      %v4568 = vpop.f32.mrf.mxu0
      %v4569 = vadd.f32 %v4520, %v4568
      %v4570 = vpop.f32.mrf.mxu0
      %v4571 = vadd.f32 %v4522, %v4570
      %4572 = vmatmul.bf16.gmra.mxu0 %v1578
      %v4573 = vpop.f32.mrf.mxu0
      %v4574 = vadd.f32 %v4525, %v4573
      %v4575 = vpop.f32.mrf.mxu0
      %v4576 = vadd.f32 %v4527, %v4575
      %4577 = vmatmul.bf16.gmra.mxu0 %v1602
      %v4578 = vpop.f32.mrf.mxu0
      %v4579 = vadd.f32 %v4530, %v4578
      %v4580 = vpop.f32.mrf.mxu0
      %v4581 = vadd.f32 %v4532, %v4580
      %4582 = vmatmul.bf16.gmra.mxu0 %v1626
      %v4583 = vpop.f32.mrf.mxu0
      %v4584 = vadd.f32 %v4535, %v4583
      %v4585 = vpop.f32.mrf.mxu0
      %v4586 = vadd.f32 %v4537, %v4585
      %4587 = vmatmul.bf16.gmra.mxu0 %v1650
      %v4588 = vpop.f32.mrf.mxu0
      %v4589 = vadd.f32 %v4540, %v4588
      %v4590 = vpop.f32.mrf.mxu0
      %v4591 = vadd.f32 %v4542, %v4590
      %4592 = vmatmul.bf16.gmra.mxu0 %v1674
      %v4593 = vpop.f32.mrf.mxu0
      %v4594 = vadd.f32 %v4545, %v4593
      %v4595 = vpop.f32.mrf.mxu0
      %v4596 = vadd.f32 %v4547, %v4595
      %4597 = vmatmul.bf16.gmra.mxu0 %v1698
      %v4598 = vpop.f32.mrf.mxu0
      %v4599 = vadd.f32 %v4550, %v4598
      %v4600 = vpop.f32.mrf.mxu0
      %v4601 = vadd.f32 %v4552, %v4600
      %4602 = vdwg.mxu0
      %4603 = vmatpush.bf16.msra.mxu0 %v3321
      %4604 = vmatpush.bf16.msra.mxu0 %v3319
      %4605 = vmatpush.bf16.msra.mxu0 %v3317
      %4606 = vmatpush.bf16.msra.mxu0 %v3315
      %4607 = vmatpush.bf16.msra.mxu0 %v3313
      %4608 = vmatpush.bf16.msra.mxu0 %v3311
      %4609 = vmatpush.bf16.msra.mxu0 %v3309
      %4610 = vmatpush.bf16.msra.mxu0 %v3307
      %4611 = vmatmul.bf16.gmra.mxu0 %v1531
      %v4612 = vpop.f32.mrf.mxu0
      %v4613 = vadd.f32 %v4564, %v4612
      %v4614 = vpop.f32.mrf.mxu0
      %v4615 = vadd.f32 %v4566, %v4614
      %4616 = vmatmul.bf16.gmra.mxu0 %v1555
      %v4617 = vpop.f32.mrf.mxu0
      %v4618 = vadd.f32 %v4569, %v4617
      %v4619 = vpop.f32.mrf.mxu0
      %v4620 = vadd.f32 %v4571, %v4619
      %4621 = vmatmul.bf16.gmra.mxu0 %v1579
      %v4622 = vpop.f32.mrf.mxu0
      %v4623 = vadd.f32 %v4574, %v4622
      %v4624 = vpop.f32.mrf.mxu0
      %v4625 = vadd.f32 %v4576, %v4624
      %4626 = vmatmul.bf16.gmra.mxu0 %v1603
      %v4627 = vpop.f32.mrf.mxu0
      %v4628 = vadd.f32 %v4579, %v4627
      %v4629 = vpop.f32.mrf.mxu0
      %v4630 = vadd.f32 %v4581, %v4629
      %4631 = vmatmul.bf16.gmra.mxu0 %v1627
      %v4632 = vpop.f32.mrf.mxu0
      %v4633 = vadd.f32 %v4584, %v4632
      %v4634 = vpop.f32.mrf.mxu0
      %v4635 = vadd.f32 %v4586, %v4634
      %4636 = vmatmul.bf16.gmra.mxu0 %v1651
      %v4637 = vpop.f32.mrf.mxu0
      %v4638 = vadd.f32 %v4589, %v4637
      %v4639 = vpop.f32.mrf.mxu0
      %v4640 = vadd.f32 %v4591, %v4639
      %4641 = vmatmul.bf16.gmra.mxu0 %v1675
      %v4642 = vpop.f32.mrf.mxu0
      %v4643 = vadd.f32 %v4594, %v4642
      %v4644 = vpop.f32.mrf.mxu0
      %v4645 = vadd.f32 %v4596, %v4644
      %4646 = vmatmul.bf16.gmra.mxu0 %v1699
      %v4647 = vpop.f32.mrf.mxu0
      %v4648 = vadd.f32 %v4599, %v4647
      %v4649 = vpop.f32.mrf.mxu0
      %v4650 = vadd.f32 %v4601, %v4649
      %4651 = vdwg.mxu0
      %4652 = vmatpush.bf16.msra.mxu0 %v3337
      %4653 = vmatpush.bf16.msra.mxu0 %v3335
      %4654 = vmatpush.bf16.msra.mxu0 %v3333
      %4655 = vmatpush.bf16.msra.mxu0 %v3331
      %4656 = vmatpush.bf16.msra.mxu0 %v3329
      %4657 = vmatpush.bf16.msra.mxu0 %v3327
      %4658 = vmatpush.bf16.msra.mxu0 %v3325
      %4659 = vmatpush.bf16.msra.mxu0 %v3323
      %4660 = vmatmul.bf16.gmra.mxu0 %v1532
      %v4661 = vpop.f32.mrf.mxu0
      %v4662 = vadd.f32 %v4613, %v4661
      %v4663 = vpop.f32.mrf.mxu0
      %v4664 = vadd.f32 %v4615, %v4663
      %4665 = vmatmul.bf16.gmra.mxu0 %v1556
      %v4666 = vpop.f32.mrf.mxu0
      %v4667 = vadd.f32 %v4618, %v4666
      %v4668 = vpop.f32.mrf.mxu0
      %v4669 = vadd.f32 %v4620, %v4668
      %4670 = vmatmul.bf16.gmra.mxu0 %v1580
      %v4671 = vpop.f32.mrf.mxu0
      %v4672 = vadd.f32 %v4623, %v4671
      %v4673 = vpop.f32.mrf.mxu0
      %v4674 = vadd.f32 %v4625, %v4673
      %4675 = vmatmul.bf16.gmra.mxu0 %v1604
      %v4676 = vpop.f32.mrf.mxu0
      %v4677 = vadd.f32 %v4628, %v4676
      %v4678 = vpop.f32.mrf.mxu0
      %v4679 = vadd.f32 %v4630, %v4678
      %4680 = vmatmul.bf16.gmra.mxu0 %v1628
      %v4681 = vpop.f32.mrf.mxu0
      %v4682 = vadd.f32 %v4633, %v4681
      %v4683 = vpop.f32.mrf.mxu0
      %v4684 = vadd.f32 %v4635, %v4683
      %4685 = vmatmul.bf16.gmra.mxu0 %v1652
      %v4686 = vpop.f32.mrf.mxu0
      %v4687 = vadd.f32 %v4638, %v4686
      %v4688 = vpop.f32.mrf.mxu0
      %v4689 = vadd.f32 %v4640, %v4688
      %4690 = vmatmul.bf16.gmra.mxu0 %v1676
      %v4691 = vpop.f32.mrf.mxu0
      %v4692 = vadd.f32 %v4643, %v4691
      %v4693 = vpop.f32.mrf.mxu0
      %v4694 = vadd.f32 %v4645, %v4693
      %4695 = vmatmul.bf16.gmra.mxu0 %v1700
      %v4696 = vpop.f32.mrf.mxu0
      %v4697 = vadd.f32 %v4648, %v4696
      %v4698 = vpop.f32.mrf.mxu0
      %v4699 = vadd.f32 %v4650, %v4698
      %4700 = vdwg.mxu0
      %4701 = vmatpush.bf16.msra.mxu0 %v3353
      %4702 = vmatpush.bf16.msra.mxu0 %v3351
      %4703 = vmatpush.bf16.msra.mxu0 %v3349
      %4704 = vmatpush.bf16.msra.mxu0 %v3347
      %4705 = vmatpush.bf16.msra.mxu0 %v3345
      %4706 = vmatpush.bf16.msra.mxu0 %v3343
      %4707 = vmatpush.bf16.msra.mxu0 %v3341
      %4708 = vmatpush.bf16.msra.mxu0 %v3339
      %4709 = vmatmul.bf16.gmra.mxu0 %v1533
      %v4710 = vpop.f32.mrf.mxu0
      %v4711 = vadd.f32 %v4662, %v4710
      %v4712 = vpop.f32.mrf.mxu0
      %v4713 = vadd.f32 %v4664, %v4712
      %4714 = vmatmul.bf16.gmra.mxu0 %v1557
      %v4715 = vpop.f32.mrf.mxu0
      %v4716 = vadd.f32 %v4667, %v4715
      %v4717 = vpop.f32.mrf.mxu0
      %v4718 = vadd.f32 %v4669, %v4717
      %4719 = vmatmul.bf16.gmra.mxu0 %v1581
      %v4720 = vpop.f32.mrf.mxu0
      %v4721 = vadd.f32 %v4672, %v4720
      %v4722 = vpop.f32.mrf.mxu0
      %v4723 = vadd.f32 %v4674, %v4722
      %4724 = vmatmul.bf16.gmra.mxu0 %v1605
      %v4725 = vpop.f32.mrf.mxu0
      %v4726 = vadd.f32 %v4677, %v4725
      %v4727 = vpop.f32.mrf.mxu0
      %v4728 = vadd.f32 %v4679, %v4727
      %4729 = vmatmul.bf16.gmra.mxu0 %v1629
      %v4730 = vpop.f32.mrf.mxu0
      %v4731 = vadd.f32 %v4682, %v4730
      %v4732 = vpop.f32.mrf.mxu0
      %v4733 = vadd.f32 %v4684, %v4732
      %4734 = vmatmul.bf16.gmra.mxu0 %v1653
      %v4735 = vpop.f32.mrf.mxu0
      %v4736 = vadd.f32 %v4687, %v4735
      %v4737 = vpop.f32.mrf.mxu0
      %v4738 = vadd.f32 %v4689, %v4737
      %4739 = vmatmul.bf16.gmra.mxu0 %v1677
      %v4740 = vpop.f32.mrf.mxu0
      %v4741 = vadd.f32 %v4692, %v4740
      %v4742 = vpop.f32.mrf.mxu0
      %v4743 = vadd.f32 %v4694, %v4742
      %4744 = vmatmul.bf16.gmra.mxu0 %v1701
      %v4745 = vpop.f32.mrf.mxu0
      %v4746 = vadd.f32 %v4697, %v4745
      %v4747 = vpop.f32.mrf.mxu0
      %v4748 = vadd.f32 %v4699, %v4747
      %4749 = vdwg.mxu0
      %4750 = vmatpush.bf16.msra.mxu0 %v3369
      %4751 = vmatpush.bf16.msra.mxu0 %v3367
      %4752 = vmatpush.bf16.msra.mxu0 %v3365
      %4753 = vmatpush.bf16.msra.mxu0 %v3363
      %4754 = vmatpush.bf16.msra.mxu0 %v3361
      %4755 = vmatpush.bf16.msra.mxu0 %v3359
      %4756 = vmatpush.bf16.msra.mxu0 %v3357
      %4757 = vmatpush.bf16.msra.mxu0 %v3355
      %4758 = vmatmul.bf16.gmra.mxu0 %v1534
      %v4759 = vpop.f32.mrf.mxu0
      %v4760 = vadd.f32 %v4711, %v4759
      %v4761 = vpop.f32.mrf.mxu0
      %v4762 = vadd.f32 %v4713, %v4761
      %4763 = vmatmul.bf16.gmra.mxu0 %v1558
      %v4764 = vpop.f32.mrf.mxu0
      %v4765 = vadd.f32 %v4716, %v4764
      %v4766 = vpop.f32.mrf.mxu0
      %v4767 = vadd.f32 %v4718, %v4766
      %4768 = vmatmul.bf16.gmra.mxu0 %v1582
      %v4769 = vpop.f32.mrf.mxu0
      %v4770 = vadd.f32 %v4721, %v4769
      %v4771 = vpop.f32.mrf.mxu0
      %v4772 = vadd.f32 %v4723, %v4771
      %4773 = vmatmul.bf16.gmra.mxu0 %v1606
      %v4774 = vpop.f32.mrf.mxu0
      %v4775 = vadd.f32 %v4726, %v4774
      %v4776 = vpop.f32.mrf.mxu0
      %v4777 = vadd.f32 %v4728, %v4776
      %4778 = vmatmul.bf16.gmra.mxu0 %v1630
      %v4779 = vpop.f32.mrf.mxu0
      %v4780 = vadd.f32 %v4731, %v4779
      %v4781 = vpop.f32.mrf.mxu0
      %v4782 = vadd.f32 %v4733, %v4781
      %4783 = vmatmul.bf16.gmra.mxu0 %v1654
      %v4784 = vpop.f32.mrf.mxu0
      %v4785 = vadd.f32 %v4736, %v4784
      %v4786 = vpop.f32.mrf.mxu0
      %v4787 = vadd.f32 %v4738, %v4786
      %4788 = vmatmul.bf16.gmra.mxu0 %v1678
      %v4789 = vpop.f32.mrf.mxu0
      %v4790 = vadd.f32 %v4741, %v4789
      %v4791 = vpop.f32.mrf.mxu0
      %v4792 = vadd.f32 %v4743, %v4791
      %4793 = vmatmul.bf16.gmra.mxu0 %v1702
      %v4794 = vpop.f32.mrf.mxu0
      %v4795 = vadd.f32 %v4746, %v4794
      %v4796 = vpop.f32.mrf.mxu0
      %v4797 = vadd.f32 %v4748, %v4796
      %4798 = vdwg.mxu0
      %4799 = vmatpush.bf16.msra.mxu0 %v3385
      %4800 = vmatpush.bf16.msra.mxu0 %v3383
      %4801 = vmatpush.bf16.msra.mxu0 %v3381
      %4802 = vmatpush.bf16.msra.mxu0 %v3379
      %4803 = vmatpush.bf16.msra.mxu0 %v3377
      %4804 = vmatpush.bf16.msra.mxu0 %v3375
      %4805 = vmatpush.bf16.msra.mxu0 %v3373
      %4806 = vmatpush.bf16.msra.mxu0 %v3371
      %4807 = vmatmul.bf16.gmra.mxu0 %v1535
      %v4808 = vpop.f32.mrf.mxu0
      %v4809 = vadd.f32 %v4760, %v4808
      %v4810 = vpop.f32.mrf.mxu0
      %v4811 = vadd.f32 %v4762, %v4810
      %4812 = vmatmul.bf16.gmra.mxu0 %v1559
      %v4813 = vpop.f32.mrf.mxu0
      %v4814 = vadd.f32 %v4765, %v4813
      %v4815 = vpop.f32.mrf.mxu0
      %v4816 = vadd.f32 %v4767, %v4815
      %4817 = vmatmul.bf16.gmra.mxu0 %v1583
      %v4818 = vpop.f32.mrf.mxu0
      %v4819 = vadd.f32 %v4770, %v4818
      %v4820 = vpop.f32.mrf.mxu0
      %v4821 = vadd.f32 %v4772, %v4820
      %4822 = vmatmul.bf16.gmra.mxu0 %v1607
      %v4823 = vpop.f32.mrf.mxu0
      %v4824 = vadd.f32 %v4775, %v4823
      %v4825 = vpop.f32.mrf.mxu0
      %v4826 = vadd.f32 %v4777, %v4825
      %4827 = vmatmul.bf16.gmra.mxu0 %v1631
      %v4828 = vpop.f32.mrf.mxu0
      %v4829 = vadd.f32 %v4780, %v4828
      %v4830 = vpop.f32.mrf.mxu0
      %v4831 = vadd.f32 %v4782, %v4830
      %4832 = vmatmul.bf16.gmra.mxu0 %v1655
      %v4833 = vpop.f32.mrf.mxu0
      %v4834 = vadd.f32 %v4785, %v4833
      %v4835 = vpop.f32.mrf.mxu0
      %v4836 = vadd.f32 %v4787, %v4835
      %4837 = vmatmul.bf16.gmra.mxu0 %v1679
      %v4838 = vpop.f32.mrf.mxu0
      %v4839 = vadd.f32 %v4790, %v4838
      %v4840 = vpop.f32.mrf.mxu0
      %v4841 = vadd.f32 %v4792, %v4840
      %4842 = vmatmul.bf16.gmra.mxu0 %v1703
      %v4843 = vpop.f32.mrf.mxu0
      %v4844 = vadd.f32 %v4795, %v4843
      %v4845 = vpop.f32.mrf.mxu0
      %v4846 = vadd.f32 %v4797, %v4845
      %4847 = vdwg.mxu0
      %4848 = vmatpush.bf16.msra.mxu0 %v3401
      %4849 = vmatpush.bf16.msra.mxu0 %v3399
      %4850 = vmatpush.bf16.msra.mxu0 %v3397
      %4851 = vmatpush.bf16.msra.mxu0 %v3395
      %4852 = vmatpush.bf16.msra.mxu0 %v3393
      %4853 = vmatpush.bf16.msra.mxu0 %v3391
      %4854 = vmatpush.bf16.msra.mxu0 %v3389
      %4855 = vmatpush.bf16.msra.mxu0 %v3387
      %4856 = vmatmul.bf16.gmra.mxu0 %v1536
      %v4857 = vpop.f32.mrf.mxu0
      %v4858 = vadd.f32 %v4809, %v4857
      %v4859 = vpop.f32.mrf.mxu0
      %v4860 = vadd.f32 %v4811, %v4859
      %4861 = vmatmul.bf16.gmra.mxu0 %v1560
      %v4862 = vpop.f32.mrf.mxu0
      %v4863 = vadd.f32 %v4814, %v4862
      %v4864 = vpop.f32.mrf.mxu0
      %v4865 = vadd.f32 %v4816, %v4864
      %4866 = vmatmul.bf16.gmra.mxu0 %v1584
      %v4867 = vpop.f32.mrf.mxu0
      %v4868 = vadd.f32 %v4819, %v4867
      %v4869 = vpop.f32.mrf.mxu0
      %v4870 = vadd.f32 %v4821, %v4869
      %4871 = vmatmul.bf16.gmra.mxu0 %v1608
      %v4872 = vpop.f32.mrf.mxu0
      %v4873 = vadd.f32 %v4824, %v4872
      %v4874 = vpop.f32.mrf.mxu0
      %v4875 = vadd.f32 %v4826, %v4874
      %4876 = vmatmul.bf16.gmra.mxu0 %v1632
      %v4877 = vpop.f32.mrf.mxu0
      %v4878 = vadd.f32 %v4829, %v4877
      %v4879 = vpop.f32.mrf.mxu0
      %v4880 = vadd.f32 %v4831, %v4879
      %4881 = vmatmul.bf16.gmra.mxu0 %v1656
      %v4882 = vpop.f32.mrf.mxu0
      %v4883 = vadd.f32 %v4834, %v4882
      %v4884 = vpop.f32.mrf.mxu0
      %v4885 = vadd.f32 %v4836, %v4884
      %4886 = vmatmul.bf16.gmra.mxu0 %v1680
      %v4887 = vpop.f32.mrf.mxu0
      %v4888 = vadd.f32 %v4839, %v4887
      %v4889 = vpop.f32.mrf.mxu0
      %v4890 = vadd.f32 %v4841, %v4889
      %4891 = vmatmul.bf16.gmra.mxu0 %v1704
      %v4892 = vpop.f32.mrf.mxu0
      %v4893 = vadd.f32 %v4844, %v4892
      %v4894 = vpop.f32.mrf.mxu0
      %v4895 = vadd.f32 %v4846, %v4894
      %4896 = vdwg.mxu0
      %4897 = vmatpush.bf16.msra.mxu0 %v3417
      %4898 = vmatpush.bf16.msra.mxu0 %v3415
      %4899 = vmatpush.bf16.msra.mxu0 %v3413
      %4900 = vmatpush.bf16.msra.mxu0 %v3411
      %4901 = vmatpush.bf16.msra.mxu0 %v3409
      %4902 = vmatpush.bf16.msra.mxu0 %v3407
      %4903 = vmatpush.bf16.msra.mxu0 %v3405
      %4904 = vmatpush.bf16.msra.mxu0 %v3403
      %4905 = vmatmul.bf16.gmra.mxu0 %v1537
      %v4906 = vpop.f32.mrf.mxu0
      %v4907 = vadd.f32 %v4858, %v4906
      %v4908 = vpop.f32.mrf.mxu0
      %v4909 = vadd.f32 %v4860, %v4908
      %4910 = vmatmul.bf16.gmra.mxu0 %v1561
      %v4911 = vpop.f32.mrf.mxu0
      %v4912 = vadd.f32 %v4863, %v4911
      %v4913 = vpop.f32.mrf.mxu0
      %v4914 = vadd.f32 %v4865, %v4913
      %4915 = vmatmul.bf16.gmra.mxu0 %v1585
      %v4916 = vpop.f32.mrf.mxu0
      %v4917 = vadd.f32 %v4868, %v4916
      %v4918 = vpop.f32.mrf.mxu0
      %v4919 = vadd.f32 %v4870, %v4918
      %4920 = vmatmul.bf16.gmra.mxu0 %v1609
      %v4921 = vpop.f32.mrf.mxu0
      %v4922 = vadd.f32 %v4873, %v4921
      %v4923 = vpop.f32.mrf.mxu0
      %v4924 = vadd.f32 %v4875, %v4923
      %4925 = vmatmul.bf16.gmra.mxu0 %v1633
      %v4926 = vpop.f32.mrf.mxu0
      %v4927 = vadd.f32 %v4878, %v4926
      %v4928 = vpop.f32.mrf.mxu0
      %v4929 = vadd.f32 %v4880, %v4928
      %4930 = vmatmul.bf16.gmra.mxu0 %v1657
      %v4931 = vpop.f32.mrf.mxu0
      %v4932 = vadd.f32 %v4883, %v4931
      %v4933 = vpop.f32.mrf.mxu0
      %v4934 = vadd.f32 %v4885, %v4933
      %4935 = vmatmul.bf16.gmra.mxu0 %v1681
      %v4936 = vpop.f32.mrf.mxu0
      %v4937 = vadd.f32 %v4888, %v4936
      %v4938 = vpop.f32.mrf.mxu0
      %v4939 = vadd.f32 %v4890, %v4938
      %4940 = vmatmul.bf16.gmra.mxu0 %v1705
      %v4941 = vpop.f32.mrf.mxu0
      %v4942 = vadd.f32 %v4893, %v4941
      %v4943 = vpop.f32.mrf.mxu0
      %v4944 = vadd.f32 %v4895, %v4943
      %4945 = vdwg.mxu0
      %4946 = vmatpush.bf16.msra.mxu0 %v3433
      %4947 = vmatpush.bf16.msra.mxu0 %v3431
      %4948 = vmatpush.bf16.msra.mxu0 %v3429
      %4949 = vmatpush.bf16.msra.mxu0 %v3427
      %4950 = vmatpush.bf16.msra.mxu0 %v3425
      %4951 = vmatpush.bf16.msra.mxu0 %v3423
      %4952 = vmatpush.bf16.msra.mxu0 %v3421
      %4953 = vmatpush.bf16.msra.mxu0 %v3419
      %4954 = vmatmul.bf16.gmra.mxu0 %v1538
      %v4955 = vpop.f32.mrf.mxu0
      %v4956 = vadd.f32 %v4907, %v4955
      %v4957 = vpop.f32.mrf.mxu0
      %v4958 = vadd.f32 %v4909, %v4957
      %4959 = vmatmul.bf16.gmra.mxu0 %v1562
      %v4960 = vpop.f32.mrf.mxu0
      %v4961 = vadd.f32 %v4912, %v4960
      %v4962 = vpop.f32.mrf.mxu0
      %v4963 = vadd.f32 %v4914, %v4962
      %4964 = vmatmul.bf16.gmra.mxu0 %v1586
      %v4965 = vpop.f32.mrf.mxu0
      %v4966 = vadd.f32 %v4917, %v4965
      %v4967 = vpop.f32.mrf.mxu0
      %v4968 = vadd.f32 %v4919, %v4967
      %4969 = vmatmul.bf16.gmra.mxu0 %v1610
      %v4970 = vpop.f32.mrf.mxu0
      %v4971 = vadd.f32 %v4922, %v4970
      %v4972 = vpop.f32.mrf.mxu0
      %v4973 = vadd.f32 %v4924, %v4972
      %4974 = vmatmul.bf16.gmra.mxu0 %v1634
      %v4975 = vpop.f32.mrf.mxu0
      %v4976 = vadd.f32 %v4927, %v4975
      %v4977 = vpop.f32.mrf.mxu0
      %v4978 = vadd.f32 %v4929, %v4977
      %4979 = vmatmul.bf16.gmra.mxu0 %v1658
      %v4980 = vpop.f32.mrf.mxu0
      %v4981 = vadd.f32 %v4932, %v4980
      %v4982 = vpop.f32.mrf.mxu0
      %v4983 = vadd.f32 %v4934, %v4982
      %4984 = vmatmul.bf16.gmra.mxu0 %v1682
      %v4985 = vpop.f32.mrf.mxu0
      %v4986 = vadd.f32 %v4937, %v4985
      %v4987 = vpop.f32.mrf.mxu0
      %v4988 = vadd.f32 %v4939, %v4987
      %4989 = vmatmul.bf16.gmra.mxu0 %v1706
      %v4990 = vpop.f32.mrf.mxu0
      %v4991 = vadd.f32 %v4942, %v4990
      %v4992 = vpop.f32.mrf.mxu0
      %v4993 = vadd.f32 %v4944, %v4992
      %4994 = vdwg.mxu0
      %4995 = vmatpush.bf16.msra.mxu0 %v3066
      %4996 = vmatpush.bf16.msra.mxu0 %v3064
      %4997 = vmatpush.bf16.msra.mxu0 %v3062
      %4998 = vmatpush.bf16.msra.mxu0 %v3060
      %4999 = vmatpush.bf16.msra.mxu0 %v3058
      %5000 = vmatpush.bf16.msra.mxu0 %v3056
      %5001 = vmatpush.bf16.msra.mxu0 %v3054
      %5002 = vmatpush.bf16.msra.mxu0 %v3052
      %5003 = vmatmul.bf16.gmra.mxu0 %v1515
      %v5004 = vpop.f32.mrf.mxu0
      %v5005 = vadd.f32 %v908, %v5004
      %v5006 = vpop.f32.mrf.mxu0
      %v5007 = vadd.f32 %v910, %v5006
      %5008 = vmatmul.bf16.gmra.mxu0 %v1539
      %v5009 = vpop.f32.mrf.mxu0
      %v5010 = vadd.f32 %v912, %v5009
      %v5011 = vpop.f32.mrf.mxu0
      %v5012 = vadd.f32 %v914, %v5011
      %5013 = vmatmul.bf16.gmra.mxu0 %v1563
      %v5014 = vpop.f32.mrf.mxu0
      %v5015 = vadd.f32 %v916, %v5014
      %v5016 = vpop.f32.mrf.mxu0
      %v5017 = vadd.f32 %v918, %v5016
      %5018 = vmatmul.bf16.gmra.mxu0 %v1587
      %v5019 = vpop.f32.mrf.mxu0
      %v5020 = vadd.f32 %v920, %v5019
      %v5021 = vpop.f32.mrf.mxu0
      %v5022 = vadd.f32 %v922, %v5021
      %5023 = vmatmul.bf16.gmra.mxu0 %v1611
      %v5024 = vpop.f32.mrf.mxu0
      %v5025 = vadd.f32 %v924, %v5024
      %v5026 = vpop.f32.mrf.mxu0
      %v5027 = vadd.f32 %v926, %v5026
      %5028 = vmatmul.bf16.gmra.mxu0 %v1635
      %v5029 = vpop.f32.mrf.mxu0
      %v5030 = vadd.f32 %v928, %v5029
      %v5031 = vpop.f32.mrf.mxu0
      %v5032 = vadd.f32 %v930, %v5031
      %5033 = vmatmul.bf16.gmra.mxu0 %v1659
      %v5034 = vpop.f32.mrf.mxu0
      %v5035 = vadd.f32 %v932, %v5034
      %v5036 = vpop.f32.mrf.mxu0
      %v5037 = vadd.f32 %v934, %v5036
      %5038 = vmatmul.bf16.gmra.mxu0 %v1683
      %v5039 = vpop.f32.mrf.mxu0
      %v5040 = vadd.f32 %v936, %v5039
      %v5041 = vpop.f32.mrf.mxu0
      %v5042 = vadd.f32 %v938, %v5041
      %5043 = vdwg.mxu0
      %5044 = vmatpush.bf16.msra.mxu0 %v3082
      %5045 = vmatpush.bf16.msra.mxu0 %v3080
      %5046 = vmatpush.bf16.msra.mxu0 %v3078
      %5047 = vmatpush.bf16.msra.mxu0 %v3076
      %5048 = vmatpush.bf16.msra.mxu0 %v3074
      %5049 = vmatpush.bf16.msra.mxu0 %v3072
      %5050 = vmatpush.bf16.msra.mxu0 %v3070
      %5051 = vmatpush.bf16.msra.mxu0 %v3068
      %5052 = vmatmul.bf16.gmra.mxu0 %v1516
      %v5053 = vpop.f32.mrf.mxu0
      %v5054 = vadd.f32 %v5005, %v5053
      %v5055 = vpop.f32.mrf.mxu0
      %v5056 = vadd.f32 %v5007, %v5055
      %5057 = vmatmul.bf16.gmra.mxu0 %v1540
      %v5058 = vpop.f32.mrf.mxu0
      %v5059 = vadd.f32 %v5010, %v5058
      %v5060 = vpop.f32.mrf.mxu0
      %v5061 = vadd.f32 %v5012, %v5060
      %5062 = vmatmul.bf16.gmra.mxu0 %v1564
      %v5063 = vpop.f32.mrf.mxu0
      %v5064 = vadd.f32 %v5015, %v5063
      %v5065 = vpop.f32.mrf.mxu0
      %v5066 = vadd.f32 %v5017, %v5065
      %5067 = vmatmul.bf16.gmra.mxu0 %v1588
      %v5068 = vpop.f32.mrf.mxu0
      %v5069 = vadd.f32 %v5020, %v5068
      %v5070 = vpop.f32.mrf.mxu0
      %v5071 = vadd.f32 %v5022, %v5070
      %5072 = vmatmul.bf16.gmra.mxu0 %v1612
      %v5073 = vpop.f32.mrf.mxu0
      %v5074 = vadd.f32 %v5025, %v5073
      %v5075 = vpop.f32.mrf.mxu0
      %v5076 = vadd.f32 %v5027, %v5075
      %5077 = vmatmul.bf16.gmra.mxu0 %v1636
      %v5078 = vpop.f32.mrf.mxu0
      %v5079 = vadd.f32 %v5030, %v5078
      %v5080 = vpop.f32.mrf.mxu0
      %v5081 = vadd.f32 %v5032, %v5080
      %5082 = vmatmul.bf16.gmra.mxu0 %v1660
      %v5083 = vpop.f32.mrf.mxu0
      %v5084 = vadd.f32 %v5035, %v5083
      %v5085 = vpop.f32.mrf.mxu0
      %v5086 = vadd.f32 %v5037, %v5085
      %5087 = vmatmul.bf16.gmra.mxu0 %v1684
      %v5088 = vpop.f32.mrf.mxu0
      %v5089 = vadd.f32 %v5040, %v5088
      %v5090 = vpop.f32.mrf.mxu0
      %v5091 = vadd.f32 %v5042, %v5090
      %5092 = vdwg.mxu0
      %5093 = vmatpush.bf16.msra.mxu0 %v3098
      %5094 = vmatpush.bf16.msra.mxu0 %v3096
      %5095 = vmatpush.bf16.msra.mxu0 %v3094
      %5096 = vmatpush.bf16.msra.mxu0 %v3092
      %5097 = vmatpush.bf16.msra.mxu0 %v3090
      %5098 = vmatpush.bf16.msra.mxu0 %v3088
      %5099 = vmatpush.bf16.msra.mxu0 %v3086
      %5100 = vmatpush.bf16.msra.mxu0 %v3084
      %5101 = vmatmul.bf16.gmra.mxu0 %v1517
      %v5102 = vpop.f32.mrf.mxu0
      %v5103 = vadd.f32 %v5054, %v5102
      %v5104 = vpop.f32.mrf.mxu0
      %v5105 = vadd.f32 %v5056, %v5104
      %5106 = vmatmul.bf16.gmra.mxu0 %v1541
      %v5107 = vpop.f32.mrf.mxu0
      %v5108 = vadd.f32 %v5059, %v5107
      %v5109 = vpop.f32.mrf.mxu0
      %v5110 = vadd.f32 %v5061, %v5109
      %5111 = vmatmul.bf16.gmra.mxu0 %v1565
      %v5112 = vpop.f32.mrf.mxu0
      %v5113 = vadd.f32 %v5064, %v5112
      %v5114 = vpop.f32.mrf.mxu0
      %v5115 = vadd.f32 %v5066, %v5114
      %5116 = vmatmul.bf16.gmra.mxu0 %v1589
      %v5117 = vpop.f32.mrf.mxu0
      %v5118 = vadd.f32 %v5069, %v5117
      %v5119 = vpop.f32.mrf.mxu0
      %v5120 = vadd.f32 %v5071, %v5119
      %5121 = vmatmul.bf16.gmra.mxu0 %v1613
      %v5122 = vpop.f32.mrf.mxu0
      %v5123 = vadd.f32 %v5074, %v5122
      %v5124 = vpop.f32.mrf.mxu0
      %v5125 = vadd.f32 %v5076, %v5124
      %5126 = vmatmul.bf16.gmra.mxu0 %v1637
      %v5127 = vpop.f32.mrf.mxu0
      %v5128 = vadd.f32 %v5079, %v5127
      %v5129 = vpop.f32.mrf.mxu0
      %v5130 = vadd.f32 %v5081, %v5129
      %5131 = vmatmul.bf16.gmra.mxu0 %v1661
      %v5132 = vpop.f32.mrf.mxu0
      %v5133 = vadd.f32 %v5084, %v5132
      %v5134 = vpop.f32.mrf.mxu0
      %v5135 = vadd.f32 %v5086, %v5134
      %5136 = vmatmul.bf16.gmra.mxu0 %v1685
      %v5137 = vpop.f32.mrf.mxu0
      %v5138 = vadd.f32 %v5089, %v5137
      %v5139 = vpop.f32.mrf.mxu0
      %v5140 = vadd.f32 %v5091, %v5139
      %5141 = vdwg.mxu0
      %5142 = vmatpush.bf16.msra.mxu0 %v3114
      %5143 = vmatpush.bf16.msra.mxu0 %v3112
      %5144 = vmatpush.bf16.msra.mxu0 %v3110
      %5145 = vmatpush.bf16.msra.mxu0 %v3108
      %5146 = vmatpush.bf16.msra.mxu0 %v3106
      %5147 = vmatpush.bf16.msra.mxu0 %v3104
      %5148 = vmatpush.bf16.msra.mxu0 %v3102
      %5149 = vmatpush.bf16.msra.mxu0 %v3100
      %5150 = vmatmul.bf16.gmra.mxu0 %v1518
      %v5151 = vpop.f32.mrf.mxu0
      %v5152 = vadd.f32 %v5103, %v5151
      %v5153 = vpop.f32.mrf.mxu0
      %v5154 = vadd.f32 %v5105, %v5153
      %5155 = vmatmul.bf16.gmra.mxu0 %v1542
      %v5156 = vpop.f32.mrf.mxu0
      %v5157 = vadd.f32 %v5108, %v5156
      %v5158 = vpop.f32.mrf.mxu0
      %v5159 = vadd.f32 %v5110, %v5158
      %5160 = vmatmul.bf16.gmra.mxu0 %v1566
      %v5161 = vpop.f32.mrf.mxu0
      %v5162 = vadd.f32 %v5113, %v5161
      %v5163 = vpop.f32.mrf.mxu0
      %v5164 = vadd.f32 %v5115, %v5163
      %5165 = vmatmul.bf16.gmra.mxu0 %v1590
      %v5166 = vpop.f32.mrf.mxu0
      %v5167 = vadd.f32 %v5118, %v5166
      %v5168 = vpop.f32.mrf.mxu0
      %v5169 = vadd.f32 %v5120, %v5168
      %5170 = vmatmul.bf16.gmra.mxu0 %v1614
      %v5171 = vpop.f32.mrf.mxu0
      %v5172 = vadd.f32 %v5123, %v5171
      %v5173 = vpop.f32.mrf.mxu0
      %v5174 = vadd.f32 %v5125, %v5173
      %5175 = vmatmul.bf16.gmra.mxu0 %v1638
      %v5176 = vpop.f32.mrf.mxu0
      %v5177 = vadd.f32 %v5128, %v5176
      %v5178 = vpop.f32.mrf.mxu0
      %v5179 = vadd.f32 %v5130, %v5178
      %5180 = vmatmul.bf16.gmra.mxu0 %v1662
      %v5181 = vpop.f32.mrf.mxu0
      %v5182 = vadd.f32 %v5133, %v5181
      %v5183 = vpop.f32.mrf.mxu0
      %v5184 = vadd.f32 %v5135, %v5183
      %5185 = vmatmul.bf16.gmra.mxu0 %v1686
      %v5186 = vpop.f32.mrf.mxu0
      %v5187 = vadd.f32 %v5138, %v5186
      %v5188 = vpop.f32.mrf.mxu0
      %v5189 = vadd.f32 %v5140, %v5188
      %5190 = vdwg.mxu0
      %5191 = vmatpush.bf16.msra.mxu0 %v3130
      %5192 = vmatpush.bf16.msra.mxu0 %v3128
      %5193 = vmatpush.bf16.msra.mxu0 %v3126
      %5194 = vmatpush.bf16.msra.mxu0 %v3124
      %5195 = vmatpush.bf16.msra.mxu0 %v3122
      %5196 = vmatpush.bf16.msra.mxu0 %v3120
      %5197 = vmatpush.bf16.msra.mxu0 %v3118
      %5198 = vmatpush.bf16.msra.mxu0 %v3116
      %5199 = vmatmul.bf16.gmra.mxu0 %v1519
      %v5200 = vpop.f32.mrf.mxu0
      %v5201 = vadd.f32 %v5152, %v5200
      %v5202 = vpop.f32.mrf.mxu0
      %v5203 = vadd.f32 %v5154, %v5202
      %5204 = vmatmul.bf16.gmra.mxu0 %v1543
      %v5205 = vpop.f32.mrf.mxu0
      %v5206 = vadd.f32 %v5157, %v5205
      %v5207 = vpop.f32.mrf.mxu0
      %v5208 = vadd.f32 %v5159, %v5207
      %5209 = vmatmul.bf16.gmra.mxu0 %v1567
      %v5210 = vpop.f32.mrf.mxu0
      %v5211 = vadd.f32 %v5162, %v5210
      %v5212 = vpop.f32.mrf.mxu0
      %v5213 = vadd.f32 %v5164, %v5212
      %5214 = vmatmul.bf16.gmra.mxu0 %v1591
      %v5215 = vpop.f32.mrf.mxu0
      %v5216 = vadd.f32 %v5167, %v5215
      %v5217 = vpop.f32.mrf.mxu0
      %v5218 = vadd.f32 %v5169, %v5217
      %5219 = vmatmul.bf16.gmra.mxu0 %v1615
      %v5220 = vpop.f32.mrf.mxu0
      %v5221 = vadd.f32 %v5172, %v5220
      %v5222 = vpop.f32.mrf.mxu0
      %v5223 = vadd.f32 %v5174, %v5222
      %5224 = vmatmul.bf16.gmra.mxu0 %v1639
      %v5225 = vpop.f32.mrf.mxu0
      %v5226 = vadd.f32 %v5177, %v5225
      %v5227 = vpop.f32.mrf.mxu0
      %v5228 = vadd.f32 %v5179, %v5227
      %5229 = vmatmul.bf16.gmra.mxu0 %v1663
      %v5230 = vpop.f32.mrf.mxu0
      %v5231 = vadd.f32 %v5182, %v5230
      %v5232 = vpop.f32.mrf.mxu0
      %v5233 = vadd.f32 %v5184, %v5232
      %5234 = vmatmul.bf16.gmra.mxu0 %v1687
      %v5235 = vpop.f32.mrf.mxu0
      %v5236 = vadd.f32 %v5187, %v5235
      %v5237 = vpop.f32.mrf.mxu0
      %v5238 = vadd.f32 %v5189, %v5237
      %5239 = vdwg.mxu0
      %5240 = vmatpush.bf16.msra.mxu0 %v3146
      %5241 = vmatpush.bf16.msra.mxu0 %v3144
      %5242 = vmatpush.bf16.msra.mxu0 %v3142
      %5243 = vmatpush.bf16.msra.mxu0 %v3140
      %5244 = vmatpush.bf16.msra.mxu0 %v3138
      %5245 = vmatpush.bf16.msra.mxu0 %v3136
      %5246 = vmatpush.bf16.msra.mxu0 %v3134
      %5247 = vmatpush.bf16.msra.mxu0 %v3132
      %5248 = vmatmul.bf16.gmra.mxu0 %v1520
      %v5249 = vpop.f32.mrf.mxu0
      %v5250 = vadd.f32 %v5201, %v5249
      %v5251 = vpop.f32.mrf.mxu0
      %v5252 = vadd.f32 %v5203, %v5251
      %5253 = vmatmul.bf16.gmra.mxu0 %v1544
      %v5254 = vpop.f32.mrf.mxu0
      %v5255 = vadd.f32 %v5206, %v5254
      %v5256 = vpop.f32.mrf.mxu0
      %v5257 = vadd.f32 %v5208, %v5256
      %5258 = vmatmul.bf16.gmra.mxu0 %v1568
      %v5259 = vpop.f32.mrf.mxu0
      %v5260 = vadd.f32 %v5211, %v5259
      %v5261 = vpop.f32.mrf.mxu0
      %v5262 = vadd.f32 %v5213, %v5261
      %5263 = vmatmul.bf16.gmra.mxu0 %v1592
      %v5264 = vpop.f32.mrf.mxu0
      %v5265 = vadd.f32 %v5216, %v5264
      %v5266 = vpop.f32.mrf.mxu0
      %v5267 = vadd.f32 %v5218, %v5266
      %5268 = vmatmul.bf16.gmra.mxu0 %v1616
      %v5269 = vpop.f32.mrf.mxu0
      %v5270 = vadd.f32 %v5221, %v5269
      %v5271 = vpop.f32.mrf.mxu0
      %v5272 = vadd.f32 %v5223, %v5271
      %5273 = vmatmul.bf16.gmra.mxu0 %v1640
      %v5274 = vpop.f32.mrf.mxu0
      %v5275 = vadd.f32 %v5226, %v5274
      %v5276 = vpop.f32.mrf.mxu0
      %v5277 = vadd.f32 %v5228, %v5276
      %5278 = vmatmul.bf16.gmra.mxu0 %v1664
      %v5279 = vpop.f32.mrf.mxu0
      %v5280 = vadd.f32 %v5231, %v5279
      %v5281 = vpop.f32.mrf.mxu0
      %v5282 = vadd.f32 %v5233, %v5281
      %5283 = vmatmul.bf16.gmra.mxu0 %v1688
      %v5284 = vpop.f32.mrf.mxu0
      %v5285 = vadd.f32 %v5236, %v5284
      %v5286 = vpop.f32.mrf.mxu0
      %v5287 = vadd.f32 %v5238, %v5286
      %5288 = vdwg.mxu0
      %5289 = vmatpush.bf16.msra.mxu0 %v3162
      %5290 = vmatpush.bf16.msra.mxu0 %v3160
      %5291 = vmatpush.bf16.msra.mxu0 %v3158
      %5292 = vmatpush.bf16.msra.mxu0 %v3156
      %5293 = vmatpush.bf16.msra.mxu0 %v3154
      %5294 = vmatpush.bf16.msra.mxu0 %v3152
      %5295 = vmatpush.bf16.msra.mxu0 %v3150
      %5296 = vmatpush.bf16.msra.mxu0 %v3148
      %5297 = vmatmul.bf16.gmra.mxu0 %v1521
      %v5298 = vpop.f32.mrf.mxu0
      %v5299 = vadd.f32 %v5250, %v5298
      %v5300 = vpop.f32.mrf.mxu0
      %v5301 = vadd.f32 %v5252, %v5300
      %5302 = vmatmul.bf16.gmra.mxu0 %v1545
      %v5303 = vpop.f32.mrf.mxu0
      %v5304 = vadd.f32 %v5255, %v5303
      %v5305 = vpop.f32.mrf.mxu0
      %v5306 = vadd.f32 %v5257, %v5305
      %5307 = vmatmul.bf16.gmra.mxu0 %v1569
      %v5308 = vpop.f32.mrf.mxu0
      %v5309 = vadd.f32 %v5260, %v5308
      %v5310 = vpop.f32.mrf.mxu0
      %v5311 = vadd.f32 %v5262, %v5310
      %5312 = vmatmul.bf16.gmra.mxu0 %v1593
      %v5313 = vpop.f32.mrf.mxu0
      %v5314 = vadd.f32 %v5265, %v5313
      %v5315 = vpop.f32.mrf.mxu0
      %v5316 = vadd.f32 %v5267, %v5315
      %5317 = vmatmul.bf16.gmra.mxu0 %v1617
      %v5318 = vpop.f32.mrf.mxu0
      %v5319 = vadd.f32 %v5270, %v5318
      %v5320 = vpop.f32.mrf.mxu0
      %v5321 = vadd.f32 %v5272, %v5320
      %5322 = vmatmul.bf16.gmra.mxu0 %v1641
      %v5323 = vpop.f32.mrf.mxu0
      %v5324 = vadd.f32 %v5275, %v5323
      %v5325 = vpop.f32.mrf.mxu0
      %v5326 = vadd.f32 %v5277, %v5325
      %5327 = vmatmul.bf16.gmra.mxu0 %v1665
      %v5328 = vpop.f32.mrf.mxu0
      %v5329 = vadd.f32 %v5280, %v5328
      %v5330 = vpop.f32.mrf.mxu0
      %v5331 = vadd.f32 %v5282, %v5330
      %5332 = vmatmul.bf16.gmra.mxu0 %v1689
      %v5333 = vpop.f32.mrf.mxu0
      %v5334 = vadd.f32 %v5285, %v5333
      %v5335 = vpop.f32.mrf.mxu0
      %v5336 = vadd.f32 %v5287, %v5335
      %5337 = vdwg.mxu0
      %5338 = vmatpush.bf16.msra.mxu0 %v3178
      %5339 = vmatpush.bf16.msra.mxu0 %v3176
      %5340 = vmatpush.bf16.msra.mxu0 %v3174
      %5341 = vmatpush.bf16.msra.mxu0 %v3172
      %5342 = vmatpush.bf16.msra.mxu0 %v3170
      %5343 = vmatpush.bf16.msra.mxu0 %v3168
      %5344 = vmatpush.bf16.msra.mxu0 %v3166
      %5345 = vmatpush.bf16.msra.mxu0 %v3164
      %5346 = vmatmul.bf16.gmra.mxu0 %v1522
      %v5347 = vpop.f32.mrf.mxu0
      %v5348 = vadd.f32 %v5299, %v5347
      %v5349 = vpop.f32.mrf.mxu0
      %v5350 = vadd.f32 %v5301, %v5349
      %5351 = vmatmul.bf16.gmra.mxu0 %v1546
      %v5352 = vpop.f32.mrf.mxu0
      %v5353 = vadd.f32 %v5304, %v5352
      %v5354 = vpop.f32.mrf.mxu0
      %v5355 = vadd.f32 %v5306, %v5354
      %5356 = vmatmul.bf16.gmra.mxu0 %v1570
      %v5357 = vpop.f32.mrf.mxu0
      %v5358 = vadd.f32 %v5309, %v5357
      %v5359 = vpop.f32.mrf.mxu0
      %v5360 = vadd.f32 %v5311, %v5359
      %5361 = vmatmul.bf16.gmra.mxu0 %v1594
      %v5362 = vpop.f32.mrf.mxu0
      %v5363 = vadd.f32 %v5314, %v5362
      %v5364 = vpop.f32.mrf.mxu0
      %v5365 = vadd.f32 %v5316, %v5364
      %5366 = vmatmul.bf16.gmra.mxu0 %v1618
      %v5367 = vpop.f32.mrf.mxu0
      %v5368 = vadd.f32 %v5319, %v5367
      %v5369 = vpop.f32.mrf.mxu0
      %v5370 = vadd.f32 %v5321, %v5369
      %5371 = vmatmul.bf16.gmra.mxu0 %v1642
      %v5372 = vpop.f32.mrf.mxu0
      %v5373 = vadd.f32 %v5324, %v5372
      %v5374 = vpop.f32.mrf.mxu0
      %v5375 = vadd.f32 %v5326, %v5374
      %5376 = vmatmul.bf16.gmra.mxu0 %v1666
      %v5377 = vpop.f32.mrf.mxu0
      %v5378 = vadd.f32 %v5329, %v5377
      %v5379 = vpop.f32.mrf.mxu0
      %v5380 = vadd.f32 %v5331, %v5379
      %5381 = vmatmul.bf16.gmra.mxu0 %v1690
      %v5382 = vpop.f32.mrf.mxu0
      %v5383 = vadd.f32 %v5334, %v5382
      %v5384 = vpop.f32.mrf.mxu0
      %v5385 = vadd.f32 %v5336, %v5384
      %5386 = vdwg.mxu0
      %5387 = vmatpush.bf16.msra.mxu0 %v3194
      %5388 = vmatpush.bf16.msra.mxu0 %v3192
      %5389 = vmatpush.bf16.msra.mxu0 %v3190
      %5390 = vmatpush.bf16.msra.mxu0 %v3188
      %5391 = vmatpush.bf16.msra.mxu0 %v3186
      %5392 = vmatpush.bf16.msra.mxu0 %v3184
      %5393 = vmatpush.bf16.msra.mxu0 %v3182
      %5394 = vmatpush.bf16.msra.mxu0 %v3180
      %5395 = vmatmul.bf16.gmra.mxu0 %v1523
      %v5396 = vpop.f32.mrf.mxu0
      %v5397 = vadd.f32 %v5348, %v5396
      %v5398 = vpop.f32.mrf.mxu0
      %v5399 = vadd.f32 %v5350, %v5398
      %5400 = vmatmul.bf16.gmra.mxu0 %v1547
      %v5401 = vpop.f32.mrf.mxu0
      %v5402 = vadd.f32 %v5353, %v5401
      %v5403 = vpop.f32.mrf.mxu0
      %v5404 = vadd.f32 %v5355, %v5403
      %5405 = vmatmul.bf16.gmra.mxu0 %v1571
      %v5406 = vpop.f32.mrf.mxu0
      %v5407 = vadd.f32 %v5358, %v5406
      %v5408 = vpop.f32.mrf.mxu0
      %v5409 = vadd.f32 %v5360, %v5408
      %5410 = vmatmul.bf16.gmra.mxu0 %v1595
      %v5411 = vpop.f32.mrf.mxu0
      %v5412 = vadd.f32 %v5363, %v5411
      %v5413 = vpop.f32.mrf.mxu0
      %v5414 = vadd.f32 %v5365, %v5413
      %5415 = vmatmul.bf16.gmra.mxu0 %v1619
      %v5416 = vpop.f32.mrf.mxu0
      %v5417 = vadd.f32 %v5368, %v5416
      %v5418 = vpop.f32.mrf.mxu0
      %v5419 = vadd.f32 %v5370, %v5418
      %5420 = vmatmul.bf16.gmra.mxu0 %v1643
      %v5421 = vpop.f32.mrf.mxu0
      %v5422 = vadd.f32 %v5373, %v5421
      %v5423 = vpop.f32.mrf.mxu0
      %v5424 = vadd.f32 %v5375, %v5423
      %5425 = vmatmul.bf16.gmra.mxu0 %v1667
      %v5426 = vpop.f32.mrf.mxu0
      %v5427 = vadd.f32 %v5378, %v5426
      %v5428 = vpop.f32.mrf.mxu0
      %v5429 = vadd.f32 %v5380, %v5428
      %5430 = vmatmul.bf16.gmra.mxu0 %v1691
      %v5431 = vpop.f32.mrf.mxu0
      %v5432 = vadd.f32 %v5383, %v5431
      %v5433 = vpop.f32.mrf.mxu0
      %v5434 = vadd.f32 %v5385, %v5433
      %5435 = vdwg.mxu0
      %5436 = vmatpush.bf16.msra.mxu0 %v3210
      %5437 = vmatpush.bf16.msra.mxu0 %v3208
      %5438 = vmatpush.bf16.msra.mxu0 %v3206
      %5439 = vmatpush.bf16.msra.mxu0 %v3204
      %5440 = vmatpush.bf16.msra.mxu0 %v3202
      %5441 = vmatpush.bf16.msra.mxu0 %v3200
      %5442 = vmatpush.bf16.msra.mxu0 %v3198
      %5443 = vmatpush.bf16.msra.mxu0 %v3196
      %5444 = vmatmul.bf16.gmra.mxu0 %v1524
      %v5445 = vpop.f32.mrf.mxu0
      %v5446 = vadd.f32 %v5397, %v5445
      %v5447 = vpop.f32.mrf.mxu0
      %v5448 = vadd.f32 %v5399, %v5447
      %5449 = vmatmul.bf16.gmra.mxu0 %v1548
      %v5450 = vpop.f32.mrf.mxu0
      %v5451 = vadd.f32 %v5402, %v5450
      %v5452 = vpop.f32.mrf.mxu0
      %v5453 = vadd.f32 %v5404, %v5452
      %5454 = vmatmul.bf16.gmra.mxu0 %v1572
      %v5455 = vpop.f32.mrf.mxu0
      %v5456 = vadd.f32 %v5407, %v5455
      %v5457 = vpop.f32.mrf.mxu0
      %v5458 = vadd.f32 %v5409, %v5457
      %5459 = vmatmul.bf16.gmra.mxu0 %v1596
      %v5460 = vpop.f32.mrf.mxu0
      %v5461 = vadd.f32 %v5412, %v5460
      %v5462 = vpop.f32.mrf.mxu0
      %v5463 = vadd.f32 %v5414, %v5462
      %5464 = vmatmul.bf16.gmra.mxu0 %v1620
      %v5465 = vpop.f32.mrf.mxu0
      %v5466 = vadd.f32 %v5417, %v5465
      %v5467 = vpop.f32.mrf.mxu0
      %v5468 = vadd.f32 %v5419, %v5467
      %5469 = vmatmul.bf16.gmra.mxu0 %v1644
      %v5470 = vpop.f32.mrf.mxu0
      %v5471 = vadd.f32 %v5422, %v5470
      %v5472 = vpop.f32.mrf.mxu0
      %v5473 = vadd.f32 %v5424, %v5472
      %5474 = vmatmul.bf16.gmra.mxu0 %v1668
      %v5475 = vpop.f32.mrf.mxu0
      %v5476 = vadd.f32 %v5427, %v5475
      %v5477 = vpop.f32.mrf.mxu0
      %v5478 = vadd.f32 %v5429, %v5477
      %5479 = vmatmul.bf16.gmra.mxu0 %v1692
      %v5480 = vpop.f32.mrf.mxu0
      %v5481 = vadd.f32 %v5432, %v5480
      %v5482 = vpop.f32.mrf.mxu0
      %v5483 = vadd.f32 %v5434, %v5482
      %5484 = vdwg.mxu0
      %5485 = vmatpush.bf16.msra.mxu0 %v3226
      %5486 = vmatpush.bf16.msra.mxu0 %v3224
      %5487 = vmatpush.bf16.msra.mxu0 %v3222
      %5488 = vmatpush.bf16.msra.mxu0 %v3220
      %5489 = vmatpush.bf16.msra.mxu0 %v3218
      %5490 = vmatpush.bf16.msra.mxu0 %v3216
      %5491 = vmatpush.bf16.msra.mxu0 %v3214
      %5492 = vmatpush.bf16.msra.mxu0 %v3212
      %5493 = vmatmul.bf16.gmra.mxu0 %v1525
      %v5494 = vpop.f32.mrf.mxu0
      %v5495 = vadd.f32 %v5446, %v5494
      %v5496 = vpop.f32.mrf.mxu0
      %v5497 = vadd.f32 %v5448, %v5496
      %5498 = vmatmul.bf16.gmra.mxu0 %v1549
      %v5499 = vpop.f32.mrf.mxu0
      %v5500 = vadd.f32 %v5451, %v5499
      %v5501 = vpop.f32.mrf.mxu0
      %v5502 = vadd.f32 %v5453, %v5501
      %5503 = vmatmul.bf16.gmra.mxu0 %v1573
      %v5504 = vpop.f32.mrf.mxu0
      %v5505 = vadd.f32 %v5456, %v5504
      %v5506 = vpop.f32.mrf.mxu0
      %v5507 = vadd.f32 %v5458, %v5506
      %5508 = vmatmul.bf16.gmra.mxu0 %v1597
      %v5509 = vpop.f32.mrf.mxu0
      %v5510 = vadd.f32 %v5461, %v5509
      %v5511 = vpop.f32.mrf.mxu0
      %v5512 = vadd.f32 %v5463, %v5511
      %5513 = vmatmul.bf16.gmra.mxu0 %v1621
      %v5514 = vpop.f32.mrf.mxu0
      %v5515 = vadd.f32 %v5466, %v5514
      %v5516 = vpop.f32.mrf.mxu0
      %v5517 = vadd.f32 %v5468, %v5516
      %5518 = vmatmul.bf16.gmra.mxu0 %v1645
      %v5519 = vpop.f32.mrf.mxu0
      %v5520 = vadd.f32 %v5471, %v5519
      %v5521 = vpop.f32.mrf.mxu0
      %v5522 = vadd.f32 %v5473, %v5521
      %5523 = vmatmul.bf16.gmra.mxu0 %v1669
      %v5524 = vpop.f32.mrf.mxu0
      %v5525 = vadd.f32 %v5476, %v5524
      %v5526 = vpop.f32.mrf.mxu0
      %v5527 = vadd.f32 %v5478, %v5526
      %5528 = vmatmul.bf16.gmra.mxu0 %v1693
      %v5529 = vpop.f32.mrf.mxu0
      %v5530 = vadd.f32 %v5481, %v5529
      %v5531 = vpop.f32.mrf.mxu0
      %v5532 = vadd.f32 %v5483, %v5531
      %5533 = vdwg.mxu0
      %5534 = vmatpush.bf16.msra.mxu0 %v3242
      %5535 = vmatpush.bf16.msra.mxu0 %v3240
      %5536 = vmatpush.bf16.msra.mxu0 %v3238
      %5537 = vmatpush.bf16.msra.mxu0 %v3236
      %5538 = vmatpush.bf16.msra.mxu0 %v3234
      %5539 = vmatpush.bf16.msra.mxu0 %v3232
      %5540 = vmatpush.bf16.msra.mxu0 %v3230
      %5541 = vmatpush.bf16.msra.mxu0 %v3228
      %5542 = vmatmul.bf16.gmra.mxu0 %v1526
      %v5543 = vpop.f32.mrf.mxu0
      %v5544 = vadd.f32 %v5495, %v5543
      %v5545 = vpop.f32.mrf.mxu0
      %v5546 = vadd.f32 %v5497, %v5545
      %5547 = vmatmul.bf16.gmra.mxu0 %v1550
      %v5548 = vpop.f32.mrf.mxu0
      %v5549 = vadd.f32 %v5500, %v5548
      %v5550 = vpop.f32.mrf.mxu0
      %v5551 = vadd.f32 %v5502, %v5550
      %5552 = vmatmul.bf16.gmra.mxu0 %v1574
      %v5553 = vpop.f32.mrf.mxu0
      %v5554 = vadd.f32 %v5505, %v5553
      %v5555 = vpop.f32.mrf.mxu0
      %v5556 = vadd.f32 %v5507, %v5555
      %5557 = vmatmul.bf16.gmra.mxu0 %v1598
      %v5558 = vpop.f32.mrf.mxu0
      %v5559 = vadd.f32 %v5510, %v5558
      %v5560 = vpop.f32.mrf.mxu0
      %v5561 = vadd.f32 %v5512, %v5560
      %5562 = vmatmul.bf16.gmra.mxu0 %v1622
      %v5563 = vpop.f32.mrf.mxu0
      %v5564 = vadd.f32 %v5515, %v5563
      %v5565 = vpop.f32.mrf.mxu0
      %v5566 = vadd.f32 %v5517, %v5565
      %5567 = vmatmul.bf16.gmra.mxu0 %v1646
      %v5568 = vpop.f32.mrf.mxu0
      %v5569 = vadd.f32 %v5520, %v5568
      %v5570 = vpop.f32.mrf.mxu0
      %v5571 = vadd.f32 %v5522, %v5570
      %5572 = vmatmul.bf16.gmra.mxu0 %v1670
      %v5573 = vpop.f32.mrf.mxu0
      %v5574 = vadd.f32 %v5525, %v5573
      %v5575 = vpop.f32.mrf.mxu0
      %v5576 = vadd.f32 %v5527, %v5575
      %5577 = vmatmul.bf16.gmra.mxu0 %v1694
      %v5578 = vpop.f32.mrf.mxu0
      %v5579 = vadd.f32 %v5530, %v5578
      %v5580 = vpop.f32.mrf.mxu0
      %v5581 = vadd.f32 %v5532, %v5580
      %5582 = vdwg.mxu0
      %5583 = vmatpush.bf16.msra.mxu0 %v3258
      %5584 = vmatpush.bf16.msra.mxu0 %v3256
      %5585 = vmatpush.bf16.msra.mxu0 %v3254
      %5586 = vmatpush.bf16.msra.mxu0 %v3252
      %5587 = vmatpush.bf16.msra.mxu0 %v3250
      %5588 = vmatpush.bf16.msra.mxu0 %v3248
      %5589 = vmatpush.bf16.msra.mxu0 %v3246
      %5590 = vmatpush.bf16.msra.mxu0 %v3244
      %5591 = vmatmul.bf16.gmra.mxu0 %v1527
      %v5592 = vpop.f32.mrf.mxu0
      %v5593 = vadd.f32 %v5544, %v5592
      %v5594 = vpop.f32.mrf.mxu0
      %v5595 = vadd.f32 %v5546, %v5594
      %5596 = vmatmul.bf16.gmra.mxu0 %v1551
      %v5597 = vpop.f32.mrf.mxu0
      %v5598 = vadd.f32 %v5549, %v5597
      %v5599 = vpop.f32.mrf.mxu0
      %v5600 = vadd.f32 %v5551, %v5599
      %5601 = vmatmul.bf16.gmra.mxu0 %v1575
      %v5602 = vpop.f32.mrf.mxu0
      %v5603 = vadd.f32 %v5554, %v5602
      %v5604 = vpop.f32.mrf.mxu0
      %v5605 = vadd.f32 %v5556, %v5604
      %5606 = vmatmul.bf16.gmra.mxu0 %v1599
      %v5607 = vpop.f32.mrf.mxu0
      %v5608 = vadd.f32 %v5559, %v5607
      %v5609 = vpop.f32.mrf.mxu0
      %v5610 = vadd.f32 %v5561, %v5609
      %5611 = vmatmul.bf16.gmra.mxu0 %v1623
      %v5612 = vpop.f32.mrf.mxu0
      %v5613 = vadd.f32 %v5564, %v5612
      %v5614 = vpop.f32.mrf.mxu0
      %v5615 = vadd.f32 %v5566, %v5614
      %5616 = vmatmul.bf16.gmra.mxu0 %v1647
      %v5617 = vpop.f32.mrf.mxu0
      %v5618 = vadd.f32 %v5569, %v5617
      %v5619 = vpop.f32.mrf.mxu0
      %v5620 = vadd.f32 %v5571, %v5619
      %5621 = vmatmul.bf16.gmra.mxu0 %v1671
      %v5622 = vpop.f32.mrf.mxu0
      %v5623 = vadd.f32 %v5574, %v5622
      %v5624 = vpop.f32.mrf.mxu0
      %v5625 = vadd.f32 %v5576, %v5624
      %5626 = vmatmul.bf16.gmra.mxu0 %v1695
      %v5627 = vpop.f32.mrf.mxu0
      %v5628 = vadd.f32 %v5579, %v5627
      %v5629 = vpop.f32.mrf.mxu0
      %v5630 = vadd.f32 %v5581, %v5629
      %5631 = vdwg.mxu0
      %5632 = vmatpush.bf16.msra.mxu0 %v3274
      %5633 = vmatpush.bf16.msra.mxu0 %v3272
      %5634 = vmatpush.bf16.msra.mxu0 %v3270
      %5635 = vmatpush.bf16.msra.mxu0 %v3268
      %5636 = vmatpush.bf16.msra.mxu0 %v3266
      %5637 = vmatpush.bf16.msra.mxu0 %v3264
      %5638 = vmatpush.bf16.msra.mxu0 %v3262
      %5639 = vmatpush.bf16.msra.mxu0 %v3260
      %5640 = vmatmul.bf16.gmra.mxu0 %v1528
      %v5641 = vpop.f32.mrf.mxu0
      %v5642 = vadd.f32 %v5593, %v5641
      %v5643 = vpop.f32.mrf.mxu0
      %v5644 = vadd.f32 %v5595, %v5643
      %5645 = vmatmul.bf16.gmra.mxu0 %v1552
      %v5646 = vpop.f32.mrf.mxu0
      %v5647 = vadd.f32 %v5598, %v5646
      %v5648 = vpop.f32.mrf.mxu0
      %v5649 = vadd.f32 %v5600, %v5648
      %5650 = vmatmul.bf16.gmra.mxu0 %v1576
      %v5651 = vpop.f32.mrf.mxu0
      %v5652 = vadd.f32 %v5603, %v5651
      %v5653 = vpop.f32.mrf.mxu0
      %v5654 = vadd.f32 %v5605, %v5653
      %5655 = vmatmul.bf16.gmra.mxu0 %v1600
      %v5656 = vpop.f32.mrf.mxu0
      %v5657 = vadd.f32 %v5608, %v5656
      %v5658 = vpop.f32.mrf.mxu0
      %v5659 = vadd.f32 %v5610, %v5658
      %5660 = vmatmul.bf16.gmra.mxu0 %v1624
      %v5661 = vpop.f32.mrf.mxu0
      %v5662 = vadd.f32 %v5613, %v5661
      %v5663 = vpop.f32.mrf.mxu0
      %v5664 = vadd.f32 %v5615, %v5663
      %5665 = vmatmul.bf16.gmra.mxu0 %v1648
      %v5666 = vpop.f32.mrf.mxu0
      %v5667 = vadd.f32 %v5618, %v5666
      %v5668 = vpop.f32.mrf.mxu0
      %v5669 = vadd.f32 %v5620, %v5668
      %5670 = vmatmul.bf16.gmra.mxu0 %v1672
      %v5671 = vpop.f32.mrf.mxu0
      %v5672 = vadd.f32 %v5623, %v5671
      %v5673 = vpop.f32.mrf.mxu0
      %v5674 = vadd.f32 %v5625, %v5673
      %5675 = vmatmul.bf16.gmra.mxu0 %v1696
      %v5676 = vpop.f32.mrf.mxu0
      %v5677 = vadd.f32 %v5628, %v5676
      %v5678 = vpop.f32.mrf.mxu0
      %v5679 = vadd.f32 %v5630, %v5678
      %5680 = vdwg.mxu0
      %5681 = vmatpush.bf16.msra.mxu0 %v3290
      %5682 = vmatpush.bf16.msra.mxu0 %v3288
      %5683 = vmatpush.bf16.msra.mxu0 %v3286
      %5684 = vmatpush.bf16.msra.mxu0 %v3284
      %5685 = vmatpush.bf16.msra.mxu0 %v3282
      %5686 = vmatpush.bf16.msra.mxu0 %v3280
      %5687 = vmatpush.bf16.msra.mxu0 %v3278
      %5688 = vmatpush.bf16.msra.mxu0 %v3276
      %5689 = vmatmul.bf16.gmra.mxu0 %v1529
      %v5690 = vpop.f32.mrf.mxu0
      %v5691 = vadd.f32 %v5642, %v5690
      %v5692 = vpop.f32.mrf.mxu0
      %v5693 = vadd.f32 %v5644, %v5692
      %5694 = vmatmul.bf16.gmra.mxu0 %v1553
      %v5695 = vpop.f32.mrf.mxu0
      %v5696 = vadd.f32 %v5647, %v5695
      %v5697 = vpop.f32.mrf.mxu0
      %v5698 = vadd.f32 %v5649, %v5697
      %5699 = vmatmul.bf16.gmra.mxu0 %v1577
      %v5700 = vpop.f32.mrf.mxu0
      %v5701 = vadd.f32 %v5652, %v5700
      %v5702 = vpop.f32.mrf.mxu0
      %v5703 = vadd.f32 %v5654, %v5702
      %5704 = vmatmul.bf16.gmra.mxu0 %v1601
      %v5705 = vpop.f32.mrf.mxu0
      %v5706 = vadd.f32 %v5657, %v5705
      %v5707 = vpop.f32.mrf.mxu0
      %v5708 = vadd.f32 %v5659, %v5707
      %5709 = vmatmul.bf16.gmra.mxu0 %v1625
      %v5710 = vpop.f32.mrf.mxu0
      %v5711 = vadd.f32 %v5662, %v5710
      %v5712 = vpop.f32.mrf.mxu0
      %v5713 = vadd.f32 %v5664, %v5712
      %5714 = vmatmul.bf16.gmra.mxu0 %v1649
      %v5715 = vpop.f32.mrf.mxu0
      %v5716 = vadd.f32 %v5667, %v5715
      %v5717 = vpop.f32.mrf.mxu0
      %v5718 = vadd.f32 %v5669, %v5717
      %5719 = vmatmul.bf16.gmra.mxu0 %v1673
      %v5720 = vpop.f32.mrf.mxu0
      %v5721 = vadd.f32 %v5672, %v5720
      %v5722 = vpop.f32.mrf.mxu0
      %v5723 = vadd.f32 %v5674, %v5722
      %5724 = vmatmul.bf16.gmra.mxu0 %v1697
      %v5725 = vpop.f32.mrf.mxu0
      %v5726 = vadd.f32 %v5677, %v5725
      %v5727 = vpop.f32.mrf.mxu0
      %v5728 = vadd.f32 %v5679, %v5727
      %5729 = vdwg.mxu0
      %5730 = vmatpush.bf16.msra.mxu0 %v3306
      %5731 = vmatpush.bf16.msra.mxu0 %v3304
      %5732 = vmatpush.bf16.msra.mxu0 %v3302
      %5733 = vmatpush.bf16.msra.mxu0 %v3300
      %5734 = vmatpush.bf16.msra.mxu0 %v3298
      %5735 = vmatpush.bf16.msra.mxu0 %v3296
      %5736 = vmatpush.bf16.msra.mxu0 %v3294
      %5737 = vmatpush.bf16.msra.mxu0 %v3292
      %5738 = vmatmul.bf16.gmra.mxu0 %v1530
      %v5739 = vpop.f32.mrf.mxu0
      %v5740 = vadd.f32 %v5691, %v5739
      %v5741 = vpop.f32.mrf.mxu0
      %v5742 = vadd.f32 %v5693, %v5741
      %5743 = vmatmul.bf16.gmra.mxu0 %v1554
      %v5744 = vpop.f32.mrf.mxu0
      %v5745 = vadd.f32 %v5696, %v5744
      %v5746 = vpop.f32.mrf.mxu0
      %v5747 = vadd.f32 %v5698, %v5746
      %5748 = vmatmul.bf16.gmra.mxu0 %v1578
      %v5749 = vpop.f32.mrf.mxu0
      %v5750 = vadd.f32 %v5701, %v5749
      %v5751 = vpop.f32.mrf.mxu0
      %v5752 = vadd.f32 %v5703, %v5751
      %5753 = vmatmul.bf16.gmra.mxu0 %v1602
      %v5754 = vpop.f32.mrf.mxu0
      %v5755 = vadd.f32 %v5706, %v5754
      %v5756 = vpop.f32.mrf.mxu0
      %v5757 = vadd.f32 %v5708, %v5756
      %5758 = vmatmul.bf16.gmra.mxu0 %v1626
      %v5759 = vpop.f32.mrf.mxu0
      %v5760 = vadd.f32 %v5711, %v5759
      %v5761 = vpop.f32.mrf.mxu0
      %v5762 = vadd.f32 %v5713, %v5761
      %5763 = vmatmul.bf16.gmra.mxu0 %v1650
      %v5764 = vpop.f32.mrf.mxu0
      %v5765 = vadd.f32 %v5716, %v5764
      %v5766 = vpop.f32.mrf.mxu0
      %v5767 = vadd.f32 %v5718, %v5766
      %5768 = vmatmul.bf16.gmra.mxu0 %v1674
      %v5769 = vpop.f32.mrf.mxu0
      %v5770 = vadd.f32 %v5721, %v5769
      %v5771 = vpop.f32.mrf.mxu0
      %v5772 = vadd.f32 %v5723, %v5771
      %5773 = vmatmul.bf16.gmra.mxu0 %v1698
      %v5774 = vpop.f32.mrf.mxu0
      %v5775 = vadd.f32 %v5726, %v5774
      %v5776 = vpop.f32.mrf.mxu0
      %v5777 = vadd.f32 %v5728, %v5776
      %5778 = vdwg.mxu0
      %5779 = vmatpush.bf16.msra.mxu0 %v3322
      %5780 = vmatpush.bf16.msra.mxu0 %v3320
      %5781 = vmatpush.bf16.msra.mxu0 %v3318
      %5782 = vmatpush.bf16.msra.mxu0 %v3316
      %5783 = vmatpush.bf16.msra.mxu0 %v3314
      %5784 = vmatpush.bf16.msra.mxu0 %v3312
      %5785 = vmatpush.bf16.msra.mxu0 %v3310
      %5786 = vmatpush.bf16.msra.mxu0 %v3308
      %5787 = vmatmul.bf16.gmra.mxu0 %v1531
      %v5788 = vpop.f32.mrf.mxu0
      %v5789 = vadd.f32 %v5740, %v5788
      %v5790 = vpop.f32.mrf.mxu0
      %v5791 = vadd.f32 %v5742, %v5790
      %5792 = vmatmul.bf16.gmra.mxu0 %v1555
      %v5793 = vpop.f32.mrf.mxu0
      %v5794 = vadd.f32 %v5745, %v5793
      %v5795 = vpop.f32.mrf.mxu0
      %v5796 = vadd.f32 %v5747, %v5795
      %5797 = vmatmul.bf16.gmra.mxu0 %v1579
      %v5798 = vpop.f32.mrf.mxu0
      %v5799 = vadd.f32 %v5750, %v5798
      %v5800 = vpop.f32.mrf.mxu0
      %v5801 = vadd.f32 %v5752, %v5800
      %5802 = vmatmul.bf16.gmra.mxu0 %v1603
      %v5803 = vpop.f32.mrf.mxu0
      %v5804 = vadd.f32 %v5755, %v5803
      %v5805 = vpop.f32.mrf.mxu0
      %v5806 = vadd.f32 %v5757, %v5805
      %5807 = vmatmul.bf16.gmra.mxu0 %v1627
      %v5808 = vpop.f32.mrf.mxu0
      %v5809 = vadd.f32 %v5760, %v5808
      %v5810 = vpop.f32.mrf.mxu0
      %v5811 = vadd.f32 %v5762, %v5810
      %5812 = vmatmul.bf16.gmra.mxu0 %v1651
      %v5813 = vpop.f32.mrf.mxu0
      %v5814 = vadd.f32 %v5765, %v5813
      %v5815 = vpop.f32.mrf.mxu0
      %v5816 = vadd.f32 %v5767, %v5815
      %5817 = vmatmul.bf16.gmra.mxu0 %v1675
      %v5818 = vpop.f32.mrf.mxu0
      %v5819 = vadd.f32 %v5770, %v5818
      %v5820 = vpop.f32.mrf.mxu0
      %v5821 = vadd.f32 %v5772, %v5820
      %5822 = vmatmul.bf16.gmra.mxu0 %v1699
      %v5823 = vpop.f32.mrf.mxu0
      %v5824 = vadd.f32 %v5775, %v5823
      %v5825 = vpop.f32.mrf.mxu0
      %v5826 = vadd.f32 %v5777, %v5825
      %5827 = vdwg.mxu0
      %5828 = vmatpush.bf16.msra.mxu0 %v3338
      %5829 = vmatpush.bf16.msra.mxu0 %v3336
      %5830 = vmatpush.bf16.msra.mxu0 %v3334
      %5831 = vmatpush.bf16.msra.mxu0 %v3332
      %5832 = vmatpush.bf16.msra.mxu0 %v3330
      %5833 = vmatpush.bf16.msra.mxu0 %v3328
      %5834 = vmatpush.bf16.msra.mxu0 %v3326
      %5835 = vmatpush.bf16.msra.mxu0 %v3324
      %5836 = vmatmul.bf16.gmra.mxu0 %v1532
      %v5837 = vpop.f32.mrf.mxu0
      %v5838 = vadd.f32 %v5789, %v5837
      %v5839 = vpop.f32.mrf.mxu0
      %v5840 = vadd.f32 %v5791, %v5839
      %5841 = vmatmul.bf16.gmra.mxu0 %v1556
      %v5842 = vpop.f32.mrf.mxu0
      %v5843 = vadd.f32 %v5794, %v5842
      %v5844 = vpop.f32.mrf.mxu0
      %v5845 = vadd.f32 %v5796, %v5844
      %5846 = vmatmul.bf16.gmra.mxu0 %v1580
      %v5847 = vpop.f32.mrf.mxu0
      %v5848 = vadd.f32 %v5799, %v5847
      %v5849 = vpop.f32.mrf.mxu0
      %v5850 = vadd.f32 %v5801, %v5849
      %5851 = vmatmul.bf16.gmra.mxu0 %v1604
      %v5852 = vpop.f32.mrf.mxu0
      %v5853 = vadd.f32 %v5804, %v5852
      %v5854 = vpop.f32.mrf.mxu0
      %v5855 = vadd.f32 %v5806, %v5854
      %5856 = vmatmul.bf16.gmra.mxu0 %v1628
      %v5857 = vpop.f32.mrf.mxu0
      %v5858 = vadd.f32 %v5809, %v5857
      %v5859 = vpop.f32.mrf.mxu0
      %v5860 = vadd.f32 %v5811, %v5859
      %5861 = vmatmul.bf16.gmra.mxu0 %v1652
      %v5862 = vpop.f32.mrf.mxu0
      %v5863 = vadd.f32 %v5814, %v5862
      %v5864 = vpop.f32.mrf.mxu0
      %v5865 = vadd.f32 %v5816, %v5864
      %5866 = vmatmul.bf16.gmra.mxu0 %v1676
      %v5867 = vpop.f32.mrf.mxu0
      %v5868 = vadd.f32 %v5819, %v5867
      %v5869 = vpop.f32.mrf.mxu0
      %v5870 = vadd.f32 %v5821, %v5869
      %5871 = vmatmul.bf16.gmra.mxu0 %v1700
      %v5872 = vpop.f32.mrf.mxu0
      %v5873 = vadd.f32 %v5824, %v5872
      %v5874 = vpop.f32.mrf.mxu0
      %v5875 = vadd.f32 %v5826, %v5874
      %5876 = vdwg.mxu0
      %5877 = vmatpush.bf16.msra.mxu0 %v3354
      %5878 = vmatpush.bf16.msra.mxu0 %v3352
      %5879 = vmatpush.bf16.msra.mxu0 %v3350
      %5880 = vmatpush.bf16.msra.mxu0 %v3348
      %5881 = vmatpush.bf16.msra.mxu0 %v3346
      %5882 = vmatpush.bf16.msra.mxu0 %v3344
      %5883 = vmatpush.bf16.msra.mxu0 %v3342
      %5884 = vmatpush.bf16.msra.mxu0 %v3340
      %5885 = vmatmul.bf16.gmra.mxu0 %v1533
      %v5886 = vpop.f32.mrf.mxu0
      %v5887 = vadd.f32 %v5838, %v5886
      %v5888 = vpop.f32.mrf.mxu0
      %v5889 = vadd.f32 %v5840, %v5888
      %5890 = vmatmul.bf16.gmra.mxu0 %v1557
      %v5891 = vpop.f32.mrf.mxu0
      %v5892 = vadd.f32 %v5843, %v5891
      %v5893 = vpop.f32.mrf.mxu0
      %v5894 = vadd.f32 %v5845, %v5893
      %5895 = vmatmul.bf16.gmra.mxu0 %v1581
      %v5896 = vpop.f32.mrf.mxu0
      %v5897 = vadd.f32 %v5848, %v5896
      %v5898 = vpop.f32.mrf.mxu0
      %v5899 = vadd.f32 %v5850, %v5898
      %5900 = vmatmul.bf16.gmra.mxu0 %v1605
      %v5901 = vpop.f32.mrf.mxu0
      %v5902 = vadd.f32 %v5853, %v5901
      %v5903 = vpop.f32.mrf.mxu0
      %v5904 = vadd.f32 %v5855, %v5903
      %5905 = vmatmul.bf16.gmra.mxu0 %v1629
      %v5906 = vpop.f32.mrf.mxu0
      %v5907 = vadd.f32 %v5858, %v5906
      %v5908 = vpop.f32.mrf.mxu0
      %v5909 = vadd.f32 %v5860, %v5908
      %5910 = vmatmul.bf16.gmra.mxu0 %v1653
      %v5911 = vpop.f32.mrf.mxu0
      %v5912 = vadd.f32 %v5863, %v5911
      %v5913 = vpop.f32.mrf.mxu0
      %v5914 = vadd.f32 %v5865, %v5913
      %5915 = vmatmul.bf16.gmra.mxu0 %v1677
      %v5916 = vpop.f32.mrf.mxu0
      %v5917 = vadd.f32 %v5868, %v5916
      %v5918 = vpop.f32.mrf.mxu0
      %v5919 = vadd.f32 %v5870, %v5918
      %5920 = vmatmul.bf16.gmra.mxu0 %v1701
      %v5921 = vpop.f32.mrf.mxu0
      %v5922 = vadd.f32 %v5873, %v5921
      %v5923 = vpop.f32.mrf.mxu0
      %v5924 = vadd.f32 %v5875, %v5923
      %5925 = vdwg.mxu0
      %5926 = vmatpush.bf16.msra.mxu0 %v3370
      %5927 = vmatpush.bf16.msra.mxu0 %v3368
      %5928 = vmatpush.bf16.msra.mxu0 %v3366
      %5929 = vmatpush.bf16.msra.mxu0 %v3364
      %5930 = vmatpush.bf16.msra.mxu0 %v3362
      %5931 = vmatpush.bf16.msra.mxu0 %v3360
      %5932 = vmatpush.bf16.msra.mxu0 %v3358
      %5933 = vmatpush.bf16.msra.mxu0 %v3356
      %5934 = vmatmul.bf16.gmra.mxu0 %v1534
      %v5935 = vpop.f32.mrf.mxu0
      %v5936 = vadd.f32 %v5887, %v5935
      %v5937 = vpop.f32.mrf.mxu0
      %v5938 = vadd.f32 %v5889, %v5937
      %5939 = vmatmul.bf16.gmra.mxu0 %v1558
      %v5940 = vpop.f32.mrf.mxu0
      %v5941 = vadd.f32 %v5892, %v5940
      %v5942 = vpop.f32.mrf.mxu0
      %v5943 = vadd.f32 %v5894, %v5942
      %5944 = vmatmul.bf16.gmra.mxu0 %v1582
      %v5945 = vpop.f32.mrf.mxu0
      %v5946 = vadd.f32 %v5897, %v5945
      %v5947 = vpop.f32.mrf.mxu0
      %v5948 = vadd.f32 %v5899, %v5947
      %5949 = vmatmul.bf16.gmra.mxu0 %v1606
      %v5950 = vpop.f32.mrf.mxu0
      %v5951 = vadd.f32 %v5902, %v5950
      %v5952 = vpop.f32.mrf.mxu0
      %v5953 = vadd.f32 %v5904, %v5952
      %5954 = vmatmul.bf16.gmra.mxu0 %v1630
      %v5955 = vpop.f32.mrf.mxu0
      %v5956 = vadd.f32 %v5907, %v5955
      %v5957 = vpop.f32.mrf.mxu0
      %v5958 = vadd.f32 %v5909, %v5957
      %5959 = vmatmul.bf16.gmra.mxu0 %v1654
      %v5960 = vpop.f32.mrf.mxu0
      %v5961 = vadd.f32 %v5912, %v5960
      %v5962 = vpop.f32.mrf.mxu0
      %v5963 = vadd.f32 %v5914, %v5962
      %5964 = vmatmul.bf16.gmra.mxu0 %v1678
      %v5965 = vpop.f32.mrf.mxu0
      %v5966 = vadd.f32 %v5917, %v5965
      %v5967 = vpop.f32.mrf.mxu0
      %v5968 = vadd.f32 %v5919, %v5967
      %5969 = vmatmul.bf16.gmra.mxu0 %v1702
      %v5970 = vpop.f32.mrf.mxu0
      %v5971 = vadd.f32 %v5922, %v5970
      %v5972 = vpop.f32.mrf.mxu0
      %v5973 = vadd.f32 %v5924, %v5972
      %5974 = vdwg.mxu0
      %5975 = vmatpush.bf16.msra.mxu0 %v3386
      %5976 = vmatpush.bf16.msra.mxu0 %v3384
      %5977 = vmatpush.bf16.msra.mxu0 %v3382
      %5978 = vmatpush.bf16.msra.mxu0 %v3380
      %5979 = vmatpush.bf16.msra.mxu0 %v3378
      %5980 = vmatpush.bf16.msra.mxu0 %v3376
      %5981 = vmatpush.bf16.msra.mxu0 %v3374
      %5982 = vmatpush.bf16.msra.mxu0 %v3372
      %5983 = vmatmul.bf16.gmra.mxu0 %v1535
      %v5984 = vpop.f32.mrf.mxu0
      %v5985 = vadd.f32 %v5936, %v5984
      %v5986 = vpop.f32.mrf.mxu0
      %v5987 = vadd.f32 %v5938, %v5986
      %5988 = vmatmul.bf16.gmra.mxu0 %v1559
      %v5989 = vpop.f32.mrf.mxu0
      %v5990 = vadd.f32 %v5941, %v5989
      %v5991 = vpop.f32.mrf.mxu0
      %v5992 = vadd.f32 %v5943, %v5991
      %5993 = vmatmul.bf16.gmra.mxu0 %v1583
      %v5994 = vpop.f32.mrf.mxu0
      %v5995 = vadd.f32 %v5946, %v5994
      %v5996 = vpop.f32.mrf.mxu0
      %v5997 = vadd.f32 %v5948, %v5996
      %5998 = vmatmul.bf16.gmra.mxu0 %v1607
      %v5999 = vpop.f32.mrf.mxu0
      %v6000 = vadd.f32 %v5951, %v5999
      %v6001 = vpop.f32.mrf.mxu0
      %v6002 = vadd.f32 %v5953, %v6001
      %6003 = vmatmul.bf16.gmra.mxu0 %v1631
      %v6004 = vpop.f32.mrf.mxu0
      %v6005 = vadd.f32 %v5956, %v6004
      %v6006 = vpop.f32.mrf.mxu0
      %v6007 = vadd.f32 %v5958, %v6006
      %6008 = vmatmul.bf16.gmra.mxu0 %v1655
      %v6009 = vpop.f32.mrf.mxu0
      %v6010 = vadd.f32 %v5961, %v6009
      %v6011 = vpop.f32.mrf.mxu0
      %v6012 = vadd.f32 %v5963, %v6011
      %6013 = vmatmul.bf16.gmra.mxu0 %v1679
      %v6014 = vpop.f32.mrf.mxu0
      %v6015 = vadd.f32 %v5966, %v6014
      %v6016 = vpop.f32.mrf.mxu0
      %v6017 = vadd.f32 %v5968, %v6016
      %6018 = vmatmul.bf16.gmra.mxu0 %v1703
      %v6019 = vpop.f32.mrf.mxu0
      %v6020 = vadd.f32 %v5971, %v6019
      %v6021 = vpop.f32.mrf.mxu0
      %v6022 = vadd.f32 %v5973, %v6021
      %6023 = vdwg.mxu0
      %6024 = vmatpush.bf16.msra.mxu0 %v3402
      %6025 = vmatpush.bf16.msra.mxu0 %v3400
      %6026 = vmatpush.bf16.msra.mxu0 %v3398
      %6027 = vmatpush.bf16.msra.mxu0 %v3396
      %6028 = vmatpush.bf16.msra.mxu0 %v3394
      %6029 = vmatpush.bf16.msra.mxu0 %v3392
      %6030 = vmatpush.bf16.msra.mxu0 %v3390
      %6031 = vmatpush.bf16.msra.mxu0 %v3388
      %6032 = vmatmul.bf16.gmra.mxu0 %v1536
      %v6033 = vpop.f32.mrf.mxu0
      %v6034 = vadd.f32 %v5985, %v6033
      %v6035 = vpop.f32.mrf.mxu0
      %v6036 = vadd.f32 %v5987, %v6035
      %6037 = vmatmul.bf16.gmra.mxu0 %v1560
      %v6038 = vpop.f32.mrf.mxu0
      %v6039 = vadd.f32 %v5990, %v6038
      %v6040 = vpop.f32.mrf.mxu0
      %v6041 = vadd.f32 %v5992, %v6040
      %6042 = vmatmul.bf16.gmra.mxu0 %v1584
      %v6043 = vpop.f32.mrf.mxu0
      %v6044 = vadd.f32 %v5995, %v6043
      %v6045 = vpop.f32.mrf.mxu0
      %v6046 = vadd.f32 %v5997, %v6045
      %6047 = vmatmul.bf16.gmra.mxu0 %v1608
      %v6048 = vpop.f32.mrf.mxu0
      %v6049 = vadd.f32 %v6000, %v6048
      %v6050 = vpop.f32.mrf.mxu0
      %v6051 = vadd.f32 %v6002, %v6050
      %6052 = vmatmul.bf16.gmra.mxu0 %v1632
      %v6053 = vpop.f32.mrf.mxu0
      %v6054 = vadd.f32 %v6005, %v6053
      %v6055 = vpop.f32.mrf.mxu0
      %v6056 = vadd.f32 %v6007, %v6055
      %6057 = vmatmul.bf16.gmra.mxu0 %v1656
      %v6058 = vpop.f32.mrf.mxu0
      %v6059 = vadd.f32 %v6010, %v6058
      %v6060 = vpop.f32.mrf.mxu0
      %v6061 = vadd.f32 %v6012, %v6060
      %6062 = vmatmul.bf16.gmra.mxu0 %v1680
      %v6063 = vpop.f32.mrf.mxu0
      %v6064 = vadd.f32 %v6015, %v6063
      %v6065 = vpop.f32.mrf.mxu0
      %v6066 = vadd.f32 %v6017, %v6065
      %6067 = vmatmul.bf16.gmra.mxu0 %v1704
      %v6068 = vpop.f32.mrf.mxu0
      %v6069 = vadd.f32 %v6020, %v6068
      %v6070 = vpop.f32.mrf.mxu0
      %v6071 = vadd.f32 %v6022, %v6070
      %6072 = vdwg.mxu0
      %6073 = vmatpush.bf16.msra.mxu0 %v3418
      %6074 = vmatpush.bf16.msra.mxu0 %v3416
      %6075 = vmatpush.bf16.msra.mxu0 %v3414
      %6076 = vmatpush.bf16.msra.mxu0 %v3412
      %6077 = vmatpush.bf16.msra.mxu0 %v3410
      %6078 = vmatpush.bf16.msra.mxu0 %v3408
      %6079 = vmatpush.bf16.msra.mxu0 %v3406
      %6080 = vmatpush.bf16.msra.mxu0 %v3404
      %6081 = vmatmul.bf16.gmra.mxu0 %v1537
      %v6082 = vpop.f32.mrf.mxu0
      %v6083 = vadd.f32 %v6034, %v6082
      %v6084 = vpop.f32.mrf.mxu0
      %v6085 = vadd.f32 %v6036, %v6084
      %6086 = vmatmul.bf16.gmra.mxu0 %v1561
      %v6087 = vpop.f32.mrf.mxu0
      %v6088 = vadd.f32 %v6039, %v6087
      %v6089 = vpop.f32.mrf.mxu0
      %v6090 = vadd.f32 %v6041, %v6089
      %6091 = vmatmul.bf16.gmra.mxu0 %v1585
      %v6092 = vpop.f32.mrf.mxu0
      %v6093 = vadd.f32 %v6044, %v6092
      %v6094 = vpop.f32.mrf.mxu0
      %v6095 = vadd.f32 %v6046, %v6094
      %6096 = vmatmul.bf16.gmra.mxu0 %v1609
      %v6097 = vpop.f32.mrf.mxu0
      %v6098 = vadd.f32 %v6049, %v6097
      %v6099 = vpop.f32.mrf.mxu0
      %v6100 = vadd.f32 %v6051, %v6099
      %6101 = vmatmul.bf16.gmra.mxu0 %v1633
      %v6102 = vpop.f32.mrf.mxu0
      %v6103 = vadd.f32 %v6054, %v6102
      %v6104 = vpop.f32.mrf.mxu0
      %v6105 = vadd.f32 %v6056, %v6104
      %6106 = vmatmul.bf16.gmra.mxu0 %v1657
      %v6107 = vpop.f32.mrf.mxu0
      %v6108 = vadd.f32 %v6059, %v6107
      %v6109 = vpop.f32.mrf.mxu0
      %v6110 = vadd.f32 %v6061, %v6109
      %6111 = vmatmul.bf16.gmra.mxu0 %v1681
      %v6112 = vpop.f32.mrf.mxu0
      %v6113 = vadd.f32 %v6064, %v6112
      %v6114 = vpop.f32.mrf.mxu0
      %v6115 = vadd.f32 %v6066, %v6114
      %6116 = vmatmul.bf16.gmra.mxu0 %v1705
      %v6117 = vpop.f32.mrf.mxu0
      %v6118 = vadd.f32 %v6069, %v6117
      %v6119 = vpop.f32.mrf.mxu0
      %v6120 = vadd.f32 %v6071, %v6119
      %6121 = vdwg.mxu0
      %6122 = vmatpush.bf16.msra.mxu0 %v3434
      %6123 = vmatpush.bf16.msra.mxu0 %v3432
      %6124 = vmatpush.bf16.msra.mxu0 %v3430
      %6125 = vmatpush.bf16.msra.mxu0 %v3428
      %6126 = vmatpush.bf16.msra.mxu0 %v3426
      %6127 = vmatpush.bf16.msra.mxu0 %v3424
      %6128 = vmatpush.bf16.msra.mxu0 %v3422
      %6129 = vmatpush.bf16.msra.mxu0 %v3420
      %6130 = vmatmul.bf16.gmra.mxu0 %v1538
      %v6131 = vpop.f32.mrf.mxu0
      %v6132 = vadd.f32 %v6083, %v6131
      %v6133 = vpop.f32.mrf.mxu0
      %v6134 = vadd.f32 %v6085, %v6133
      %6135 = vmatmul.bf16.gmra.mxu0 %v1562
      %v6136 = vpop.f32.mrf.mxu0
      %v6137 = vadd.f32 %v6088, %v6136
      %v6138 = vpop.f32.mrf.mxu0
      %v6139 = vadd.f32 %v6090, %v6138
      %6140 = vmatmul.bf16.gmra.mxu0 %v1586
      %v6141 = vpop.f32.mrf.mxu0
      %v6142 = vadd.f32 %v6093, %v6141
      %v6143 = vpop.f32.mrf.mxu0
      %v6144 = vadd.f32 %v6095, %v6143
      %6145 = vmatmul.bf16.gmra.mxu0 %v1610
      %v6146 = vpop.f32.mrf.mxu0
      %v6147 = vadd.f32 %v6098, %v6146
      %v6148 = vpop.f32.mrf.mxu0
      %v6149 = vadd.f32 %v6100, %v6148
      %6150 = vmatmul.bf16.gmra.mxu0 %v1634
      %v6151 = vpop.f32.mrf.mxu0
      %v6152 = vadd.f32 %v6103, %v6151
      %v6153 = vpop.f32.mrf.mxu0
      %v6154 = vadd.f32 %v6105, %v6153
      %6155 = vmatmul.bf16.gmra.mxu0 %v1658
      %v6156 = vpop.f32.mrf.mxu0
      %v6157 = vadd.f32 %v6108, %v6156
      %v6158 = vpop.f32.mrf.mxu0
      %v6159 = vadd.f32 %v6110, %v6158
      %6160 = vmatmul.bf16.gmra.mxu0 %v1682
      %v6161 = vpop.f32.mrf.mxu0
      %v6162 = vadd.f32 %v6113, %v6161
      %v6163 = vpop.f32.mrf.mxu0
      %v6164 = vadd.f32 %v6115, %v6163
      %6165 = vmatmul.bf16.gmra.mxu0 %v1706
      %v6166 = vpop.f32.mrf.mxu0
      %v6167 = vadd.f32 %v6118, %v6166
      %v6168 = vpop.f32.mrf.mxu0
      %v6169 = vadd.f32 %v6120, %v6168
      %6170 = vdwg.mxu0
      %v6171 = vmax.f32 %v4956, 0.0
      %v6172 = vmax.f32 %v6132, 0.0
      %v6173 = vmax.f32 %v4958, 0.0
      %v6174 = vmax.f32 %v6134, 0.0
      %v6175 = vmax.f32 %v4961, 0.0
      %v6176 = vmax.f32 %v6137, 0.0
      %v6177 = vmax.f32 %v4963, 0.0
      %v6178 = vmax.f32 %v6139, 0.0
      %v6179 = vmax.f32 %v4966, 0.0
      %v6180 = vmax.f32 %v6142, 0.0
      %v6181 = vmax.f32 %v4968, 0.0
      %v6182 = vmax.f32 %v6144, 0.0
      %v6183 = vmax.f32 %v4971, 0.0
      %v6184 = vmax.f32 %v6147, 0.0
      %v6185 = vmax.f32 %v4973, 0.0
      %v6186 = vmax.f32 %v6149, 0.0
      %v6187 = vmax.f32 %v4976, 0.0
      %v6188 = vmax.f32 %v6152, 0.0
      %v6189 = vmax.f32 %v4978, 0.0
      %v6190 = vmax.f32 %v6154, 0.0
      %v6191 = vmax.f32 %v4981, 0.0
      %v6192 = vmax.f32 %v6157, 0.0
      %v6193 = vmax.f32 %v4983, 0.0
      %v6194 = vmax.f32 %v6159, 0.0
      %v6195 = vmax.f32 %v4986, 0.0
      %v6196 = vmax.f32 %v6162, 0.0
      %v6197 = vmax.f32 %v4988, 0.0
      %v6198 = vmax.f32 %v6164, 0.0
      %v6199 = vmax.f32 %v4991, 0.0
      %v6200 = vmax.f32 %v6167, 0.0
      %v6201 = vmax.f32 %v4993, 0.0
      %v6202 = vmax.f32 %v6169, 0.0
      %v6203 = vpack.c.bf16 %v6173, %v6171
      %v6204 = vpack.c.bf16 %v6174, %v6172
      %v6205 = vpack.c.bf16 %v6177, %v6175
      %v6206 = vpack.c.bf16 %v6178, %v6176
      %v6207 = vpack.c.bf16 %v6181, %v6179
      %v6208 = vpack.c.bf16 %v6182, %v6180
      %v6209 = vpack.c.bf16 %v6185, %v6183
      %v6210 = vpack.c.bf16 %v6186, %v6184
      %v6211 = vpack.c.bf16 %v6189, %v6187
      %v6212 = vpack.c.bf16 %v6190, %v6188
      %v6213 = vpack.c.bf16 %v6193, %v6191
      %v6214 = vpack.c.bf16 %v6194, %v6192
      %v6215 = vpack.c.bf16 %v6197, %v6195
      %v6216 = vpack.c.bf16 %v6198, %v6196
      %v6217 = vpack.c.bf16 %v6201, %v6199
      %v6218 = vpack.c.bf16 %v6202, %v6200
      %v6219 = vld [vmem:[%s3] sm:$0xf]
      %v6220 = vld [vmem:[%s3 + $0x4] sm:$0xf]
      %v6221 = vld [vmem:[%s3 + $0x8] sm:$0xf]
      %v6222 = vld [vmem:[%s3 + $0xc] sm:$0xf]
      %v6223 = vld [vmem:[%s3 + $0x10] sm:$0xf]
      %v6224 = vld [vmem:[%s3 + $0x14] sm:$0xf]
      %v6225 = vld [vmem:[%s3 + $0x18] sm:$0xf]
      %v6226 = vld [vmem:[%s3 + $0x1c] sm:$0xf]
      %v6227 = vld [vmem:[%s3 + $0x20] sm:$0xf]
      %v6228 = vld [vmem:[%s3 + $0x24] sm:$0xf]
      %v6229 = vld [vmem:[%s3 + $0x28] sm:$0xf]
      %v6230 = vld [vmem:[%s3 + $0x2c] sm:$0xf]
      %v6231 = vld [vmem:[%s3 + $0x30] sm:$0xf]
      %v6232 = vld [vmem:[%s3 + $0x34] sm:$0xf]
      %v6233 = vld [vmem:[%s3 + $0x38] sm:$0xf]
      %v6234 = vld [vmem:[%s3 + $0x3c] sm:$0xf]
      %v6235 = vld [vmem:[%s3 + $0x40] sm:$0xf]
      %v6236 = vld [vmem:[%s3 + $0x44] sm:$0xf]
      %v6237 = vld [vmem:[%s3 + $0x48] sm:$0xf]
      %v6238 = vld [vmem:[%s3 + $0x4c] sm:$0xf]
      %v6239 = vld [vmem:[%s3 + $0x50] sm:$0xf]
      %v6240 = vld [vmem:[%s3 + $0x54] sm:$0xf]
      %v6241 = vld [vmem:[%s3 + $0x58] sm:$0xf]
      %v6242 = vld [vmem:[%s3 + $0x5c] sm:$0xf]
      %v6243 = vld [vmem:[%s3 + $0x60] sm:$0xf]
      %v6244 = vld [vmem:[%s3 + $0x64] sm:$0xf]
      %v6245 = vld [vmem:[%s3 + $0x68] sm:$0xf]
      %v6246 = vld [vmem:[%s3 + $0x6c] sm:$0xf]
      %v6247 = vld [vmem:[%s3 + $0x70] sm:$0xf]
      %v6248 = vld [vmem:[%s3 + $0x74] sm:$0xf]
      %v6249 = vld [vmem:[%s3 + $0x78] sm:$0xf]
      %v6250 = vld [vmem:[%s3 + $0x7c] sm:$0xf]
      %v6251 = vld [vmem:[%s4] sm:$0x1]
      %v6253 = vperm.slane %v6251, 0
      %v6287 = vunpack.c.l.b16 %v6219
      %v6288 = vunpack.c.l.b16 %v6220
      %v6289 = vunpack.c.l.b16 %v6221
      %v6290 = vunpack.c.l.b16 %v6222
      %v6291 = vunpack.c.l.b16 %v6223
      %v6292 = vunpack.c.l.b16 %v6224
      %v6293 = vunpack.c.l.b16 %v6225
      %v6294 = vunpack.c.l.b16 %v6226
      %v6295 = vunpack.c.l.b16 %v6227
      %v6296 = vunpack.c.l.b16 %v6228
      %v6297 = vunpack.c.l.b16 %v6229
      %v6298 = vunpack.c.l.b16 %v6230
      %v6299 = vunpack.c.l.b16 %v6231
      %v6300 = vunpack.c.l.b16 %v6232
      %v6301 = vunpack.c.l.b16 %v6233
      %v6302 = vunpack.c.l.b16 %v6234
      %v6303 = vunpack.c.l.b16 %v6235
      %v6304 = vunpack.c.l.b16 %v6236
      %v6305 = vunpack.c.l.b16 %v6237
      %v6306 = vunpack.c.l.b16 %v6238
      %v6307 = vunpack.c.l.b16 %v6239
      %v6308 = vunpack.c.l.b16 %v6240
      %v6309 = vunpack.c.l.b16 %v6241
      %v6310 = vunpack.c.l.b16 %v6242
      %v6311 = vunpack.c.l.b16 %v6243
      %v6312 = vunpack.c.l.b16 %v6244
      %v6313 = vunpack.c.l.b16 %v6245
      %v6314 = vunpack.c.l.b16 %v6246
      %v6315 = vunpack.c.l.b16 %v6247
      %v6316 = vunpack.c.l.b16 %v6248
      %v6317 = vunpack.c.l.b16 %v6249
      %v6318 = vunpack.c.l.b16 %v6250
      %v6319 = vpack.c.b16 %v6288, %v6287
      %v6320 = vpack.c.b16 %v6290, %v6289
      %v6321 = vpack.c.b16 %v6292, %v6291
      %v6322 = vpack.c.b16 %v6294, %v6293
      %v6323 = vpack.c.b16 %v6296, %v6295
      %v6324 = vpack.c.b16 %v6298, %v6297
      %v6325 = vpack.c.b16 %v6300, %v6299
      %v6326 = vpack.c.b16 %v6302, %v6301
      %v6327 = vpack.c.b16 %v6304, %v6303
      %v6328 = vpack.c.b16 %v6306, %v6305
      %v6329 = vpack.c.b16 %v6308, %v6307
      %v6330 = vpack.c.b16 %v6310, %v6309
      %v6331 = vpack.c.b16 %v6312, %v6311
      %v6332 = vpack.c.b16 %v6314, %v6313
      %v6333 = vpack.c.b16 %v6316, %v6315
      %v6334 = vpack.c.b16 %v6318, %v6317
      %6351 = vmatpush.bf16.msra.mxu0 %v6326
      %6352 = vmatpush.bf16.msra.mxu0 %v6325
      %6353 = vmatpush.bf16.msra.mxu0 %v6324
      %6354 = vmatpush.bf16.msra.mxu0 %v6323
      %6355 = vmatpush.bf16.msra.mxu0 %v6322
      %6356 = vmatpush.bf16.msra.mxu0 %v6321
      %6357 = vmatpush.bf16.msra.mxu0 %v6320
      %6358 = vmatpush.bf16.msra.mxu0 %v6319
      %6359 = vmatmul.bf16.gmra.mxu0 %v6203
      %v6360 = vpop.f32.mrf.mxu0
      %v6361 = vadd.f32 %v6253, %v6360
      %v6362 = vpop.f32.mrf.mxu0
      %v6363 = vadd.f32 %v6253, %v6362
      %6364 = vmatmul.bf16.gmra.mxu0 %v6205
      %v6365 = vpop.f32.mrf.mxu0
      %v6366 = vadd.f32 %v6253, %v6365
      %v6367 = vpop.f32.mrf.mxu0
      %v6368 = vadd.f32 %v6253, %v6367
      %6369 = vmatmul.bf16.gmra.mxu0 %v6207
      %v6370 = vpop.f32.mrf.mxu0
      %v6371 = vadd.f32 %v6253, %v6370
      %v6372 = vpop.f32.mrf.mxu0
      %v6373 = vadd.f32 %v6253, %v6372
      %6374 = vmatmul.bf16.gmra.mxu0 %v6209
      %v6375 = vpop.f32.mrf.mxu0
      %v6376 = vadd.f32 %v6253, %v6375
      %v6377 = vpop.f32.mrf.mxu0
      %v6378 = vadd.f32 %v6253, %v6377
      %6379 = vmatmul.bf16.gmra.mxu0 %v6211
      %v6380 = vpop.f32.mrf.mxu0
      %v6381 = vadd.f32 %v6253, %v6380
      %v6382 = vpop.f32.mrf.mxu0
      %v6383 = vadd.f32 %v6253, %v6382
      %6384 = vmatmul.bf16.gmra.mxu0 %v6213
      %v6385 = vpop.f32.mrf.mxu0
      %v6386 = vadd.f32 %v6253, %v6385
      %v6387 = vpop.f32.mrf.mxu0
      %v6388 = vadd.f32 %v6253, %v6387
      %6389 = vmatmul.bf16.gmra.mxu0 %v6215
      %v6390 = vpop.f32.mrf.mxu0
      %v6391 = vadd.f32 %v6253, %v6390
      %v6392 = vpop.f32.mrf.mxu0
      %v6393 = vadd.f32 %v6253, %v6392
      %6394 = vmatmul.bf16.gmra.mxu0 %v6217
      %v6395 = vpop.f32.mrf.mxu0
      %v6396 = vadd.f32 %v6253, %v6395
      %v6397 = vpop.f32.mrf.mxu0
      %v6398 = vadd.f32 %v6253, %v6397
      %6399 = vdwg.mxu0
      %6400 = vmatpush.bf16.msra.mxu0 %v6334
      %6401 = vmatpush.bf16.msra.mxu0 %v6333
      %6402 = vmatpush.bf16.msra.mxu0 %v6332
      %6403 = vmatpush.bf16.msra.mxu0 %v6331
      %6404 = vmatpush.bf16.msra.mxu0 %v6330
      %6405 = vmatpush.bf16.msra.mxu0 %v6329
      %6406 = vmatpush.bf16.msra.mxu0 %v6328
      %6407 = vmatpush.bf16.msra.mxu0 %v6327
      %6408 = vmatmul.bf16.gmra.mxu0 %v6204
      %v6409 = vpop.f32.mrf.mxu0
      %v6410 = vadd.f32 %v6361, %v6409
      %v6411 = vpop.f32.mrf.mxu0
      %v6412 = vadd.f32 %v6363, %v6411
      %6413 = vmatmul.bf16.gmra.mxu0 %v6206
      %v6414 = vpop.f32.mrf.mxu0
      %v6415 = vadd.f32 %v6366, %v6414
      %v6416 = vpop.f32.mrf.mxu0
      %v6417 = vadd.f32 %v6368, %v6416
      %6418 = vmatmul.bf16.gmra.mxu0 %v6208
      %v6419 = vpop.f32.mrf.mxu0
      %v6420 = vadd.f32 %v6371, %v6419
      %v6421 = vpop.f32.mrf.mxu0
      %v6422 = vadd.f32 %v6373, %v6421
      %6423 = vmatmul.bf16.gmra.mxu0 %v6210
      %v6424 = vpop.f32.mrf.mxu0
      %v6425 = vadd.f32 %v6376, %v6424
      %v6426 = vpop.f32.mrf.mxu0
      %v6427 = vadd.f32 %v6378, %v6426
      %6428 = vmatmul.bf16.gmra.mxu0 %v6212
      %v6429 = vpop.f32.mrf.mxu0
      %v6430 = vadd.f32 %v6381, %v6429
      %v6431 = vpop.f32.mrf.mxu0
      %v6432 = vadd.f32 %v6383, %v6431
      %6433 = vmatmul.bf16.gmra.mxu0 %v6214
      %v6434 = vpop.f32.mrf.mxu0
      %v6435 = vadd.f32 %v6386, %v6434
      %v6436 = vpop.f32.mrf.mxu0
      %v6437 = vadd.f32 %v6388, %v6436
      %6438 = vmatmul.bf16.gmra.mxu0 %v6216
      %v6439 = vpop.f32.mrf.mxu0
      %v6440 = vadd.f32 %v6391, %v6439
      %v6441 = vpop.f32.mrf.mxu0
      %v6442 = vadd.f32 %v6393, %v6441
      %6443 = vmatmul.bf16.gmra.mxu0 %v6218
      %v6444 = vpop.f32.mrf.mxu0
      %v6445 = vadd.f32 %v6396, %v6444
      %v6446 = vpop.f32.mrf.mxu0
      %v6447 = vadd.f32 %v6398, %v6446
      %6448 = vdwg.mxu0
      %v6449 = vmax.f32 %v6410, 0.0
      %v6450 = vmax.f32 %v6412, 0.0
      %v6451 = vmax.f32 %v6415, 0.0
      %v6452 = vmax.f32 %v6417, 0.0
      %v6453 = vmax.f32 %v6420, 0.0
      %v6454 = vmax.f32 %v6422, 0.0
      %v6455 = vmax.f32 %v6425, 0.0
      %v6456 = vmax.f32 %v6427, 0.0
      %v6457 = vmax.f32 %v6430, 0.0
      %v6458 = vmax.f32 %v6432, 0.0
      %v6459 = vmax.f32 %v6435, 0.0
      %v6460 = vmax.f32 %v6437, 0.0
      %v6461 = vmax.f32 %v6440, 0.0
      %v6462 = vmax.f32 %v6442, 0.0
      %v6463 = vmax.f32 %v6445, 0.0
      %v6464 = vmax.f32 %v6447, 0.0
      %vm6465 = vcmask 261120
      %6466 = vst.msk [vmem:[#allocation2] sm:$0xff] %vm6465, %v6449
      %6468 = vrot.lane.b32.xlu0 %v6450, 32
      %v6469 = vpop.permute.xlu0 %6468
      %vm6471 = vcmask 523520
      %6472 = vst.msk [vmem:[#allocation2] sm:$0xff] %vm6471, %v6469
      %6474 = vrot.lane.b32.xlu0 %v6451, 64
      %v6475 = vpop.permute.xlu0 %6474
      %vm6477 = vcmask 785920
      %6478 = vst.msk [vmem:[#allocation2] sm:$0xff] %vm6477, %v6475
      %6480 = vrot.lane.b32.xlu0 %v6452, 96
      %v6481 = vpop.permute.xlu0 %6480
      %vm6483 = vcmask 1048320
      %6484 = vst.msk [vmem:[#allocation2] sm:$0xff] %vm6483, %v6481
      %6485 = vst.msk [vmem:[#allocation2 + $0x8] sm:$0xff] %vm6465, %v6453
      %6487 = vrot.lane.b32.xlu0 %v6454, 32
      %v6488 = vpop.permute.xlu0 %6487
      %6490 = vst.msk [vmem:[#allocation2 + $0x8] sm:$0xff] %vm6471, %v6488
      %6492 = vrot.lane.b32.xlu0 %v6455, 64
      %v6493 = vpop.permute.xlu0 %6492
      %6495 = vst.msk [vmem:[#allocation2 + $0x8] sm:$0xff] %vm6477, %v6493
      %6497 = vrot.lane.b32.xlu0 %v6456, 96
      %v6498 = vpop.permute.xlu0 %6497
      %6500 = vst.msk [vmem:[#allocation2 + $0x8] sm:$0xff] %vm6483, %v6498
      %6501 = vst.msk [vmem:[#allocation2 + $0x10] sm:$0xff] %vm6465, %v6457
      %6503 = vrot.lane.b32.xlu0 %v6458, 32
      %v6504 = vpop.permute.xlu0 %6503
      %6506 = vst.msk [vmem:[#allocation2 + $0x10] sm:$0xff] %vm6471, %v6504
      %6508 = vrot.lane.b32.xlu0 %v6459, 64
      %v6509 = vpop.permute.xlu0 %6508
      %6511 = vst.msk [vmem:[#allocation2 + $0x10] sm:$0xff] %vm6477, %v6509
      %6513 = vrot.lane.b32.xlu0 %v6460, 96
      %v6514 = vpop.permute.xlu0 %6513
      %6516 = vst.msk [vmem:[#allocation2 + $0x10] sm:$0xff] %vm6483, %v6514
      %6517 = vst.msk [vmem:[#allocation2 + $0x18] sm:$0xff] %vm6465, %v6461
      %6519 = vrot.lane.b32.xlu0 %v6462, 32
      %v6520 = vpop.permute.xlu0 %6519
      %6522 = vst.msk [vmem:[#allocation2 + $0x18] sm:$0xff] %vm6471, %v6520
      %6524 = vrot.lane.b32.xlu0 %v6463, 64
      %v6525 = vpop.permute.xlu0 %6524
      %6527 = vst.msk [vmem:[#allocation2 + $0x18] sm:$0xff] %vm6477, %v6525
      %6529 = vrot.lane.b32.xlu0 %v6464, 96
      %v6530 = vpop.permute.xlu0 %6529
      %6532 = vst.msk [vmem:[#allocation2 + $0x18] sm:$0xff] %vm6483, %v6530
      %v6533 = vld [vmem:[#allocation2] sm:$0xff]
      %v6534 = vld [vmem:[#allocation2 + $0x8] sm:$0xff]
      %v6535 = vld [vmem:[#allocation2 + $0x10] sm:$0xff]
      %v6536 = vld [vmem:[#allocation2 + $0x18] sm:$0xff]
      %v6537 = vpack.c.bf16 %v6533, %v6533
      %v6538 = vpack.c.bf16 %v6534, %v6534
      %v6539 = vpack.c.bf16 %v6535, %v6535
      %v6540 = vpack.c.bf16 %v6536, %v6536
      %v6541 = vld [vmem:[%s5] sm:$0xff]
      %v6542 = vld [vmem:[%s5 + $0x8] sm:$0xff]
      %v6543 = vld [vmem:[%s5 + $0x10] sm:$0xff]
      %v6544 = vld [vmem:[%s5 + $0x18] sm:$0xff]
      %v6545 = vld [vmem:[%s5 + $0x20] sm:$0xff]
      %v6546 = vld [vmem:[%s5 + $0x28] sm:$0xff]
      %v6547 = vld [vmem:[%s5 + $0x30] sm:$0xff]
      %v6548 = vld [vmem:[%s5 + $0x38] sm:$0xff]
      %v6549 = vld [vmem:[%s5 + $0x40] sm:$0xff]
      %v6550 = vld [vmem:[%s5 + $0x48] sm:$0xff]
      %v6551 = vld [vmem:[%s5 + $0x50] sm:$0xff]
      %v6552 = vld [vmem:[%s5 + $0x58] sm:$0xff]
      %v6553 = vld [vmem:[%s5 + $0x60] sm:$0xff]
      %v6554 = vld [vmem:[%s5 + $0x68] sm:$0xff]
      %v6555 = vld [vmem:[%s5 + $0x70] sm:$0xff]
      %v6556 = vld [vmem:[%s5 + $0x78] sm:$0xff]
      %v6557 = vld [vmem:[%s5 + $0x80] sm:$0xff]
      %v6558 = vld [vmem:[%s5 + $0x88] sm:$0xff]
      %v6559 = vld [vmem:[%s5 + $0x90] sm:$0xff]
      %v6560 = vld [vmem:[%s5 + $0x98] sm:$0xff]
      %v6561 = vld [vmem:[%s5 + $0xa0] sm:$0xff]
      %v6562 = vld [vmem:[%s5 + $0xa8] sm:$0xff]
      %v6563 = vld [vmem:[%s5 + $0xb0] sm:$0xff]
      %v6564 = vld [vmem:[%s5 + $0xb8] sm:$0xff]
      %v6565 = vld [vmem:[%s5 + $0xc0] sm:$0xff]
      %v6566 = vld [vmem:[%s5 + $0xc8] sm:$0xff]
      %v6567 = vld [vmem:[%s5 + $0xd0] sm:$0xff]
      %v6568 = vld [vmem:[%s5 + $0xd8] sm:$0xff]
      %v6569 = vld [vmem:[%s5 + $0xe0] sm:$0xff]
      %v6570 = vld [vmem:[%s5 + $0xe8] sm:$0xff]
      %v6571 = vld [vmem:[%s5 + $0xf0] sm:$0xff]
      %v6572 = vld [vmem:[%s5 + $0xf8] sm:$0xff]
      %v6573 = vld [vmem:[%s5 + $0x100] sm:$0xff]
      %v6574 = vld [vmem:[%s5 + $0x108] sm:$0xff]
      %v6575 = vld [vmem:[%s5 + $0x110] sm:$0xff]
      %v6576 = vld [vmem:[%s5 + $0x118] sm:$0xff]
      %v6577 = vld [vmem:[%s5 + $0x120] sm:$0xff]
      %v6578 = vld [vmem:[%s5 + $0x128] sm:$0xff]
      %v6579 = vld [vmem:[%s5 + $0x130] sm:$0xff]
      %v6580 = vld [vmem:[%s5 + $0x138] sm:$0xff]
      %v6581 = vld [vmem:[%s5 + $0x140] sm:$0xff]
      %v6582 = vld [vmem:[%s5 + $0x148] sm:$0xff]
      %v6583 = vld [vmem:[%s5 + $0x150] sm:$0xff]
      %v6584 = vld [vmem:[%s5 + $0x158] sm:$0xff]
      %v6585 = vld [vmem:[%s5 + $0x160] sm:$0xff]
      %v6586 = vld [vmem:[%s5 + $0x168] sm:$0xff]
      %v6587 = vld [vmem:[%s5 + $0x170] sm:$0xff]
      %v6588 = vld [vmem:[%s5 + $0x178] sm:$0xff]
      %v6589 = vld [vmem:[%s5 + $0x180] sm:$0xff]
      %v6590 = vld [vmem:[%s5 + $0x188] sm:$0xff]
      %v6591 = vld [vmem:[%s5 + $0x190] sm:$0xff]
      %v6592 = vld [vmem:[%s5 + $0x198] sm:$0xff]
      %v6593 = vld [vmem:[%s5 + $0x1a0] sm:$0xff]
      %v6594 = vld [vmem:[%s5 + $0x1a8] sm:$0xff]
      %v6595 = vld [vmem:[%s5 + $0x1b0] sm:$0xff]
      %v6596 = vld [vmem:[%s5 + $0x1b8] sm:$0xff]
      %v6597 = vld [vmem:[%s5 + $0x1c0] sm:$0xff]
      %v6598 = vld [vmem:[%s5 + $0x1c8] sm:$0xff]
      %v6599 = vld [vmem:[%s5 + $0x1d0] sm:$0xff]
      %v6600 = vld [vmem:[%s5 + $0x1d8] sm:$0xff]
      %v6601 = vld [vmem:[%s5 + $0x1e0] sm:$0xff]
      %v6602 = vld [vmem:[%s5 + $0x1e8] sm:$0xff]
      %v6603 = vld [vmem:[%s5 + $0x1f0] sm:$0xff]
      %v6604 = vld [vmem:[%s5 + $0x1f8] sm:$0xff]
      %v6605 = vld [vmem:[%s6] sm:$0x3]
      %v6607 = vperm.slane %v6605, 0
      %v6608 = vperm.slane %v6605, 1
      %v6675 = vunpack.c.l.b16 %v6541
      %v6676 = vunpack.c.h.b16 %v6541
      %v6677 = vunpack.c.l.b16 %v6542
      %v6678 = vunpack.c.h.b16 %v6542
      %v6679 = vunpack.c.l.b16 %v6543
      %v6680 = vunpack.c.h.b16 %v6543
      %v6681 = vunpack.c.l.b16 %v6544
      %v6682 = vunpack.c.h.b16 %v6544
      %v6683 = vunpack.c.l.b16 %v6545
      %v6684 = vunpack.c.h.b16 %v6545
      %v6685 = vunpack.c.l.b16 %v6546
      %v6686 = vunpack.c.h.b16 %v6546
      %v6687 = vunpack.c.l.b16 %v6547
      %v6688 = vunpack.c.h.b16 %v6547
      %v6689 = vunpack.c.l.b16 %v6548
      %v6690 = vunpack.c.h.b16 %v6548
      %v6691 = vunpack.c.l.b16 %v6549
      %v6692 = vunpack.c.h.b16 %v6549
      %v6693 = vunpack.c.l.b16 %v6550
      %v6694 = vunpack.c.h.b16 %v6550
      %v6695 = vunpack.c.l.b16 %v6551
      %v6696 = vunpack.c.h.b16 %v6551
      %v6697 = vunpack.c.l.b16 %v6552
      %v6698 = vunpack.c.h.b16 %v6552
      %v6699 = vunpack.c.l.b16 %v6553
      %v6700 = vunpack.c.h.b16 %v6553
      %v6701 = vunpack.c.l.b16 %v6554
      %v6702 = vunpack.c.h.b16 %v6554
      %v6703 = vunpack.c.l.b16 %v6555
      %v6704 = vunpack.c.h.b16 %v6555
      %v6705 = vunpack.c.l.b16 %v6556
      %v6706 = vunpack.c.h.b16 %v6556
      %v6707 = vunpack.c.l.b16 %v6557
      %v6708 = vunpack.c.h.b16 %v6557
      %v6709 = vunpack.c.l.b16 %v6558
      %v6710 = vunpack.c.h.b16 %v6558
      %v6711 = vunpack.c.l.b16 %v6559
      %v6712 = vunpack.c.h.b16 %v6559
      %v6713 = vunpack.c.l.b16 %v6560
      %v6714 = vunpack.c.h.b16 %v6560
      %v6715 = vunpack.c.l.b16 %v6561
      %v6716 = vunpack.c.h.b16 %v6561
      %v6717 = vunpack.c.l.b16 %v6562
      %v6718 = vunpack.c.h.b16 %v6562
      %v6719 = vunpack.c.l.b16 %v6563
      %v6720 = vunpack.c.h.b16 %v6563
      %v6721 = vunpack.c.l.b16 %v6564
      %v6722 = vunpack.c.h.b16 %v6564
      %v6723 = vunpack.c.l.b16 %v6565
      %v6724 = vunpack.c.h.b16 %v6565
      %v6725 = vunpack.c.l.b16 %v6566
      %v6726 = vunpack.c.h.b16 %v6566
      %v6727 = vunpack.c.l.b16 %v6567
      %v6728 = vunpack.c.h.b16 %v6567
      %v6729 = vunpack.c.l.b16 %v6568
      %v6730 = vunpack.c.h.b16 %v6568
      %v6731 = vunpack.c.l.b16 %v6569
      %v6732 = vunpack.c.h.b16 %v6569
      %v6733 = vunpack.c.l.b16 %v6570
      %v6734 = vunpack.c.h.b16 %v6570
      %v6735 = vunpack.c.l.b16 %v6571
      %v6736 = vunpack.c.h.b16 %v6571
      %v6737 = vunpack.c.l.b16 %v6572
      %v6738 = vunpack.c.h.b16 %v6572
      %v6739 = vunpack.c.l.b16 %v6573
      %v6740 = vunpack.c.h.b16 %v6573
      %v6741 = vunpack.c.l.b16 %v6574
      %v6742 = vunpack.c.h.b16 %v6574
      %v6743 = vunpack.c.l.b16 %v6575
      %v6744 = vunpack.c.h.b16 %v6575
      %v6745 = vunpack.c.l.b16 %v6576
      %v6746 = vunpack.c.h.b16 %v6576
      %v6747 = vunpack.c.l.b16 %v6577
      %v6748 = vunpack.c.h.b16 %v6577
      %v6749 = vunpack.c.l.b16 %v6578
      %v6750 = vunpack.c.h.b16 %v6578
      %v6751 = vunpack.c.l.b16 %v6579
      %v6752 = vunpack.c.h.b16 %v6579
      %v6753 = vunpack.c.l.b16 %v6580
      %v6754 = vunpack.c.h.b16 %v6580
      %v6755 = vunpack.c.l.b16 %v6581
      %v6756 = vunpack.c.h.b16 %v6581
      %v6757 = vunpack.c.l.b16 %v6582
      %v6758 = vunpack.c.h.b16 %v6582
      %v6759 = vunpack.c.l.b16 %v6583
      %v6760 = vunpack.c.h.b16 %v6583
      %v6761 = vunpack.c.l.b16 %v6584
      %v6762 = vunpack.c.h.b16 %v6584
      %v6763 = vunpack.c.l.b16 %v6585
      %v6764 = vunpack.c.h.b16 %v6585
      %v6765 = vunpack.c.l.b16 %v6586
      %v6766 = vunpack.c.h.b16 %v6586
      %v6767 = vunpack.c.l.b16 %v6587
      %v6768 = vunpack.c.h.b16 %v6587
      %v6769 = vunpack.c.l.b16 %v6588
      %v6770 = vunpack.c.h.b16 %v6588
      %v6771 = vunpack.c.l.b16 %v6589
      %v6772 = vunpack.c.h.b16 %v6589
      %v6773 = vunpack.c.l.b16 %v6590
      %v6774 = vunpack.c.h.b16 %v6590
      %v6775 = vunpack.c.l.b16 %v6591
      %v6776 = vunpack.c.h.b16 %v6591
      %v6777 = vunpack.c.l.b16 %v6592
      %v6778 = vunpack.c.h.b16 %v6592
      %v6779 = vunpack.c.l.b16 %v6593
      %v6780 = vunpack.c.h.b16 %v6593
      %v6781 = vunpack.c.l.b16 %v6594
      %v6782 = vunpack.c.h.b16 %v6594
      %v6783 = vunpack.c.l.b16 %v6595
      %v6784 = vunpack.c.h.b16 %v6595
      %v6785 = vunpack.c.l.b16 %v6596
      %v6786 = vunpack.c.h.b16 %v6596
      %v6787 = vunpack.c.l.b16 %v6597
      %v6788 = vunpack.c.h.b16 %v6597
      %v6789 = vunpack.c.l.b16 %v6598
      %v6790 = vunpack.c.h.b16 %v6598
      %v6791 = vunpack.c.l.b16 %v6599
      %v6792 = vunpack.c.h.b16 %v6599
      %v6793 = vunpack.c.l.b16 %v6600
      %v6794 = vunpack.c.h.b16 %v6600
      %v6795 = vunpack.c.l.b16 %v6601
      %v6796 = vunpack.c.h.b16 %v6601
      %v6797 = vunpack.c.l.b16 %v6602
      %v6798 = vunpack.c.h.b16 %v6602
      %v6799 = vunpack.c.l.b16 %v6603
      %v6800 = vunpack.c.h.b16 %v6603
      %v6801 = vunpack.c.l.b16 %v6604
      %v6802 = vunpack.c.h.b16 %v6604
      %v6803 = vpack.c.b16 %v6677, %v6675
      %v6804 = vpack.c.b16 %v6678, %v6676
      %v6805 = vpack.c.b16 %v6681, %v6679
      %v6806 = vpack.c.b16 %v6682, %v6680
      %v6807 = vpack.c.b16 %v6685, %v6683
      %v6808 = vpack.c.b16 %v6686, %v6684
      %v6809 = vpack.c.b16 %v6689, %v6687
      %v6810 = vpack.c.b16 %v6690, %v6688
      %v6811 = vpack.c.b16 %v6693, %v6691
      %v6812 = vpack.c.b16 %v6694, %v6692
      %v6813 = vpack.c.b16 %v6697, %v6695
      %v6814 = vpack.c.b16 %v6698, %v6696
      %v6815 = vpack.c.b16 %v6701, %v6699
      %v6816 = vpack.c.b16 %v6702, %v6700
      %v6817 = vpack.c.b16 %v6705, %v6703
      %v6818 = vpack.c.b16 %v6706, %v6704
      %v6819 = vpack.c.b16 %v6709, %v6707
      %v6820 = vpack.c.b16 %v6710, %v6708
      %v6821 = vpack.c.b16 %v6713, %v6711
      %v6822 = vpack.c.b16 %v6714, %v6712
      %v6823 = vpack.c.b16 %v6717, %v6715
      %v6824 = vpack.c.b16 %v6718, %v6716
      %v6825 = vpack.c.b16 %v6721, %v6719
      %v6826 = vpack.c.b16 %v6722, %v6720
      %v6827 = vpack.c.b16 %v6725, %v6723
      %v6828 = vpack.c.b16 %v6726, %v6724
      %v6829 = vpack.c.b16 %v6729, %v6727
      %v6830 = vpack.c.b16 %v6730, %v6728
      %v6831 = vpack.c.b16 %v6733, %v6731
      %v6832 = vpack.c.b16 %v6734, %v6732
      %v6833 = vpack.c.b16 %v6737, %v6735
      %v6834 = vpack.c.b16 %v6738, %v6736
      %v6835 = vpack.c.b16 %v6741, %v6739
      %v6836 = vpack.c.b16 %v6742, %v6740
      %v6837 = vpack.c.b16 %v6745, %v6743
      %v6838 = vpack.c.b16 %v6746, %v6744
      %v6839 = vpack.c.b16 %v6749, %v6747
      %v6840 = vpack.c.b16 %v6750, %v6748
      %v6841 = vpack.c.b16 %v6753, %v6751
      %v6842 = vpack.c.b16 %v6754, %v6752
      %v6843 = vpack.c.b16 %v6757, %v6755
      %v6844 = vpack.c.b16 %v6758, %v6756
      %v6845 = vpack.c.b16 %v6761, %v6759
      %v6846 = vpack.c.b16 %v6762, %v6760
      %v6847 = vpack.c.b16 %v6765, %v6763
      %v6848 = vpack.c.b16 %v6766, %v6764
      %v6849 = vpack.c.b16 %v6769, %v6767
      %v6850 = vpack.c.b16 %v6770, %v6768
      %v6851 = vpack.c.b16 %v6773, %v6771
      %v6852 = vpack.c.b16 %v6774, %v6772
      %v6853 = vpack.c.b16 %v6777, %v6775
      %v6854 = vpack.c.b16 %v6778, %v6776
      %v6855 = vpack.c.b16 %v6781, %v6779
      %v6856 = vpack.c.b16 %v6782, %v6780
      %v6857 = vpack.c.b16 %v6785, %v6783
      %v6858 = vpack.c.b16 %v6786, %v6784
      %v6859 = vpack.c.b16 %v6789, %v6787
      %v6860 = vpack.c.b16 %v6790, %v6788
      %v6861 = vpack.c.b16 %v6793, %v6791
      %v6862 = vpack.c.b16 %v6794, %v6792
      %v6863 = vpack.c.b16 %v6797, %v6795
      %v6864 = vpack.c.b16 %v6798, %v6796
      %v6865 = vpack.c.b16 %v6801, %v6799
      %v6866 = vpack.c.b16 %v6802, %v6800
      %6931 = vmatpush.bf16.msra.mxu0 %v6817
      %6932 = vmatpush.bf16.msra.mxu0 %v6815
      %6933 = vmatpush.bf16.msra.mxu0 %v6813
      %6934 = vmatpush.bf16.msra.mxu0 %v6811
      %6935 = vmatpush.bf16.msra.mxu0 %v6809
      %6936 = vmatpush.bf16.msra.mxu0 %v6807
      %6937 = vmatpush.bf16.msra.mxu0 %v6805
      %6938 = vmatpush.bf16.msra.mxu0 %v6803
      %6939 = vmatmul.bf16.gmra.mxu0 %v6537
      %v6940 = vpop.f32.mrf.mxu0
      %v6941 = vadd.f32 %v6607, %v6940
      %v6942 = vpop.f32.mrf.mxu0
      %6943 = vdwg.mxu0
      %6944 = vmatpush.bf16.msra.mxu0 %v6833
      %6945 = vmatpush.bf16.msra.mxu0 %v6831
      %6946 = vmatpush.bf16.msra.mxu0 %v6829
      %6947 = vmatpush.bf16.msra.mxu0 %v6827
      %6948 = vmatpush.bf16.msra.mxu0 %v6825
      %6949 = vmatpush.bf16.msra.mxu0 %v6823
      %6950 = vmatpush.bf16.msra.mxu0 %v6821
      %6951 = vmatpush.bf16.msra.mxu0 %v6819
      %6952 = vmatmul.bf16.gmra.mxu0 %v6538
      %v6953 = vpop.f32.mrf.mxu0
      %v6954 = vadd.f32 %v6941, %v6953
      %v6955 = vpop.f32.mrf.mxu0
      %6956 = vdwg.mxu0
      %6957 = vmatpush.bf16.msra.mxu0 %v6849
      %6958 = vmatpush.bf16.msra.mxu0 %v6847
      %6959 = vmatpush.bf16.msra.mxu0 %v6845
      %6960 = vmatpush.bf16.msra.mxu0 %v6843
      %6961 = vmatpush.bf16.msra.mxu0 %v6841
      %6962 = vmatpush.bf16.msra.mxu0 %v6839
      %6963 = vmatpush.bf16.msra.mxu0 %v6837
      %6964 = vmatpush.bf16.msra.mxu0 %v6835
      %6965 = vmatmul.bf16.gmra.mxu0 %v6539
      %v6966 = vpop.f32.mrf.mxu0
      %v6967 = vadd.f32 %v6954, %v6966
      %v6968 = vpop.f32.mrf.mxu0
      %6969 = vdwg.mxu0
      %6970 = vmatpush.bf16.msra.mxu0 %v6865
      %6971 = vmatpush.bf16.msra.mxu0 %v6863
      %6972 = vmatpush.bf16.msra.mxu0 %v6861
      %6973 = vmatpush.bf16.msra.mxu0 %v6859
      %6974 = vmatpush.bf16.msra.mxu0 %v6857
      %6975 = vmatpush.bf16.msra.mxu0 %v6855
      %6976 = vmatpush.bf16.msra.mxu0 %v6853
      %6977 = vmatpush.bf16.msra.mxu0 %v6851
      %6978 = vmatmul.bf16.gmra.mxu0 %v6540
      %v6979 = vpop.f32.mrf.mxu0
      %v6980 = vadd.f32 %v6967, %v6979
      %v6981 = vpop.f32.mrf.mxu0
      %6982 = vdwg.mxu0
      %6983 = vmatpush.bf16.msra.mxu0 %v6818
      %6984 = vmatpush.bf16.msra.mxu0 %v6816
      %6985 = vmatpush.bf16.msra.mxu0 %v6814
      %6986 = vmatpush.bf16.msra.mxu0 %v6812
      %6987 = vmatpush.bf16.msra.mxu0 %v6810
      %6988 = vmatpush.bf16.msra.mxu0 %v6808
      %6989 = vmatpush.bf16.msra.mxu0 %v6806
      %6990 = vmatpush.bf16.msra.mxu0 %v6804
      %6991 = vmatmul.bf16.gmra.mxu0 %v6537
      %v6992 = vpop.f32.mrf.mxu0
      %v6993 = vadd.f32 %v6608, %v6992
      %v6994 = vpop.f32.mrf.mxu0
      %6995 = vdwg.mxu0
      %6996 = vmatpush.bf16.msra.mxu0 %v6834
      %6997 = vmatpush.bf16.msra.mxu0 %v6832
      %6998 = vmatpush.bf16.msra.mxu0 %v6830
      %6999 = vmatpush.bf16.msra.mxu0 %v6828
      %7000 = vmatpush.bf16.msra.mxu0 %v6826
      %7001 = vmatpush.bf16.msra.mxu0 %v6824
      %7002 = vmatpush.bf16.msra.mxu0 %v6822
      %7003 = vmatpush.bf16.msra.mxu0 %v6820
      %7004 = vmatmul.bf16.gmra.mxu0 %v6538
      %v7005 = vpop.f32.mrf.mxu0
      %v7006 = vadd.f32 %v6993, %v7005
      %v7007 = vpop.f32.mrf.mxu0
      %7008 = vdwg.mxu0
      %7009 = vmatpush.bf16.msra.mxu0 %v6850
      %7010 = vmatpush.bf16.msra.mxu0 %v6848
      %7011 = vmatpush.bf16.msra.mxu0 %v6846
      %7012 = vmatpush.bf16.msra.mxu0 %v6844
      %7013 = vmatpush.bf16.msra.mxu0 %v6842
      %7014 = vmatpush.bf16.msra.mxu0 %v6840
      %7015 = vmatpush.bf16.msra.mxu0 %v6838
      %7016 = vmatpush.bf16.msra.mxu0 %v6836
      %7017 = vmatmul.bf16.gmra.mxu0 %v6539
      %v7018 = vpop.f32.mrf.mxu0
      %v7019 = vadd.f32 %v7006, %v7018
      %v7020 = vpop.f32.mrf.mxu0
      %7021 = vdwg.mxu0
      %7022 = vmatpush.bf16.msra.mxu0 %v6866
      %7023 = vmatpush.bf16.msra.mxu0 %v6864
      %7024 = vmatpush.bf16.msra.mxu0 %v6862
      %7025 = vmatpush.bf16.msra.mxu0 %v6860
      %7026 = vmatpush.bf16.msra.mxu0 %v6858
      %7027 = vmatpush.bf16.msra.mxu0 %v6856
      %7028 = vmatpush.bf16.msra.mxu0 %v6854
      %7029 = vmatpush.bf16.msra.mxu0 %v6852
      %7030 = vmatmul.bf16.gmra.mxu0 %v6540
      %v7031 = vpop.f32.mrf.mxu0
      %v7032 = vadd.f32 %v7019, %v7031
      %v7033 = vpop.f32.mrf.mxu0
      %7034 = vdwg.mxu0
      %v7035 = vmax.f32 %v6980, 0.0
      %v7036 = vmax.f32 %v7032, 0.0
      %v7037 = vld [vmem:[%s7] sm:$0xff]
      %v7038 = vld [vmem:[%s7 + $0x8] sm:$0xff]
      %v7039 = vld [vmem:[%s7 + $0x10] sm:$0xff]
      %v7040 = vld [vmem:[%s7 + $0x18] sm:$0xff]
      %v7041 = vld [vmem:[%s7 + $0x20] sm:$0xff]
      %v7042 = vld [vmem:[%s7 + $0x28] sm:$0xff]
      %v7043 = vld [vmem:[%s7 + $0x30] sm:$0xff]
      %v7044 = vld [vmem:[%s7 + $0x38] sm:$0xff]
      %v7045 = vld [vmem:[%s7 + $0x40] sm:$0xff]
      %v7046 = vld [vmem:[%s7 + $0x48] sm:$0xff]
      %v7047 = vld [vmem:[%s7 + $0x50] sm:$0xff]
      %v7048 = vld [vmem:[%s7 + $0x58] sm:$0xff]
      %v7049 = vld [vmem:[%s7 + $0x60] sm:$0xff]
      %v7050 = vld [vmem:[%s7 + $0x68] sm:$0xff]
      %v7051 = vld [vmem:[%s7 + $0x70] sm:$0xff]
      %v7052 = vld [vmem:[%s7 + $0x78] sm:$0xff]
      %v7053 = vld [vmem:[%s7 + $0x80] sm:$0xff]
      %v7054 = vld [vmem:[%s7 + $0x88] sm:$0xff]
      %v7055 = vld [vmem:[%s7 + $0x90] sm:$0xff]
      %v7056 = vld [vmem:[%s7 + $0x98] sm:$0xff]
      %v7057 = vld [vmem:[%s7 + $0xa0] sm:$0xff]
      %v7058 = vld [vmem:[%s7 + $0xa8] sm:$0xff]
      %v7059 = vld [vmem:[%s7 + $0xb0] sm:$0xff]
      %v7060 = vld [vmem:[%s7 + $0xb8] sm:$0xff]
      %v7061 = vld [vmem:[%s7 + $0xc0] sm:$0xff]
      %v7062 = vld [vmem:[%s7 + $0xc8] sm:$0xff]
      %v7063 = vld [vmem:[%s7 + $0xd0] sm:$0xff]
      %v7064 = vld [vmem:[%s7 + $0xd8] sm:$0xff]
      %v7065 = vld [vmem:[%s7 + $0xe0] sm:$0xff]
      %v7066 = vld [vmem:[%s7 + $0xe8] sm:$0xff]
      %v7067 = vld [vmem:[%s7 + $0xf0] sm:$0xff]
      %v7068 = vld [vmem:[%s7 + $0xf8] sm:$0xff]
      %v7069 = vld [vmem:[%s8] sm:$0x1]
      %v7071 = vperm.slane %v7069, 0
      %7073 = vmatpush.msra.mxu0 %v7052
      %7074 = vmatpush.msra.mxu0 %v7051
      %7075 = vmatpush.msra.mxu0 %v7050
      %7076 = vmatpush.msra.mxu0 %v7049
      %7077 = vmatpush.msra.mxu0 %v7048
      %7078 = vmatpush.msra.mxu0 %v7047
      %7079 = vmatpush.msra.mxu0 %v7046
      %7080 = vmatpush.msra.mxu0 %v7045
      %7081 = vmatpush.msra.mxu0 %v7044
      %7082 = vmatpush.msra.mxu0 %v7043
      %7083 = vmatpush.msra.mxu0 %v7042
      %7084 = vmatpush.msra.mxu0 %v7041
      %7085 = vmatpush.msra.mxu0 %v7040
      %7086 = vmatpush.msra.mxu0 %v7039
      %7087 = vmatpush.msra.mxu0 %v7038
      %7088 = vmatpush.msra.mxu0 %v7037
      %7089 = vmatmul.f32.gmra.mxu0 %v7035
      %v7090 = vpop.f32.mrf.mxu0
      %v7091 = vadd.f32 %v7071, %v7090
      %7092 = vdwg.mxu0
      %7093 = vmatpush.msra.mxu0 %v7068
      %7094 = vmatpush.msra.mxu0 %v7067
      %7095 = vmatpush.msra.mxu0 %v7066
      %7096 = vmatpush.msra.mxu0 %v7065
      %7097 = vmatpush.msra.mxu0 %v7064
      %7098 = vmatpush.msra.mxu0 %v7063
      %7099 = vmatpush.msra.mxu0 %v7062
      %7100 = vmatpush.msra.mxu0 %v7061
      %7101 = vmatpush.msra.mxu0 %v7060
      %7102 = vmatpush.msra.mxu0 %v7059
      %7103 = vmatpush.msra.mxu0 %v7058
      %7104 = vmatpush.msra.mxu0 %v7057
      %7105 = vmatpush.msra.mxu0 %v7056
      %7106 = vmatpush.msra.mxu0 %v7055
      %7107 = vmatpush.msra.mxu0 %v7054
      %7108 = vmatpush.msra.mxu0 %v7053
      %7109 = vmatmul.f32.gmra.mxu0 %v7036
      %v7110 = vpop.f32.mrf.mxu0
      %v7111 = vadd.f32 %v7091, %v7110
      %7112 = vdwg.mxu0
      %vm7113 = vcmask 31744
      %v7114 = vsel %vm7113, %v7111, -inf
      %7115 = vmax.xlane.f32.xlu0 %v7114
      %v7116 = vpop.xlane.xlu0 %7115
      %v7117 = vsub.f32 %v7111, %v7116
      %v7118 = vmul.f32 %v7117, 1.442695
      %v7119 = vpow.pop %v7118
      %v7120 = vsel %vm7113, %v7119, 0.0
      %7121 = vadd.xlane.f32.xlu0 %v7120
      %v7122 = vpop.xlane.xlu0 %7121
      %v7123 = vrcp.pop %v7122
      %v7124 = vmul.f32 %v7122, %v7123
      %v7125 = vsub.f32 1.0, %v7124
      %v7126 = vmul.f32 %v7123, %v7125
      %v7127 = vadd.f32 %v7123, %v7126
      %vm7128 = vweird.f32 %v7122
      %vm7129 = vweird.f32 %v7123
      %vm7130 = vmor %vm7128, %vm7129
      %v7131 = vsel %vm7130, %v7123, %v7127
      %v7132 = vand.u32 2147483647, %v7122
      %vm7133 = vcmp.eq.f32.partialorder %v7132, 8.507059e+37
      %v7134 = vand.u32 %v7122, 2147483648
      %v7135 = vor.u32 1.1754944e-38, %v7134
      %v7136 = vsel %vm7133, %v7135, %v7131
      %v7137 = vmul.f32 %v7119, %v7136
      %7138 = vst.msk [vmem:[%s330] sm:$0xff] %vm7113, %v7137
      %p7139 = scmp.lt.s32.totalorder %s20, 1
      %s7140 = scalar_select %p7139, %s20, 1
      %s7141 = smul.addr %s7140, 8
      %s7142 = scalar_lea.vmem %s9, %s7141
      // Predicated region
      $region57: #{cell_classifier_forward.1} parent=55 // pred_check
        %p7143 = pneg %p232
      $region58: #{cell_classifier_forward.1} parent=55 // pred_check_branch
        %7145 = sbr.rel (%p7143) target = $region60
      $region59: #{cell_classifier_forward.1} parent=55 // pred_region
        _
      $region60: #{cell_classifier_forward.1} parent=55 // pred_fallthru
        _
    $region56: #{cell_classifier_forward.1} parent=5 // pred_fallthru
      _
    %p7146 = scmp.le.s32.totalorder 2, %s15
    // Predicated region
    $region61: #{cell_classifier_forward.1} parent=5 // pred_check
      %p7147 = pneg %p7146
    $region62: #{cell_classifier_forward.1} parent=5 // pred_check_branch
      %7149 = sbr.rel (%p7147) target = $region64
    $region63: #{cell_classifier_forward.1} parent=5 // pred_region
      %s7150 = ssub.s32 %s15, 2
      // Predicated region
      $region65: #{cell_classifier_forward.1} parent=63 // pred_check
        %p7151 = pneg %p238
      $region66: #{cell_classifier_forward.1} parent=63 // pred_check_branch
        %7153 = sbr.rel (%p7151) target = $region68
      $region67: #{cell_classifier_forward.1} parent=63 // pred_region
        %p7154 = scmp.lt.s32.totalorder %s21, 1
        %s7155 = scalar_select %p7154, %s21, 1
        %s7156 = smul.addr %s7155, 8
        %s7157 = scalar_lea.vmem %s9, %s7156
      $region68: #{cell_classifier_forward.1} parent=63 // pred_fallthru
        _
    $region64: #{cell_classifier_forward.1} parent=5 // pred_fallthru
      _
  $region6: #{cell_classifier_forward.1} parent=0 // loop_footer
    %s19 = sadd.s32 1, %s15
  $region7: #{cell_classifier_forward.1} parent=0 // loop_footer_branch
    %14 = sbr.rel target = $region3
  $region8: #{cell_classifier_forward.1} parent=0 // loop_exit
    _

</llo_original>
